<compile_context>
chip_gen: v7x
topology: tpu7x:2x2x1
jax: 0.10.0
libtpu: 0.0.40
codegen_flags: <defaults>
</compile_context>

<pallas_src>
import jax
import jax.numpy as jnp
from jax import lax
from jax.experimental import pallas as pl
from jax.experimental.pallas import tpu as pltpu

# ---------------- model hyper-parameters (small, consistent with the module) ---
VOCAB_SIZE = 65
VOCAB_PAD = 128            # lane-dense padded vocab for the lm_head output
SEQ_LEN = 8
EMB_DIM = 32
NUM_HEADS = 4
NUM_BLOCKS = 2
BATCH = 2
HEAD_SIZE = EMB_DIM // NUM_HEADS
HIDDEN = 4 * EMB_DIM
G = 3 * NUM_HEADS          # fused q|k|v head groups
LN_EPS = 1e-5
NEG_INF = -1e30            # finite mask sentinel (avoids exp(-inf - -inf) = NaN)


# --------------------------------- kernel --------------------------------------
def _layernorm(x, gamma, beta):
    # x: (S, D); gamma/beta: (1, D).  torch.nn.LayerNorm semantics (biased var), f32.
    mean = jnp.mean(x, axis=-1, keepdims=True)
    xc = x - mean
    var = jnp.mean(xc * xc, axis=-1, keepdims=True)
    return xc * lax.rsqrt(var + LN_EPS) * gamma + beta


def gpt_kernel(idx_ref,                                   # scalar-prefetch (SMEM)
               tok_ref, pos_ref,
               g1_ref, b1_ref, wqkv_ref, wo_ref, bo_ref,
               g2_ref, b2_ref, w1_ref, bb1_ref, w2_ref, bb2_ref,
               gf_ref, bf_ref, wlm_ref, blm_ref,
               o_ref,
               xs_ref):                                   # VMEM scratch (S, D)
    """Full GPT forward for one sequence (grid axis = batch)."""
    b = pl.program_id(0)
    S, D, H, hs = SEQ_LEN, EMB_DIM, NUM_HEADS, HEAD_SIZE
    bf16, f32 = jnp.bfloat16, jnp.float32

    # ---- in-kernel token-embedding gather + positional add ----
    for s_ in range(S):
        tid = idx_ref[b, s_]                              # scalar from SMEM
        xs_ref[pl.ds(s_, 1), :] = tok_ref[pl.ds(tid, 1), :]
    x = xs_ref[...] + pos_ref[...]                        # (S, D) f32

    # ---- hoisted additive causal-mask bias (reused by every block / head) ----
    row = lax.broadcasted_iota(jnp.int32, (S, S), 0)
    col = lax.broadcasted_iota(jnp.int32, (S, S), 1)
    mask_bias = jnp.where(row >= col, 0.0, NEG_INF).reshape(1, S, S)  # (1, S, S) f32

    for i in range(NUM_BLOCKS):                           # unrolled block loop
        # ---------------- self-attention sub-layer ----------------
        xn = _layernorm(x, g1_ref[i], b1_ref[i])          # (S, D) f32
        # batched head-major QKV projection: (3H, S, D) @ (3H, D, hs) -> (3H, S, hs)
        xn_b = jnp.broadcast_to(xn.astype(bf16), (G, S, D))
        qkvh = jnp.einsum('gsd,gde->gse', xn_b, wqkv_ref[i],
                          preferred_element_type=f32)     # (3H, S, hs) f32
        q = qkvh[0:H].astype(bf16)                        # (H, S, hs); scale folded in Wq
        k = qkvh[H:2 * H].astype(bf16)
        v = qkvh[2 * H:3 * H].astype(bf16)

        # batched scores, contracting last dims (no explicit k transpose)
        s = jnp.einsum('hqe,hke->hqk', q, k,
                       preferred_element_type=f32)        # (H, S, S) f32
        s = s + mask_bias
        m = jnp.max(s, axis=-1, keepdims=True)
        e = jnp.exp(s - m)
        p = e * pl.reciprocal(jnp.sum(e, axis=-1, keepdims=True), approx=True)
        # attention-weight dropout: identity in eval mode.
        ctx = jnp.einsum('hqk,hke->hqe', p.astype(bf16), v,
                         preferred_element_type=f32)      # (H, S, hs)

        # per-head output projection (H, S, hs) @ (H, hs, D), summed over heads
        proj = jnp.einsum('hse,hed->hsd', ctx.astype(bf16), wo_ref[i],
                          preferred_element_type=f32)     # (H, S, D)
        x = x + jnp.sum(proj, axis=0) + bo_ref[i]         # residual

        # ---------------- feed-forward sub-layer ----------------
        xn2 = _layernorm(x, g2_ref[i], b2_ref[i])
        h1 = jnp.dot(xn2.astype(bf16), w1_ref[i],
                     preferred_element_type=f32) + bb1_ref[i]
        h1 = jnp.maximum(h1, 0.0)                         # ReLU (f32)
        y = jnp.dot(h1.astype(bf16), w2_ref[i],
                    preferred_element_type=f32) + bb2_ref[i]
        x = x + y                                         # residual

    # ---------------- final LayerNorm + lm_head (padded, lane-dense) ----------
    xf = _layernorm(x, gf_ref[...], bf_ref[...])
    logits = jnp.dot(xf.astype(bf16), wlm_ref[...],
                     preferred_element_type=f32) + blm_ref[...]
    o_ref[0] = logits                                     # (S, VOCAB_PAD)


# ------------------------------ pallas wrapper ----------------------------------
def gpt_pallas(idx, p):
    L = NUM_BLOCKS

    def full(shape):
        return pl.BlockSpec(shape, lambda b, idx_ref, _s=shape: (0,) * len(_s))

    in_specs = [
        full((VOCAB_SIZE, EMB_DIM)),                  # tok_emb
        full((SEQ_LEN, EMB_DIM)),                     # pos_emb
        full((L, 1, EMB_DIM)),                        # g1
        full((L, 1, EMB_DIM)),                        # b1
        full((L, G, EMB_DIM, HEAD_SIZE)),             # wqkv (head-major, scale folded)
        full((L, NUM_HEADS, HEAD_SIZE, EMB_DIM)),     # wo   (head-major)
        full((L, 1, EMB_DIM)),                        # bo
        full((L, 1, EMB_DIM)),                        # g2
        full((L, 1, EMB_DIM)),                        # b2
        full((L, EMB_DIM, HIDDEN)),                   # w1
        full((L, 1, HIDDEN)),                         # bb1
        full((L, HIDDEN, EMB_DIM)),                   # w2
        full((L, 1, EMB_DIM)),                        # bb2
        full((1, EMB_DIM)),                           # gf
        full((1, EMB_DIM)),                           # bf
        full((EMB_DIM, VOCAB_PAD)),                   # wlm
        full((1, VOCAB_PAD)),                         # blm
    ]
    grid_spec = pltpu.PrefetchScalarGridSpec(
        num_scalar_prefetch=1,                        # idx -> SMEM
        grid=(BATCH,),
        in_specs=in_specs,
        out_specs=pl.BlockSpec((1, SEQ_LEN, VOCAB_PAD),
                               lambda b, idx_ref: (b, 0, 0)),
        scratch_shapes=[pltpu.VMEM((SEQ_LEN, EMB_DIM), jnp.float32)],
    )
    return pl.pallas_call(
        gpt_kernel,
        out_shape=jax.ShapeDtypeStruct((BATCH, SEQ_LEN, VOCAB_PAD), jnp.float32),
        grid_spec=grid_spec,
        compiler_params=pltpu.CompilerParams(
            dimension_semantics=("parallel",)),       # both TCs on v7x; no-op v5e/v6e
    )(idx, p["tok_emb"], p["pos_emb"],
      p["g1"], p["b1"], p["wqkv"], p["wo"], p["bo"],
      p["g2"], p["b2"], p["w1"], p["bb1"], p["w2"], p["bb2"],
      p["gf"], p["bf"], p["wlm"], p["blm"])


# ------------------------------- parameter init --------------------------------
def init_params(key):
    D, V, S, Hd, L = EMB_DIM, VOCAB_SIZE, SEQ_LEN, HIDDEN, NUM_BLOCKS
    H, hs = NUM_HEADS, HEAD_SIZE

    def nrm(k, shape, scale=0.02):
        return (scale * jax.random.normal(k, shape)).astype(jnp.float32)

    keys = jax.random.split(key, 10)

    # head-major QKV weights; attention scale 1/sqrt(hs) folded into Wq.
    wq = nrm(keys[0], (L, H, D, hs)) * (float(hs) ** -0.5)
    wk = nrm(keys[1], (L, H, D, hs))
    wv = nrm(keys[2], (L, H, D, hs))
    wqkv = jnp.concatenate([wq, wk, wv], axis=1).astype(jnp.bfloat16)  # (L, 3H, D, hs)

    # lm_head weight padded to VOCAB_PAD lanes (extra columns are zero).
    wlm = jnp.zeros((D, VOCAB_PAD), jnp.float32).at[:, :V].set(nrm(keys[3], (D, V)))

    return {
        "tok_emb": nrm(keys[4], (V, D), 1.0),
        "pos_emb": nrm(keys[5], (S, D), 1.0),
        "g1": jnp.ones((L, 1, D), jnp.float32),
        "b1": jnp.zeros((L, 1, D), jnp.float32),
        "wqkv": wqkv,
        "wo": nrm(keys[6], (L, H, hs, D)).astype(jnp.bfloat16),        # head-major Wo
        "bo": jnp.zeros((L, 1, D), jnp.float32),
        "g2": jnp.ones((L, 1, D), jnp.float32),
        "b2": jnp.zeros((L, 1, D), jnp.float32),
        "w1": nrm(keys[7], (L, D, Hd)).astype(jnp.bfloat16),
        "bb1": jnp.zeros((L, 1, Hd), jnp.float32),
        "w2": nrm(keys[8], (L, Hd, D)).astype(jnp.bfloat16),
        "bb2": jnp.zeros((L, 1, D), jnp.float32),
        "gf": jnp.ones((1, D), jnp.float32),
        "bf": jnp.zeros((1, D), jnp.float32),
        "wlm": wlm.astype(jnp.bfloat16),
        "blm": jnp.zeros((1, VOCAB_PAD), jnp.float32),
    }


# --------------------------------- GPT forward ---------------------------------
@jax.jit
def gpt_forward(idx, params):
    # idx: (B, S) int32 token ids.  Everything (embedding gather, pos add, blocks,
    # final LN, lm_head) runs inside the single fused Pallas kernel.
    out = gpt_pallas(idx, params)                       # (B, S, VOCAB_PAD)
    return out[:, :, :VOCAB_SIZE]                       # targets=None -> loss=None


# ------------------------------------ main -------------------------------------
if __name__ == "__main__":
    key = jax.random.PRNGKey(0)
    pkey, ikey = jax.random.split(key)
    params = init_params(pkey)
    idx = jax.random.randint(ikey, (BATCH, SEQ_LEN), 0, VOCAB_SIZE, dtype=jnp.int32)

    logits = gpt_forward(idx, params)
    jax.block_until_ready(logits)
    assert logits.shape == (BATCH, SEQ_LEN, VOCAB_SIZE)
    assert bool(jnp.all(jnp.isfinite(logits)))
    print("KERNEL_OK")
</pallas_src>

<mosaic_0001>
module attributes {stable_mosaic.version = 11 : i64} {
  func.func @gpt_kernel(%arg0: i32, %arg1: memref<2x8xi32, #tpu.memory_space<smem>>, %arg2: memref<65x32xf32, #tpu.memory_space<vmem>>, %arg3: memref<8x32xf32, #tpu.memory_space<vmem>>, %arg4: memref<2x1x32xf32, #tpu.memory_space<vmem>>, %arg5: memref<2x1x32xf32, #tpu.memory_space<vmem>>, %arg6: memref<2x12x32x8xbf16, #tpu.memory_space<vmem>>, %arg7: memref<2x4x8x32xbf16, #tpu.memory_space<vmem>>, %arg8: memref<2x1x32xf32, #tpu.memory_space<vmem>>, %arg9: memref<2x1x32xf32, #tpu.memory_space<vmem>>, %arg10: memref<2x1x32xf32, #tpu.memory_space<vmem>>, %arg11: memref<2x32x128xbf16, #tpu.memory_space<vmem>>, %arg12: memref<2x1x128xf32, #tpu.memory_space<vmem>>, %arg13: memref<2x128x32xbf16, #tpu.memory_space<vmem>>, %arg14: memref<2x1x32xf32, #tpu.memory_space<vmem>>, %arg15: memref<1x32xf32, #tpu.memory_space<vmem>>, %arg16: memref<1x32xf32, #tpu.memory_space<vmem>>, %arg17: memref<32x128xbf16, #tpu.memory_space<vmem>>, %arg18: memref<1x128xf32, #tpu.memory_space<vmem>>, %arg19: memref<1x8x128xf32, #tpu.memory_space<vmem>>, %arg20: memref<8x32xf32, #tpu.memory_space<vmem>>) attributes {dimension_semantics = [#tpu.dimension_semantics<parallel>], iteration_bounds = array<i64: 2>, scalar_prefetch = 1 : i64, scratch_operands = 1 : i64, tpu.core_type = #tpu.core_type<tc>, window_params = [{pipeline_mode = #tpu.pipeline_mode<synchronous>, transform_indices = @transform_0, window_bounds = array<i64: 65, 32>}, {pipeline_mode = #tpu.pipeline_mode<synchronous>, transform_indices = @transform_1, window_bounds = array<i64: 8, 32>}, {pipeline_mode = #tpu.pipeline_mode<synchronous>, transform_indices = @transform_2, window_bounds = array<i64: 2, 1, 32>}, {pipeline_mode = #tpu.pipeline_mode<synchronous>, transform_indices = @transform_3, window_bounds = array<i64: 2, 1, 32>}, {pipeline_mode = #tpu.pipeline_mode<synchronous>, transform_indices = @transform_4, window_bounds = array<i64: 2, 12, 32, 8>}, {pipeline_mode = #tpu.pipeline_mode<synchronous>, transform_indices = @transform_5, window_bounds = array<i64: 2, 4, 8, 32>}, {pipeline_mode = #tpu.pipeline_mode<synchronous>, transform_indices = @transform_6, window_bounds = array<i64: 2, 1, 32>}, {pipeline_mode = #tpu.pipeline_mode<synchronous>, transform_indices = @transform_7, window_bounds = array<i64: 2, 1, 32>}, {pipeline_mode = #tpu.pipeline_mode<synchronous>, transform_indices = @transform_8, window_bounds = array<i64: 2, 1, 32>}, {pipeline_mode = #tpu.pipeline_mode<synchronous>, transform_indices = @transform_9, window_bounds = array<i64: 2, 32, 128>}, {pipeline_mode = #tpu.pipeline_mode<synchronous>, transform_indices = @transform_10, window_bounds = array<i64: 2, 1, 128>}, {pipeline_mode = #tpu.pipeline_mode<synchronous>, transform_indices = @transform_11, window_bounds = array<i64: 2, 128, 32>}, {pipeline_mode = #tpu.pipeline_mode<synchronous>, transform_indices = @transform_12, window_bounds = array<i64: 2, 1, 32>}, {pipeline_mode = #tpu.pipeline_mode<synchronous>, transform_indices = @transform_13, window_bounds = array<i64: 1, 32>}, {pipeline_mode = #tpu.pipeline_mode<synchronous>, transform_indices = @transform_14, window_bounds = array<i64: 1, 32>}, {pipeline_mode = #tpu.pipeline_mode<synchronous>, transform_indices = @transform_15, window_bounds = array<i64: 32, 128>}, {pipeline_mode = #tpu.pipeline_mode<synchronous>, transform_indices = @transform_16, window_bounds = array<i64: 1, 128>}, {transform_indices = @transform_17, window_bounds = array<i64: 1, 8, 128>}]} {
    %0 = arith.index_cast %arg0 : i32 to index
    %c0 = arith.constant 0 : index
    %1 = memref.load %arg1[%0, %c0] : memref<2x8xi32, #tpu.memory_space<smem>>
    %2 = arith.index_cast %1 : i32 to index
    %c0_0 = arith.constant 0 : index
    %3 = vector.load %arg2[%2, %c0_0] : memref<65x32xf32, #tpu.memory_space<vmem>>, vector<1x32xf32>
    %c0_1 = arith.constant 0 : index
    %c0_2 = arith.constant 0 : index
    %4 = vector.load %arg20[%c0_1, %c0_2] : memref<8x32xf32, #tpu.memory_space<vmem>>, vector<1x32xf32>
    tpu.vector_store %arg20[%c0_1, %c0_2], %3 {strides = array<i32>} : memref<8x32xf32, #tpu.memory_space<vmem>>, vector<1x32xf32>,
    %5 = arith.index_cast %arg0 : i32 to index
    %c1 = arith.constant 1 : index
    %6 = memref.load %arg1[%5, %c1] : memref<2x8xi32, #tpu.memory_space<smem>>
    %7 = arith.index_cast %6 : i32 to index
    %c0_3 = arith.constant 0 : index
    %8 = vector.load %arg2[%7, %c0_3] : memref<65x32xf32, #tpu.memory_space<vmem>>, vector<1x32xf32>
    %c1_4 = arith.constant 1 : index
    %c0_5 = arith.constant 0 : index
    %9 = vector.load %arg20[%c1_4, %c0_5] : memref<8x32xf32, #tpu.memory_space<vmem>>, vector<1x32xf32>
    tpu.vector_store %arg20[%c1_4, %c0_5], %8 {strides = array<i32>} : memref<8x32xf32, #tpu.memory_space<vmem>>, vector<1x32xf32>,
    %10 = arith.index_cast %arg0 : i32 to index
    %c2 = arith.constant 2 : index
    %11 = memref.load %arg1[%10, %c2] : memref<2x8xi32, #tpu.memory_space<smem>>
    %12 = arith.index_cast %11 : i32 to index
    %c0_6 = arith.constant 0 : index
    %13 = vector.load %arg2[%12, %c0_6] : memref<65x32xf32, #tpu.memory_space<vmem>>, vector<1x32xf32>
    %c2_7 = arith.constant 2 : index
    %c0_8 = arith.constant 0 : index
    %14 = vector.load %arg20[%c2_7, %c0_8] : memref<8x32xf32, #tpu.memory_space<vmem>>, vector<1x32xf32>
    tpu.vector_store %arg20[%c2_7, %c0_8], %13 {strides = array<i32>} : memref<8x32xf32, #tpu.memory_space<vmem>>, vector<1x32xf32>,
    %15 = arith.index_cast %arg0 : i32 to index
    %c3 = arith.constant 3 : index
    %16 = memref.load %arg1[%15, %c3] : memref<2x8xi32, #tpu.memory_space<smem>>
    %17 = arith.index_cast %16 : i32 to index
    %c0_9 = arith.constant 0 : index
    %18 = vector.load %arg2[%17, %c0_9] : memref<65x32xf32, #tpu.memory_space<vmem>>, vector<1x32xf32>
    %c3_10 = arith.constant 3 : index
    %c0_11 = arith.constant 0 : index
    %19 = vector.load %arg20[%c3_10, %c0_11] : memref<8x32xf32, #tpu.memory_space<vmem>>, vector<1x32xf32>
    tpu.vector_store %arg20[%c3_10, %c0_11], %18 {strides = array<i32>} : memref<8x32xf32, #tpu.memory_space<vmem>>, vector<1x32xf32>,
    %20 = arith.index_cast %arg0 : i32 to index
    %c4 = arith.constant 4 : index
    %21 = memref.load %arg1[%20, %c4] : memref<2x8xi32, #tpu.memory_space<smem>>
    %22 = arith.index_cast %21 : i32 to index
    %c0_12 = arith.constant 0 : index
    %23 = vector.load %arg2[%22, %c0_12] : memref<65x32xf32, #tpu.memory_space<vmem>>, vector<1x32xf32>
    %c4_13 = arith.constant 4 : index
    %c0_14 = arith.constant 0 : index
    %24 = vector.load %arg20[%c4_13, %c0_14] : memref<8x32xf32, #tpu.memory_space<vmem>>, vector<1x32xf32>
    tpu.vector_store %arg20[%c4_13, %c0_14], %23 {strides = array<i32>} : memref<8x32xf32, #tpu.memory_space<vmem>>, vector<1x32xf32>,
    %25 = arith.index_cast %arg0 : i32 to index
    %c5 = arith.constant 5 : index
    %26 = memref.load %arg1[%25, %c5] : memref<2x8xi32, #tpu.memory_space<smem>>
    %27 = arith.index_cast %26 : i32 to index
    %c0_15 = arith.constant 0 : index
    %28 = vector.load %arg2[%27, %c0_15] : memref<65x32xf32, #tpu.memory_space<vmem>>, vector<1x32xf32>
    %c5_16 = arith.constant 5 : index
    %c0_17 = arith.constant 0 : index
    %29 = vector.load %arg20[%c5_16, %c0_17] : memref<8x32xf32, #tpu.memory_space<vmem>>, vector<1x32xf32>
    tpu.vector_store %arg20[%c5_16, %c0_17], %28 {strides = array<i32>} : memref<8x32xf32, #tpu.memory_space<vmem>>, vector<1x32xf32>,
    %30 = arith.index_cast %arg0 : i32 to index
    %c6 = arith.constant 6 : index
    %31 = memref.load %arg1[%30, %c6] : memref<2x8xi32, #tpu.memory_space<smem>>
    %32 = arith.index_cast %31 : i32 to index
    %c0_18 = arith.constant 0 : index
    %33 = vector.load %arg2[%32, %c0_18] : memref<65x32xf32, #tpu.memory_space<vmem>>, vector<1x32xf32>
    %c6_19 = arith.constant 6 : index
    %c0_20 = arith.constant 0 : index
    %34 = vector.load %arg20[%c6_19, %c0_20] : memref<8x32xf32, #tpu.memory_space<vmem>>, vector<1x32xf32>
    tpu.vector_store %arg20[%c6_19, %c0_20], %33 {strides = array<i32>} : memref<8x32xf32, #tpu.memory_space<vmem>>, vector<1x32xf32>,
    %35 = arith.index_cast %arg0 : i32 to index
    %c7 = arith.constant 7 : index
    %36 = memref.load %arg1[%35, %c7] : memref<2x8xi32, #tpu.memory_space<smem>>
    %37 = arith.index_cast %36 : i32 to index
    %c0_21 = arith.constant 0 : index
    %38 = vector.load %arg2[%37, %c0_21] : memref<65x32xf32, #tpu.memory_space<vmem>>, vector<1x32xf32>
    %c7_22 = arith.constant 7 : index
    %c0_23 = arith.constant 0 : index
    %39 = vector.load %arg20[%c7_22, %c0_23] : memref<8x32xf32, #tpu.memory_space<vmem>>, vector<1x32xf32>
    tpu.vector_store %arg20[%c7_22, %c0_23], %38 {strides = array<i32>} : memref<8x32xf32, #tpu.memory_space<vmem>>, vector<1x32xf32>,
    %c0_24 = arith.constant 0 : index
    %c0_25 = arith.constant 0 : index
    %40 = vector.load %arg20[%c0_24, %c0_25] : memref<8x32xf32, #tpu.memory_space<vmem>>, vector<8x32xf32>
    %c0_26 = arith.constant 0 : index
    %c0_27 = arith.constant 0 : index
    %41 = vector.load %arg3[%c0_26, %c0_27] : memref<8x32xf32, #tpu.memory_space<vmem>>, vector<8x32xf32>
    %42 = arith.addf %40, %41 : vector<8x32xf32>
    %43 = tpu.iota {dimensions = array<i32: 0>} : vector<8x8xi32>
    %44 = tpu.iota {dimensions = array<i32: 1>} : vector<8x8xi32>
    %45 = arith.cmpi sge, %43, %44 : vector<8x8xi32>
    %cst = arith.constant 0.000000e+00 : f32
    %cst_28 = arith.constant -1.000000e+30 : f32
    %46 = vector.broadcast %cst : f32 to vector<8x8xf32>
    %47 = vector.broadcast %cst_28 : f32 to vector<8x8xf32>
    %48 = arith.select %45, %46, %47 : vector<8x8xi1>, vector<8x8xf32>
    %49 = vector.shape_cast %48 : vector<8x8xf32> to vector<1x8x8xf32>
    %c0_29 = arith.constant 0 : index
    %c0_30 = arith.constant 0 : index
    %c0_31 = arith.constant 0 : index
    %50 = vector.load %arg4[%c0_29, %c0_30, %c0_31] : memref<2x1x32xf32, #tpu.memory_space<vmem>>, vector<1x1x32xf32>
    %51 = vector.shape_cast %50 : vector<1x1x32xf32> to vector<1x32xf32>
    %c0_32 = arith.constant 0 : index
    %c0_33 = arith.constant 0 : index
    %c0_34 = arith.constant 0 : index
    %52 = vector.load %arg5[%c0_32, %c0_33, %c0_34] : memref<2x1x32xf32, #tpu.memory_space<vmem>>, vector<1x1x32xf32>
    %53 = vector.shape_cast %52 : vector<1x1x32xf32> to vector<1x32xf32>
    %cst_35 = arith.constant dense<0.000000e+00> : vector<8xf32>
    %54 = vector.multi_reduction <add>, %42, %cst_35 [1] : vector<8x32xf32> to vector<8xf32>
    %55 = vector.shape_cast %54 : vector<8xf32> to vector<8x1xf32>
    %cst_36 = arith.constant 3.200000e+01 : f32
    %56 = vector.broadcast %cst_36 : f32 to vector<8x1xf32>
    %57 = arith.divf %55, %56 : vector<8x1xf32>
    %58 = vector.broadcast %57 : vector<8x1xf32> to vector<8x32xf32>
    %59 = arith.subf %42, %58 : vector<8x32xf32>
    %60 = arith.mulf %59, %59 : vector<8x32xf32>
    %cst_37 = arith.constant dense<0.000000e+00> : vector<8xf32>
    %61 = vector.multi_reduction <add>, %60, %cst_37 [1] : vector<8x32xf32> to vector<8xf32>
    %62 = vector.shape_cast %61 : vector<8xf32> to vector<8x1xf32>
    %cst_38 = arith.constant 3.200000e+01 : f32
    %63 = vector.broadcast %cst_38 : f32 to vector<8x1xf32>
    %64 = arith.divf %62, %63 : vector<8x1xf32>
    %cst_39 = arith.constant 9.99999974E-6 : f32
    %65 = vector.broadcast %cst_39 : f32 to vector<8x1xf32>
    %66 = arith.addf %64, %65 : vector<8x1xf32>
    %67 = math.rsqrt %66 : vector<8x1xf32>
    %68 = vector.broadcast %67 : vector<8x1xf32> to vector<8x32xf32>
    %69 = arith.mulf %59, %68 : vector<8x32xf32>
    %70 = vector.broadcast %51 : vector<1x32xf32> to vector<8x32xf32>
    %71 = arith.mulf %69, %70 : vector<8x32xf32>
    %72 = vector.broadcast %53 : vector<1x32xf32> to vector<8x32xf32>
    %73 = arith.addf %71, %72 : vector<8x32xf32>
    %74 = arith.truncf %73 : vector<8x32xf32> to vector<8x32xbf16>
    %75 = vector.shape_cast %74 : vector<8x32xbf16> to vector<1x8x32xbf16>
    %76 = vector.broadcast %75 : vector<1x8x32xbf16> to vector<12x8x32xbf16>
    %c0_40 = arith.constant 0 : index
    %c0_41 = arith.constant 0 : index
    %c0_42 = arith.constant 0 : index
    %c0_43 = arith.constant 0 : index
    %77 = vector.load %arg6[%c0_40, %c0_41, %c0_42, %c0_43] : memref<2x12x32x8xbf16, #tpu.memory_space<vmem>>, vector<1x12x32x8xbf16>
    %78 = vector.shape_cast %77 : vector<1x12x32x8xbf16> to vector<12x32x8xbf16>
    "tpu.trace_start"() <{level = 10 : i32, message = "gsd,gde->gse"}> : () -> ()
    %cst_44 = arith.constant dense<0.000000e+00> : vector<12x8x8xf32>
    %79 = tpu.matmul %76, %78, %cst_44 {dimension_numbers = #tpu.dot_dimension_numbers<[2], [1], [1], [2], [0, 0, 0, 1, 1, 2], [0], [0]>} : vector<12x8x32xbf16>, vector<12x32x8xbf16>, vector<12x8x8xf32> -> vector<12x8x8xf32>
    "tpu.trace_stop"() : () -> ()
    %80 = vector.extract_strided_slice %79 {offsets = [0, 0, 0], sizes = [4, 8, 8], strides = [1, 1, 1]} : vector<12x8x8xf32> to vector<4x8x8xf32>
    %81 = arith.truncf %80 : vector<4x8x8xf32> to vector<4x8x8xbf16>
    %82 = vector.extract_strided_slice %79 {offsets = [4, 0, 0], sizes = [4, 8, 8], strides = [1, 1, 1]} : vector<12x8x8xf32> to vector<4x8x8xf32>
    %83 = arith.truncf %82 : vector<4x8x8xf32> to vector<4x8x8xbf16>
    %84 = vector.extract_strided_slice %79 {offsets = [8, 0, 0], sizes = [4, 8, 8], strides = [1, 1, 1]} : vector<12x8x8xf32> to vector<4x8x8xf32>
    %85 = arith.truncf %84 : vector<4x8x8xf32> to vector<4x8x8xbf16>
    "tpu.trace_start"() <{level = 10 : i32, message = "hqe,hke->hqk"}> : () -> ()
    %cst_45 = arith.constant dense<0.000000e+00> : vector<4x8x8xf32>
    %86 = tpu.matmul %81, %83, %cst_45 {dimension_numbers = #tpu.dot_dimension_numbers<[2], [2], [1], [1], [0, 0, 0, 1, 1, 1], [0], [0]>} : vector<4x8x8xbf16>, vector<4x8x8xbf16>, vector<4x8x8xf32> -> vector<4x8x8xf32>
    "tpu.trace_stop"() : () -> ()
    %87 = vector.broadcast %49 : vector<1x8x8xf32> to vector<4x8x8xf32>
    %88 = arith.addf %86, %87 : vector<4x8x8xf32>
    %cst_46 = arith.constant dense<0xFF800000> : vector<4x8xf32>
    %89 = vector.multi_reduction <maximumf>, %88, %cst_46 [2] : vector<4x8x8xf32> to vector<4x8xf32>
    %90 = vector.shape_cast %89 : vector<4x8xf32> to vector<4x8x1xf32>
    %91 = vector.broadcast %90 : vector<4x8x1xf32> to vector<4x8x8xf32>
    %92 = arith.subf %88, %91 : vector<4x8x8xf32>
    %93 = math.exp %92 : vector<4x8x8xf32>
    %cst_47 = arith.constant dense<0.000000e+00> : vector<4x8xf32>
    %94 = vector.multi_reduction <add>, %93, %cst_47 [2] : vector<4x8x8xf32> to vector<4x8xf32>
    %95 = vector.shape_cast %94 : vector<4x8xf32> to vector<4x8x1xf32>
    %96 = tpu.reciprocal %95 {approx = true} : vector<4x8x1xf32> -> vector<4x8x1xf32>
    %97 = vector.broadcast %96 : vector<4x8x1xf32> to vector<4x8x8xf32>
    %98 = arith.mulf %93, %97 : vector<4x8x8xf32>
    %99 = arith.truncf %98 : vector<4x8x8xf32> to vector<4x8x8xbf16>
    "tpu.trace_start"() <{level = 10 : i32, message = "hqk,hke->hqe"}> : () -> ()
    %cst_48 = arith.constant dense<0.000000e+00> : vector<4x8x8xf32>
    %100 = tpu.matmul %99, %85, %cst_48 {dimension_numbers = #tpu.dot_dimension_numbers<[2], [1], [1], [2], [0, 0, 0, 1, 1, 2], [0], [0]>} : vector<4x8x8xbf16>, vector<4x8x8xbf16>, vector<4x8x8xf32> -> vector<4x8x8xf32>
    "tpu.trace_stop"() : () -> ()
    %101 = arith.truncf %100 : vector<4x8x8xf32> to vector<4x8x8xbf16>
    %c0_49 = arith.constant 0 : index
    %c0_50 = arith.constant 0 : index
    %c0_51 = arith.constant 0 : index
    %c0_52 = arith.constant 0 : index
    %102 = vector.load %arg7[%c0_49, %c0_50, %c0_51, %c0_52] : memref<2x4x8x32xbf16, #tpu.memory_space<vmem>>, vector<1x4x8x32xbf16>
    %103 = vector.shape_cast %102 : vector<1x4x8x32xbf16> to vector<4x8x32xbf16>
    "tpu.trace_start"() <{level = 10 : i32, message = "hse,hed->hsd"}> : () -> ()
    %cst_53 = arith.constant dense<0.000000e+00> : vector<4x8x32xf32>
    %104 = tpu.matmul %101, %103, %cst_53 {dimension_numbers = #tpu.dot_dimension_numbers<[2], [1], [1], [2], [0, 0, 0, 1, 1, 2], [0], [0]>} : vector<4x8x8xbf16>, vector<4x8x32xbf16>, vector<4x8x32xf32> -> vector<4x8x32xf32>
    "tpu.trace_stop"() : () -> ()
    %cst_54 = arith.constant dense<0.000000e+00> : vector<8x32xf32>
    %105 = vector.multi_reduction <add>, %104, %cst_54 [0] : vector<4x8x32xf32> to vector<8x32xf32>
    %106 = arith.addf %42, %105 : vector<8x32xf32>
    %c0_55 = arith.constant 0 : index
    %c0_56 = arith.constant 0 : index
    %c0_57 = arith.constant 0 : index
    %107 = vector.load %arg8[%c0_55, %c0_56, %c0_57] : memref<2x1x32xf32, #tpu.memory_space<vmem>>, vector<1x1x32xf32>
    %108 = vector.shape_cast %107 : vector<1x1x32xf32> to vector<1x32xf32>
    %109 = vector.broadcast %108 : vector<1x32xf32> to vector<8x32xf32>
    %110 = arith.addf %106, %109 : vector<8x32xf32>
    %c0_58 = arith.constant 0 : index
    %c0_59 = arith.constant 0 : index
    %c0_60 = arith.constant 0 : index
    %111 = vector.load %arg9[%c0_58, %c0_59, %c0_60] : memref<2x1x32xf32, #tpu.memory_space<vmem>>, vector<1x1x32xf32>
    %112 = vector.shape_cast %111 : vector<1x1x32xf32> to vector<1x32xf32>
    %c0_61 = arith.constant 0 : index
    %c0_62 = arith.constant 0 : index
    %c0_63 = arith.constant 0 : index
    %113 = vector.load %arg10[%c0_61, %c0_62, %c0_63] : memref<2x1x32xf32, #tpu.memory_space<vmem>>, vector<1x1x32xf32>
    %114 = vector.shape_cast %113 : vector<1x1x32xf32> to vector<1x32xf32>
    %cst_64 = arith.constant dense<0.000000e+00> : vector<8xf32>
    %115 = vector.multi_reduction <add>, %110, %cst_64 [1] : vector<8x32xf32> to vector<8xf32>
    %116 = vector.shape_cast %115 : vector<8xf32> to vector<8x1xf32>
    %cst_65 = arith.constant 3.200000e+01 : f32
    %117 = vector.broadcast %cst_65 : f32 to vector<8x1xf32>
    %118 = arith.divf %116, %117 : vector<8x1xf32>
    %119 = vector.broadcast %118 : vector<8x1xf32> to vector<8x32xf32>
    %120 = arith.subf %110, %119 : vector<8x32xf32>
    %121 = arith.mulf %120, %120 : vector<8x32xf32>
    %cst_66 = arith.constant dense<0.000000e+00> : vector<8xf32>
    %122 = vector.multi_reduction <add>, %121, %cst_66 [1] : vector<8x32xf32> to vector<8xf32>
    %123 = vector.shape_cast %122 : vector<8xf32> to vector<8x1xf32>
    %cst_67 = arith.constant 3.200000e+01 : f32
    %124 = vector.broadcast %cst_67 : f32 to vector<8x1xf32>
    %125 = arith.divf %123, %124 : vector<8x1xf32>
    %cst_68 = arith.constant 9.99999974E-6 : f32
    %126 = vector.broadcast %cst_68 : f32 to vector<8x1xf32>
    %127 = arith.addf %125, %126 : vector<8x1xf32>
    %128 = math.rsqrt %127 : vector<8x1xf32>
    %129 = vector.broadcast %128 : vector<8x1xf32> to vector<8x32xf32>
    %130 = arith.mulf %120, %129 : vector<8x32xf32>
    %131 = vector.broadcast %112 : vector<1x32xf32> to vector<8x32xf32>
    %132 = arith.mulf %130, %131 : vector<8x32xf32>
    %133 = vector.broadcast %114 : vector<1x32xf32> to vector<8x32xf32>
    %134 = arith.addf %132, %133 : vector<8x32xf32>
    %135 = arith.truncf %134 : vector<8x32xf32> to vector<8x32xbf16>
    %c0_69 = arith.constant 0 : index
    %c0_70 = arith.constant 0 : index
    %c0_71 = arith.constant 0 : index
    %136 = vector.load %arg11[%c0_69, %c0_70, %c0_71] : memref<2x32x128xbf16, #tpu.memory_space<vmem>>, vector<1x32x128xbf16>
    %137 = vector.shape_cast %136 : vector<1x32x128xbf16> to vector<32x128xbf16>
    %cst_72 = arith.constant dense<0.000000e+00> : vector<8x128xf32>
    %138 = tpu.matmul %135, %137, %cst_72 {dimension_numbers = #tpu.dot_dimension_numbers<[1], [0], [0], [1], [0, 0, 1, 1], [], []>} : vector<8x32xbf16>, vector<32x128xbf16>, vector<8x128xf32> -> vector<8x128xf32>
    %c0_73 = arith.constant 0 : index
    %c0_74 = arith.constant 0 : index
    %c0_75 = arith.constant 0 : index
    %139 = vector.load %arg12[%c0_73, %c0_74, %c0_75] : memref<2x1x128xf32, #tpu.memory_space<vmem>>, vector<1x1x128xf32>
    %140 = vector.shape_cast %139 : vector<1x1x128xf32> to vector<1x128xf32>
    %141 = vector.broadcast %140 : vector<1x128xf32> to vector<8x128xf32>
    %142 = arith.addf %138, %141 : vector<8x128xf32>
    %cst_76 = arith.constant 0.000000e+00 : f32
    %143 = vector.broadcast %cst_76 : f32 to vector<8x128xf32>
    %144 = arith.maximumf %142, %143 : vector<8x128xf32>
    %145 = arith.truncf %144 : vector<8x128xf32> to vector<8x128xbf16>
    %c0_77 = arith.constant 0 : index
    %c0_78 = arith.constant 0 : index
    %c0_79 = arith.constant 0 : index
    %146 = vector.load %arg13[%c0_77, %c0_78, %c0_79] : memref<2x128x32xbf16, #tpu.memory_space<vmem>>, vector<1x128x32xbf16>
    %147 = vector.shape_cast %146 : vector<1x128x32xbf16> to vector<128x32xbf16>
    %cst_80 = arith.constant dense<0.000000e+00> : vector<8x32xf32>
    %148 = tpu.matmul %145, %147, %cst_80 {dimension_numbers = #tpu.dot_dimension_numbers<[1], [0], [0], [1], [0, 0, 1, 1], [], []>} : vector<8x128xbf16>, vector<128x32xbf16>, vector<8x32xf32> -> vector<8x32xf32>
    %c0_81 = arith.constant 0 : index
    %c0_82 = arith.constant 0 : index
    %c0_83 = arith.constant 0 : index
    %149 = vector.load %arg14[%c0_81, %c0_82, %c0_83] : memref<2x1x32xf32, #tpu.memory_space<vmem>>, vector<1x1x32xf32>
    %150 = vector.shape_cast %149 : vector<1x1x32xf32> to vector<1x32xf32>
    %151 = vector.broadcast %150 : vector<1x32xf32> to vector<8x32xf32>
    %152 = arith.addf %148, %151 : vector<8x32xf32>
    %153 = arith.addf %110, %152 : vector<8x32xf32>
    %c1_84 = arith.constant 1 : index
    %c0_85 = arith.constant 0 : index
    %c0_86 = arith.constant 0 : index
    %154 = vector.load %arg4[%c1_84, %c0_85, %c0_86] : memref<2x1x32xf32, #tpu.memory_space<vmem>>, vector<1x1x32xf32>
    %155 = vector.shape_cast %154 : vector<1x1x32xf32> to vector<1x32xf32>
    %c1_87 = arith.constant 1 : index
    %c0_88 = arith.constant 0 : index
    %c0_89 = arith.constant 0 : index
    %156 = vector.load %arg5[%c1_87, %c0_88, %c0_89] : memref<2x1x32xf32, #tpu.memory_space<vmem>>, vector<1x1x32xf32>
    %157 = vector.shape_cast %156 : vector<1x1x32xf32> to vector<1x32xf32>
    %cst_90 = arith.constant dense<0.000000e+00> : vector<8xf32>
    %158 = vector.multi_reduction <add>, %153, %cst_90 [1] : vector<8x32xf32> to vector<8xf32>
    %159 = vector.shape_cast %158 : vector<8xf32> to vector<8x1xf32>
    %cst_91 = arith.constant 3.200000e+01 : f32
    %160 = vector.broadcast %cst_91 : f32 to vector<8x1xf32>
    %161 = arith.divf %159, %160 : vector<8x1xf32>
    %162 = vector.broadcast %161 : vector<8x1xf32> to vector<8x32xf32>
    %163 = arith.subf %153, %162 : vector<8x32xf32>
    %164 = arith.mulf %163, %163 : vector<8x32xf32>
    %cst_92 = arith.constant dense<0.000000e+00> : vector<8xf32>
    %165 = vector.multi_reduction <add>, %164, %cst_92 [1] : vector<8x32xf32> to vector<8xf32>
    %166 = vector.shape_cast %165 : vector<8xf32> to vector<8x1xf32>
    %cst_93 = arith.constant 3.200000e+01 : f32
    %167 = vector.broadcast %cst_93 : f32 to vector<8x1xf32>
    %168 = arith.divf %166, %167 : vector<8x1xf32>
    %cst_94 = arith.constant 9.99999974E-6 : f32
    %169 = vector.broadcast %cst_94 : f32 to vector<8x1xf32>
    %170 = arith.addf %168, %169 : vector<8x1xf32>
    %171 = math.rsqrt %170 : vector<8x1xf32>
    %172 = vector.broadcast %171 : vector<8x1xf32> to vector<8x32xf32>
    %173 = arith.mulf %163, %172 : vector<8x32xf32>
    %174 = vector.broadcast %155 : vector<1x32xf32> to vector<8x32xf32>
    %175 = arith.mulf %173, %174 : vector<8x32xf32>
    %176 = vector.broadcast %157 : vector<1x32xf32> to vector<8x32xf32>
    %177 = arith.addf %175, %176 : vector<8x32xf32>
    %178 = arith.truncf %177 : vector<8x32xf32> to vector<8x32xbf16>
    %179 = vector.shape_cast %178 : vector<8x32xbf16> to vector<1x8x32xbf16>
    %180 = vector.broadcast %179 : vector<1x8x32xbf16> to vector<12x8x32xbf16>
    %c1_95 = arith.constant 1 : index
    %c0_96 = arith.constant 0 : index
    %c0_97 = arith.constant 0 : index
    %c0_98 = arith.constant 0 : index
    %181 = vector.load %arg6[%c1_95, %c0_96, %c0_97, %c0_98] : memref<2x12x32x8xbf16, #tpu.memory_space<vmem>>, vector<1x12x32x8xbf16>
    %182 = vector.shape_cast %181 : vector<1x12x32x8xbf16> to vector<12x32x8xbf16>
    "tpu.trace_start"() <{level = 10 : i32, message = "gsd,gde->gse"}> : () -> ()
    %cst_99 = arith.constant dense<0.000000e+00> : vector<12x8x8xf32>
    %183 = tpu.matmul %180, %182, %cst_99 {dimension_numbers = #tpu.dot_dimension_numbers<[2], [1], [1], [2], [0, 0, 0, 1, 1, 2], [0], [0]>} : vector<12x8x32xbf16>, vector<12x32x8xbf16>, vector<12x8x8xf32> -> vector<12x8x8xf32>
    "tpu.trace_stop"() : () -> ()
    %184 = vector.extract_strided_slice %183 {offsets = [0, 0, 0], sizes = [4, 8, 8], strides = [1, 1, 1]} : vector<12x8x8xf32> to vector<4x8x8xf32>
    %185 = arith.truncf %184 : vector<4x8x8xf32> to vector<4x8x8xbf16>
    %186 = vector.extract_strided_slice %183 {offsets = [4, 0, 0], sizes = [4, 8, 8], strides = [1, 1, 1]} : vector<12x8x8xf32> to vector<4x8x8xf32>
    %187 = arith.truncf %186 : vector<4x8x8xf32> to vector<4x8x8xbf16>
    %188 = vector.extract_strided_slice %183 {offsets = [8, 0, 0], sizes = [4, 8, 8], strides = [1, 1, 1]} : vector<12x8x8xf32> to vector<4x8x8xf32>
    %189 = arith.truncf %188 : vector<4x8x8xf32> to vector<4x8x8xbf16>
    "tpu.trace_start"() <{level = 10 : i32, message = "hqe,hke->hqk"}> : () -> ()
    %cst_100 = arith.constant dense<0.000000e+00> : vector<4x8x8xf32>
    %190 = tpu.matmul %185, %187, %cst_100 {dimension_numbers = #tpu.dot_dimension_numbers<[2], [2], [1], [1], [0, 0, 0, 1, 1, 1], [0], [0]>} : vector<4x8x8xbf16>, vector<4x8x8xbf16>, vector<4x8x8xf32> -> vector<4x8x8xf32>
    "tpu.trace_stop"() : () -> ()
    %191 = vector.broadcast %49 : vector<1x8x8xf32> to vector<4x8x8xf32>
    %192 = arith.addf %190, %191 : vector<4x8x8xf32>
    %cst_101 = arith.constant dense<0xFF800000> : vector<4x8xf32>
    %193 = vector.multi_reduction <maximumf>, %192, %cst_101 [2] : vector<4x8x8xf32> to vector<4x8xf32>
    %194 = vector.shape_cast %193 : vector<4x8xf32> to vector<4x8x1xf32>
    %195 = vector.broadcast %194 : vector<4x8x1xf32> to vector<4x8x8xf32>
    %196 = arith.subf %192, %195 : vector<4x8x8xf32>
    %197 = math.exp %196 : vector<4x8x8xf32>
    %cst_102 = arith.constant dense<0.000000e+00> : vector<4x8xf32>
    %198 = vector.multi_reduction <add>, %197, %cst_102 [2] : vector<4x8x8xf32> to vector<4x8xf32>
    %199 = vector.shape_cast %198 : vector<4x8xf32> to vector<4x8x1xf32>
    %200 = tpu.reciprocal %199 {approx = true} : vector<4x8x1xf32> -> vector<4x8x1xf32>
    %201 = vector.broadcast %200 : vector<4x8x1xf32> to vector<4x8x8xf32>
    %202 = arith.mulf %197, %201 : vector<4x8x8xf32>
    %203 = arith.truncf %202 : vector<4x8x8xf32> to vector<4x8x8xbf16>
    "tpu.trace_start"() <{level = 10 : i32, message = "hqk,hke->hqe"}> : () -> ()
    %cst_103 = arith.constant dense<0.000000e+00> : vector<4x8x8xf32>
    %204 = tpu.matmul %203, %189, %cst_103 {dimension_numbers = #tpu.dot_dimension_numbers<[2], [1], [1], [2], [0, 0, 0, 1, 1, 2], [0], [0]>} : vector<4x8x8xbf16>, vector<4x8x8xbf16>, vector<4x8x8xf32> -> vector<4x8x8xf32>
    "tpu.trace_stop"() : () -> ()
    %205 = arith.truncf %204 : vector<4x8x8xf32> to vector<4x8x8xbf16>
    %c1_104 = arith.constant 1 : index
    %c0_105 = arith.constant 0 : index
    %c0_106 = arith.constant 0 : index
    %c0_107 = arith.constant 0 : index
    %206 = vector.load %arg7[%c1_104, %c0_105, %c0_106, %c0_107] : memref<2x4x8x32xbf16, #tpu.memory_space<vmem>>, vector<1x4x8x32xbf16>
    %207 = vector.shape_cast %206 : vector<1x4x8x32xbf16> to vector<4x8x32xbf16>
    "tpu.trace_start"() <{level = 10 : i32, message = "hse,hed->hsd"}> : () -> ()
    %cst_108 = arith.constant dense<0.000000e+00> : vector<4x8x32xf32>
    %208 = tpu.matmul %205, %207, %cst_108 {dimension_numbers = #tpu.dot_dimension_numbers<[2], [1], [1], [2], [0, 0, 0, 1, 1, 2], [0], [0]>} : vector<4x8x8xbf16>, vector<4x8x32xbf16>, vector<4x8x32xf32> -> vector<4x8x32xf32>
    "tpu.trace_stop"() : () -> ()
    %cst_109 = arith.constant dense<0.000000e+00> : vector<8x32xf32>
    %209 = vector.multi_reduction <add>, %208, %cst_109 [0] : vector<4x8x32xf32> to vector<8x32xf32>
    %210 = arith.addf %153, %209 : vector<8x32xf32>
    %c1_110 = arith.constant 1 : index
    %c0_111 = arith.constant 0 : index
    %c0_112 = arith.constant 0 : index
    %211 = vector.load %arg8[%c1_110, %c0_111, %c0_112] : memref<2x1x32xf32, #tpu.memory_space<vmem>>, vector<1x1x32xf32>
    %212 = vector.shape_cast %211 : vector<1x1x32xf32> to vector<1x32xf32>
    %213 = vector.broadcast %212 : vector<1x32xf32> to vector<8x32xf32>
    %214 = arith.addf %210, %213 : vector<8x32xf32>
    %c1_113 = arith.constant 1 : index
    %c0_114 = arith.constant 0 : index
    %c0_115 = arith.constant 0 : index
    %215 = vector.load %arg9[%c1_113, %c0_114, %c0_115] : memref<2x1x32xf32, #tpu.memory_space<vmem>>, vector<1x1x32xf32>
    %216 = vector.shape_cast %215 : vector<1x1x32xf32> to vector<1x32xf32>
    %c1_116 = arith.constant 1 : index
    %c0_117 = arith.constant 0 : index
    %c0_118 = arith.constant 0 : index
    %217 = vector.load %arg10[%c1_116, %c0_117, %c0_118] : memref<2x1x32xf32, #tpu.memory_space<vmem>>, vector<1x1x32xf32>
    %218 = vector.shape_cast %217 : vector<1x1x32xf32> to vector<1x32xf32>
    %cst_119 = arith.constant dense<0.000000e+00> : vector<8xf32>
    %219 = vector.multi_reduction <add>, %214, %cst_119 [1] : vector<8x32xf32> to vector<8xf32>
    %220 = vector.shape_cast %219 : vector<8xf32> to vector<8x1xf32>
    %cst_120 = arith.constant 3.200000e+01 : f32
    %221 = vector.broadcast %cst_120 : f32 to vector<8x1xf32>
    %222 = arith.divf %220, %221 : vector<8x1xf32>
    %223 = vector.broadcast %222 : vector<8x1xf32> to vector<8x32xf32>
    %224 = arith.subf %214, %223 : vector<8x32xf32>
    %225 = arith.mulf %224, %224 : vector<8x32xf32>
    %cst_121 = arith.constant dense<0.000000e+00> : vector<8xf32>
    %226 = vector.multi_reduction <add>, %225, %cst_121 [1] : vector<8x32xf32> to vector<8xf32>
    %227 = vector.shape_cast %226 : vector<8xf32> to vector<8x1xf32>
    %cst_122 = arith.constant 3.200000e+01 : f32
    %228 = vector.broadcast %cst_122 : f32 to vector<8x1xf32>
    %229 = arith.divf %227, %228 : vector<8x1xf32>
    %cst_123 = arith.constant 9.99999974E-6 : f32
    %230 = vector.broadcast %cst_123 : f32 to vector<8x1xf32>
    %231 = arith.addf %229, %230 : vector<8x1xf32>
    %232 = math.rsqrt %231 : vector<8x1xf32>
    %233 = vector.broadcast %232 : vector<8x1xf32> to vector<8x32xf32>
    %234 = arith.mulf %224, %233 : vector<8x32xf32>
    %235 = vector.broadcast %216 : vector<1x32xf32> to vector<8x32xf32>
    %236 = arith.mulf %234, %235 : vector<8x32xf32>
    %237 = vector.broadcast %218 : vector<1x32xf32> to vector<8x32xf32>
    %238 = arith.addf %236, %237 : vector<8x32xf32>
    %239 = arith.truncf %238 : vector<8x32xf32> to vector<8x32xbf16>
    %c1_124 = arith.constant 1 : index
    %c0_125 = arith.constant 0 : index
    %c0_126 = arith.constant 0 : index
    %240 = vector.load %arg11[%c1_124, %c0_125, %c0_126] : memref<2x32x128xbf16, #tpu.memory_space<vmem>>, vector<1x32x128xbf16>
    %241 = vector.shape_cast %240 : vector<1x32x128xbf16> to vector<32x128xbf16>
    %cst_127 = arith.constant dense<0.000000e+00> : vector<8x128xf32>
    %242 = tpu.matmul %239, %241, %cst_127 {dimension_numbers = #tpu.dot_dimension_numbers<[1], [0], [0], [1], [0, 0, 1, 1], [], []>} : vector<8x32xbf16>, vector<32x128xbf16>, vector<8x128xf32> -> vector<8x128xf32>
    %c1_128 = arith.constant 1 : index
    %c0_129 = arith.constant 0 : index
    %c0_130 = arith.constant 0 : index
    %243 = vector.load %arg12[%c1_128, %c0_129, %c0_130] : memref<2x1x128xf32, #tpu.memory_space<vmem>>, vector<1x1x128xf32>
    %244 = vector.shape_cast %243 : vector<1x1x128xf32> to vector<1x128xf32>
    %245 = vector.broadcast %244 : vector<1x128xf32> to vector<8x128xf32>
    %246 = arith.addf %242, %245 : vector<8x128xf32>
    %cst_131 = arith.constant 0.000000e+00 : f32
    %247 = vector.broadcast %cst_131 : f32 to vector<8x128xf32>
    %248 = arith.maximumf %246, %247 : vector<8x128xf32>
    %249 = arith.truncf %248 : vector<8x128xf32> to vector<8x128xbf16>
    %c1_132 = arith.constant 1 : index
    %c0_133 = arith.constant 0 : index
    %c0_134 = arith.constant 0 : index
    %250 = vector.load %arg13[%c1_132, %c0_133, %c0_134] : memref<2x128x32xbf16, #tpu.memory_space<vmem>>, vector<1x128x32xbf16>
    %251 = vector.shape_cast %250 : vector<1x128x32xbf16> to vector<128x32xbf16>
    %cst_135 = arith.constant dense<0.000000e+00> : vector<8x32xf32>
    %252 = tpu.matmul %249, %251, %cst_135 {dimension_numbers = #tpu.dot_dimension_numbers<[1], [0], [0], [1], [0, 0, 1, 1], [], []>} : vector<8x128xbf16>, vector<128x32xbf16>, vector<8x32xf32> -> vector<8x32xf32>
    %c1_136 = arith.constant 1 : index
    %c0_137 = arith.constant 0 : index
    %c0_138 = arith.constant 0 : index
    %253 = vector.load %arg14[%c1_136, %c0_137, %c0_138] : memref<2x1x32xf32, #tpu.memory_space<vmem>>, vector<1x1x32xf32>
    %254 = vector.shape_cast %253 : vector<1x1x32xf32> to vector<1x32xf32>
    %255 = vector.broadcast %254 : vector<1x32xf32> to vector<8x32xf32>
    %256 = arith.addf %252, %255 : vector<8x32xf32>
    %257 = arith.addf %214, %256 : vector<8x32xf32>
    %c0_139 = arith.constant 0 : index
    %c0_140 = arith.constant 0 : index
    %258 = vector.load %arg15[%c0_139, %c0_140] : memref<1x32xf32, #tpu.memory_space<vmem>>, vector<1x32xf32>
    %c0_141 = arith.constant 0 : index
    %c0_142 = arith.constant 0 : index
    %259 = vector.load %arg16[%c0_141, %c0_142] : memref<1x32xf32, #tpu.memory_space<vmem>>, vector<1x32xf32>
    %cst_143 = arith.constant dense<0.000000e+00> : vector<8xf32>
    %260 = vector.multi_reduction <add>, %257, %cst_143 [1] : vector<8x32xf32> to vector<8xf32>
    %261 = vector.shape_cast %260 : vector<8xf32> to vector<8x1xf32>
    %cst_144 = arith.constant 3.200000e+01 : f32
    %262 = vector.broadcast %cst_144 : f32 to vector<8x1xf32>
    %263 = arith.divf %261, %262 : vector<8x1xf32>
    %264 = vector.broadcast %263 : vector<8x1xf32> to vector<8x32xf32>
    %265 = arith.subf %257, %264 : vector<8x32xf32>
    %266 = arith.mulf %265, %265 : vector<8x32xf32>
    %cst_145 = arith.constant dense<0.000000e+00> : vector<8xf32>
    %267 = vector.multi_reduction <add>, %266, %cst_145 [1] : vector<8x32xf32> to vector<8xf32>
    %268 = vector.shape_cast %267 : vector<8xf32> to vector<8x1xf32>
    %cst_146 = arith.constant 3.200000e+01 : f32
    %269 = vector.broadcast %cst_146 : f32 to vector<8x1xf32>
    %270 = arith.divf %268, %269 : vector<8x1xf32>
    %cst_147 = arith.constant 9.99999974E-6 : f32
    %271 = vector.broadcast %cst_147 : f32 to vector<8x1xf32>
    %272 = arith.addf %270, %271 : vector<8x1xf32>
    %273 = math.rsqrt %272 : vector<8x1xf32>
    %274 = vector.broadcast %273 : vector<8x1xf32> to vector<8x32xf32>
    %275 = arith.mulf %265, %274 : vector<8x32xf32>
    %276 = vector.broadcast %258 : vector<1x32xf32> to vector<8x32xf32>
    %277 = arith.mulf %275, %276 : vector<8x32xf32>
    %278 = vector.broadcast %259 : vector<1x32xf32> to vector<8x32xf32>
    %279 = arith.addf %277, %278 : vector<8x32xf32>
    %280 = arith.truncf %279 : vector<8x32xf32> to vector<8x32xbf16>
    %c0_148 = arith.constant 0 : index
    %c0_149 = arith.constant 0 : index
    %281 = vector.load %arg17[%c0_148, %c0_149] : memref<32x128xbf16, #tpu.memory_space<vmem>>, vector<32x128xbf16>
    %cst_150 = arith.constant dense<0.000000e+00> : vector<8x128xf32>
    %282 = tpu.matmul %280, %281, %cst_150 {dimension_numbers = #tpu.dot_dimension_numbers<[1], [0], [0], [1], [0, 0, 1, 1], [], []>} : vector<8x32xbf16>, vector<32x128xbf16>, vector<8x128xf32> -> vector<8x128xf32>
    %c0_151 = arith.constant 0 : index
    %c0_152 = arith.constant 0 : index
    %283 = vector.load %arg18[%c0_151, %c0_152] : memref<1x128xf32, #tpu.memory_space<vmem>>, vector<1x128xf32>
    %284 = vector.broadcast %283 : vector<1x128xf32> to vector<8x128xf32>
    %285 = arith.addf %282, %284 : vector<8x128xf32>
    %c0_153 = arith.constant 0 : index
    %c0_154 = arith.constant 0 : index
    %c0_155 = arith.constant 0 : index
    %286 = vector.load %arg19[%c0_153, %c0_154, %c0_155] : memref<1x8x128xf32, #tpu.memory_space<vmem>>, vector<1x8x128xf32>
    %287 = vector.shape_cast %286 : vector<1x8x128xf32> to vector<8x128xf32>
    %288 = vector.shape_cast %285 : vector<8x128xf32> to vector<1x8x128xf32>
    tpu.vector_store %arg19[%c0_153, %c0_154, %c0_155], %288 {strides = array<i32>} : memref<1x8x128xf32, #tpu.memory_space<vmem>>, vector<1x8x128xf32>,
    return
  }
  func.func @transform_0(%arg0: i32, %arg1: memref<2x8xi32, #tpu.memory_space<smem>>) -> (i32, i32) {
    %c0_i32 = arith.constant 0 : i32
    %c0_i32_0 = arith.constant 0 : i32
    %c0_i32_1 = arith.constant 0 : i32
    return %c0_i32, %c0_i32_0 : i32, i32
  }
  func.func @transform_1(%arg0: i32, %arg1: memref<2x8xi32, #tpu.memory_space<smem>>) -> (i32, i32) {
    %c0_i32 = arith.constant 0 : i32
    %c0_i32_0 = arith.constant 0 : i32
    %c0_i32_1 = arith.constant 0 : i32
    return %c0_i32, %c0_i32_0 : i32, i32
  }
  func.func @transform_2(%arg0: i32, %arg1: memref<2x8xi32, #tpu.memory_space<smem>>) -> (i32, i32, i32) {
    %c0_i32 = arith.constant 0 : i32
    %c0_i32_0 = arith.constant 0 : i32
    %c0_i32_1 = arith.constant 0 : i32
    %c0_i32_2 = arith.constant 0 : i32
    return %c0_i32, %c0_i32_0, %c0_i32_1 : i32, i32, i32
  }
  func.func @transform_3(%arg0: i32, %arg1: memref<2x8xi32, #tpu.memory_space<smem>>) -> (i32, i32, i32) {
    %c0_i32 = arith.constant 0 : i32
    %c0_i32_0 = arith.constant 0 : i32
    %c0_i32_1 = arith.constant 0 : i32
    %c0_i32_2 = arith.constant 0 : i32
    return %c0_i32, %c0_i32_0, %c0_i32_1 : i32, i32, i32
  }
  func.func @transform_4(%arg0: i32, %arg1: memref<2x8xi32, #tpu.memory_space<smem>>) -> (i32, i32, i32, i32) {
    %c0_i32 = arith.constant 0 : i32
    %c0_i32_0 = arith.constant 0 : i32
    %c0_i32_1 = arith.constant 0 : i32
    %c0_i32_2 = arith.constant 0 : i32
    %c0_i32_3 = arith.constant 0 : i32
    return %c0_i32, %c0_i32_0, %c0_i32_1, %c0_i32_2 : i32, i32, i32, i32
  }
  func.func @transform_5(%arg0: i32, %arg1: memref<2x8xi32, #tpu.memory_space<smem>>) -> (i32, i32, i32, i32) {
    %c0_i32 = arith.constant 0 : i32
    %c0_i32_0 = arith.constant 0 : i32
    %c0_i32_1 = arith.constant 0 : i32
    %c0_i32_2 = arith.constant 0 : i32
    %c0_i32_3 = arith.constant 0 : i32
    return %c0_i32, %c0_i32_0, %c0_i32_1, %c0_i32_2 : i32, i32, i32, i32
  }
  func.func @transform_6(%arg0: i32, %arg1: memref<2x8xi32, #tpu.memory_space<smem>>) -> (i32, i32, i32) {
    %c0_i32 = arith.constant 0 : i32
    %c0_i32_0 = arith.constant 0 : i32
    %c0_i32_1 = arith.constant 0 : i32
    %c0_i32_2 = arith.constant 0 : i32
    return %c0_i32, %c0_i32_0, %c0_i32_1 : i32, i32, i32
  }
  func.func @transform_7(%arg0: i32, %arg1: memref<2x8xi32, #tpu.memory_space<smem>>) -> (i32, i32, i32) {
    %c0_i32 = arith.constant 0 : i32
    %c0_i32_0 = arith.constant 0 : i32
    %c0_i32_1 = arith.constant 0 : i32
    %c0_i32_2 = arith.constant 0 : i32
    return %c0_i32, %c0_i32_0, %c0_i32_1 : i32, i32, i32
  }
  func.func @transform_8(%arg0: i32, %arg1: memref<2x8xi32, #tpu.memory_space<smem>>) -> (i32, i32, i32) {
    %c0_i32 = arith.constant 0 : i32
    %c0_i32_0 = arith.constant 0 : i32
    %c0_i32_1 = arith.constant 0 : i32
    %c0_i32_2 = arith.constant 0 : i32
    return %c0_i32, %c0_i32_0, %c0_i32_1 : i32, i32, i32
  }
  func.func @transform_9(%arg0: i32, %arg1: memref<2x8xi32, #tpu.memory_space<smem>>) -> (i32, i32, i32) {
    %c0_i32 = arith.constant 0 : i32
    %c0_i32_0 = arith.constant 0 : i32
    %c0_i32_1 = arith.constant 0 : i32
    %c0_i32_2 = arith.constant 0 : i32
    return %c0_i32, %c0_i32_0, %c0_i32_1 : i32, i32, i32
  }
  func.func @transform_10(%arg0: i32, %arg1: memref<2x8xi32, #tpu.memory_space<smem>>) -> (i32, i32, i32) {
    %c0_i32 = arith.constant 0 : i32
    %c0_i32_0 = arith.constant 0 : i32
    %c0_i32_1 = arith.constant 0 : i32
    %c0_i32_2 = arith.constant 0 : i32
    return %c0_i32, %c0_i32_0, %c0_i32_1 : i32, i32, i32
  }
  func.func @transform_11(%arg0: i32, %arg1: memref<2x8xi32, #tpu.memory_space<smem>>) -> (i32, i32, i32) {
    %c0_i32 = arith.constant 0 : i32
    %c0_i32_0 = arith.constant 0 : i32
    %c0_i32_1 = arith.constant 0 : i32
    %c0_i32_2 = arith.constant 0 : i32
    return %c0_i32, %c0_i32_0, %c0_i32_1 : i32, i32, i32
  }
  func.func @transform_12(%arg0: i32, %arg1: memref<2x8xi32, #tpu.memory_space<smem>>) -> (i32, i32, i32) {
    %c0_i32 = arith.constant 0 : i32
    %c0_i32_0 = arith.constant 0 : i32
    %c0_i32_1 = arith.constant 0 : i32
    %c0_i32_2 = arith.constant 0 : i32
    return %c0_i32, %c0_i32_0, %c0_i32_1 : i32, i32, i32
  }
  func.func @transform_13(%arg0: i32, %arg1: memref<2x8xi32, #tpu.memory_space<smem>>) -> (i32, i32) {
    %c0_i32 = arith.constant 0 : i32
    %c0_i32_0 = arith.constant 0 : i32
    %c0_i32_1 = arith.constant 0 : i32
    return %c0_i32, %c0_i32_0 : i32, i32
  }
  func.func @transform_14(%arg0: i32, %arg1: memref<2x8xi32, #tpu.memory_space<smem>>) -> (i32, i32) {
    %c0_i32 = arith.constant 0 : i32
    %c0_i32_0 = arith.constant 0 : i32
    %c0_i32_1 = arith.constant 0 : i32
    return %c0_i32, %c0_i32_0 : i32, i32
  }
  func.func @transform_15(%arg0: i32, %arg1: memref<2x8xi32, #tpu.memory_space<smem>>) -> (i32, i32) {
    %c0_i32 = arith.constant 0 : i32
    %c0_i32_0 = arith.constant 0 : i32
    %c0_i32_1 = arith.constant 0 : i32
    return %c0_i32, %c0_i32_0 : i32, i32
  }
  func.func @transform_16(%arg0: i32, %arg1: memref<2x8xi32, #tpu.memory_space<smem>>) -> (i32, i32) {
    %c0_i32 = arith.constant 0 : i32
    %c0_i32_0 = arith.constant 0 : i32
    %c0_i32_1 = arith.constant 0 : i32
    return %c0_i32, %c0_i32_0 : i32, i32
  }
  func.func @transform_17(%arg0: i32, %arg1: memref<2x8xi32, #tpu.memory_space<smem>>) -> (i32, i32, i32) {
    %c0_i32 = arith.constant 0 : i32
    %c0_i32_0 = arith.constant 0 : i32
    %c0_i32_1 = arith.constant 0 : i32
    return %arg0, %c0_i32, %c0_i32_0 : i32, i32, i32
  }
}

</mosaic_0001>

<llo_original>
// kernel: gpt_forward.1
$region0: #{gpt_forward.1}
  #allocation0 [shape = 'u32[]', space=smem, size = 0x4, offset = 0x4, fixed_abs, tag = 'smem constant byte address 0x4 - core index']
  #allocation1 [shape = 'u32[144,128]{1,0:T(1,128)}', space=vmem, size = 0x12000, scoped, tag = 'internal scratch']
  #allocation2 [shape = 'f32[8,32]{1,0:T(8,128)}', space=vmem, size = 0x1000, scoped, tag = 'scratch operand']
  #allocation3 [shape = 's32[1]{0}', space=sflag, size = 0x4, scoped, tag = 'scoped memory for gpt_forward.1']
  #allocation4 [shape = 'u8[1024]{0}', space=smem, size = 0x400, scoped, tag = 'prefetched SMEM operand 0']
  %s0 = inlined_call_operand.vmem [shape: s32[2,8], index: 0, kind: input, shape index: {}]
  %s1 = inlined_call_operand.vmem [shape: f32[65,32], index: 1, kind: input, shape index: {}]
  %s2 = inlined_call_operand.vmem [shape: f32[8,32], index: 2, kind: input, shape index: {}]
  %s3 = inlined_call_operand.vmem [shape: f32[2,1,32], index: 3, kind: input, shape index: {}]
  %s4 = inlined_call_operand.vmem [shape: f32[2,1,32], index: 4, kind: input, shape index: {}]
  %s5 = inlined_call_operand.vmem [shape: bf16[2,12,32,8], index: 5, kind: input, shape index: {}]
  %s6 = inlined_call_operand.vmem [shape: bf16[2,4,8,32], index: 6, kind: input, shape index: {}]
  %s7 = inlined_call_operand.vmem [shape: f32[2,1,32], index: 7, kind: input, shape index: {}]
  %s8 = inlined_call_operand.vmem [shape: f32[2,1,32], index: 8, kind: input, shape index: {}]
  %s9 = inlined_call_operand.vmem [shape: f32[2,1,32], index: 9, kind: input, shape index: {}]
  %s10 = inlined_call_operand.vmem [shape: bf16[2,32,128], index: 10, kind: input, shape index: {}]
  %s11 = inlined_call_operand.vmem [shape: f32[2,1,128], index: 11, kind: input, shape index: {}]
  %s12 = inlined_call_operand.vmem [shape: bf16[2,128,32], index: 12, kind: input, shape index: {}]
  %s13 = inlined_call_operand.vmem [shape: f32[2,1,32], index: 13, kind: input, shape index: {}]
  %s14 = inlined_call_operand.vmem [shape: f32[1,32], index: 14, kind: input, shape index: {}]
  %s15 = inlined_call_operand.vmem [shape: f32[1,32], index: 15, kind: input, shape index: {}]
  %s16 = inlined_call_operand.vmem [shape: bf16[32,128], index: 16, kind: input, shape index: {}]
  %s17 = inlined_call_operand.vmem [shape: f32[1,128], index: 17, kind: input, shape index: {}]
  %s18 = inlined_call_operand.hbm [shape: f32[2,8,128], index: 18, kind: output, shape index: {}]
  %s19 = sld [smem:[#allocation0]]
  $region101: #{gpt_forward.1} parent=0
    _
  %s21 = ssub.s32 1, %s19
  %s22 = scalar_select 0, %s21, %s19
  %s23 = sshll.u32 %s0, 4
  %s24 = int_to_ptr.vmem [resolvable:$true] %s23
  %26 = dma.vmem_to_smem %s24, 32, [#allocation4], [#allocation3]
  %27 = dma.done [#allocation3], 32
  %28 = sfence
  $region1: #{gpt_forward.1} parent=0
    #allocation5 [shape = 'u8[8192]{0}', space=vmem, size = 0x2000, scoped, tag = 'output window, operand 0']
    #allocation6 [shape = 's32[2]{0}', space=sflag, size = 0x8, scoped, tag = 'scoped memory for gpt_forward.1']
    %29 = vsyncpa [#allocation6], 0
    %s30 = scalar_lea.sflag [#allocation6], 1
    %31 = vsyncpa %s30, 0
    loop: start=0, step=1, limit=4
    $region2: #{gpt_forward.1} parent=1 // loop_pre_header
      _
    $region3: #{gpt_forward.1} parent=1 // loop_header
      %s33 = sphi 0, %s37
      %p34 = scmp.ge.s32.totalorder %s33, 4
      %s41 = sphi 0, %s41
      %s43 = sphi 0, %s41
      %s44 = sphi 0, %s43
      %s58 = sphi 0, %s44
      %s62 = sphi 0, %s62
      %s64 = sphi 0, %s62
      %s65 = sphi 0, %s64
      %s79 = sphi 0, %s65
      %s83 = sphi 0, %s83
      %s85 = sphi 0, %s83
      %s86 = sphi 0, %s85
      %s100 = sphi 0, %s86
      %s104 = sphi 0, %s104
      %s106 = sphi 0, %s104
      %s107 = sphi 0, %s106
      %s121 = sphi 0, %s107
      %s125 = sphi 0, %s125
      %s127 = sphi 0, %s125
      %s128 = sphi 0, %s127
      %s142 = sphi 0, %s128
      %s146 = sphi 0, %s146
      %s148 = sphi 0, %s146
      %s149 = sphi 0, %s148
      %s163 = sphi 0, %s149
      %s167 = sphi 0, %s167
      %s169 = sphi 0, %s167
      %s170 = sphi 0, %s169
      %s184 = sphi 0, %s170
      %s188 = sphi 0, %s188
      %s190 = sphi 0, %s188
      %s191 = sphi 0, %s190
      %s205 = sphi 0, %s191
      %s209 = sphi 0, %s209
      %s211 = sphi 0, %s209
      %s212 = sphi 0, %s211
      %s226 = sphi 0, %s212
      %s230 = sphi 0, %s230
      %s232 = sphi 0, %s230
      %s233 = sphi 0, %s232
      %s247 = sphi 0, %s233
      %s251 = sphi 0, %s251
      %s253 = sphi 0, %s251
      %s254 = sphi 0, %s253
      %s268 = sphi 0, %s254
      %s272 = sphi 0, %s272
      %s274 = sphi 0, %s272
      %s275 = sphi 0, %s274
      %s289 = sphi 0, %s275
      %s293 = sphi 0, %s293
      %s295 = sphi 0, %s293
      %s296 = sphi 0, %s295
      %s310 = sphi 0, %s296
      %s314 = sphi 0, %s314
      %s316 = sphi 0, %s314
      %s317 = sphi 0, %s316
      %s331 = sphi 0, %s317
      %s335 = sphi 0, %s335
      %s337 = sphi 0, %s335
      %s338 = sphi 0, %s337
      %s352 = sphi 0, %s338
      %s356 = sphi 0, %s356
      %s358 = sphi 0, %s356
      %s359 = sphi 0, %s358
      %s373 = sphi 0, %s359
      %s377 = sphi 0, %s377
      %s379 = sphi 0, %s377
      %s380 = sphi 0, %s379
      %s394 = sphi 0, %s380
      %s400 = sphi 0, %s402
      %s403 = sphi 0, %s400
      %s404 = sphi 0, %s403
      %s420 = sphi 0, %s404
    $region4: #{gpt_forward.1} parent=1 // loop_header_branch
      %36 = sbr.rel (%p34) target = $region8
    $region5: #{gpt_forward.1} parent=1 // loop_body
      %s38 = ssub.s32 %s33, 1
      %s39 = ssub.s32 %s33, 2
      %s40 = sadd.s32 %s33, 1
      %s42 = sadd.s32 %s41, 1
      %p45 = scmp.eq.s32.totalorder %s33, 1
      %p46 = scmp.ne.s32.totalorder %s41, %s43
      %p47 = scmp.eq.s32.totalorder %s33, 0
      %p48 = por %p46, %p47
      %p49 = scmp.ne.s32.totalorder %s41, %s43
      %p50 = scmp.eq.s32.totalorder %s38, 1
      %p51 = por %p49, %p50
      %p52 = scmp.ne.s32.totalorder %s43, %s44
      %p53 = scmp.eq.s32.totalorder %s38, 0
      %p54 = por %p52, %p53
      %p55 = scmp.ne.s32.totalorder %s43, %s44
      %p56 = scmp.eq.s32.totalorder %s39, 1
      %p57 = por %p55, %p56
      %p59 = scmp.ne.s32.totalorder %s44, %s58
      %p60 = scmp.eq.s32.totalorder %s39, 0
      %p61 = por %p59, %p60
      %s63 = sadd.s32 %s62, 1
      %p66 = scmp.eq.s32.totalorder %s33, 1
      %p67 = scmp.ne.s32.totalorder %s62, %s64
      %p68 = scmp.eq.s32.totalorder %s33, 0
      %p69 = por %p67, %p68
      %p70 = scmp.ne.s32.totalorder %s62, %s64
      %p71 = scmp.eq.s32.totalorder %s38, 1
      %p72 = por %p70, %p71
      %p73 = scmp.ne.s32.totalorder %s64, %s65
      %p74 = scmp.eq.s32.totalorder %s38, 0
      %p75 = por %p73, %p74
      %p76 = scmp.ne.s32.totalorder %s64, %s65
      %p77 = scmp.eq.s32.totalorder %s39, 1
      %p78 = por %p76, %p77
      %p80 = scmp.ne.s32.totalorder %s65, %s79
      %p81 = scmp.eq.s32.totalorder %s39, 0
      %p82 = por %p80, %p81
      %s84 = sadd.s32 %s83, 1
      %p87 = scmp.eq.s32.totalorder %s33, 1
      %p88 = scmp.ne.s32.totalorder %s83, %s85
      %p89 = scmp.eq.s32.totalorder %s33, 0
      %p90 = por %p88, %p89
      %p91 = scmp.ne.s32.totalorder %s83, %s85
      %p92 = scmp.eq.s32.totalorder %s38, 1
      %p93 = por %p91, %p92
      %p94 = scmp.ne.s32.totalorder %s85, %s86
      %p95 = scmp.eq.s32.totalorder %s38, 0
      %p96 = por %p94, %p95
      %p97 = scmp.ne.s32.totalorder %s85, %s86
      %p98 = scmp.eq.s32.totalorder %s39, 1
      %p99 = por %p97, %p98
      %p101 = scmp.ne.s32.totalorder %s86, %s100
      %p102 = scmp.eq.s32.totalorder %s39, 0
      %p103 = por %p101, %p102
      %s105 = sadd.s32 %s104, 1
      %p108 = scmp.eq.s32.totalorder %s33, 1
      %p109 = scmp.ne.s32.totalorder %s104, %s106
      %p110 = scmp.eq.s32.totalorder %s33, 0
      %p111 = por %p109, %p110
      %p112 = scmp.ne.s32.totalorder %s104, %s106
      %p113 = scmp.eq.s32.totalorder %s38, 1
      %p114 = por %p112, %p113
      %p115 = scmp.ne.s32.totalorder %s106, %s107
      %p116 = scmp.eq.s32.totalorder %s38, 0
      %p117 = por %p115, %p116
      %p118 = scmp.ne.s32.totalorder %s106, %s107
      %p119 = scmp.eq.s32.totalorder %s39, 1
      %p120 = por %p118, %p119
      %p122 = scmp.ne.s32.totalorder %s107, %s121
      %p123 = scmp.eq.s32.totalorder %s39, 0
      %p124 = por %p122, %p123
      %s126 = sadd.s32 %s125, 1
      %p129 = scmp.eq.s32.totalorder %s33, 1
      %p130 = scmp.ne.s32.totalorder %s125, %s127
      %p131 = scmp.eq.s32.totalorder %s33, 0
      %p132 = por %p130, %p131
      %p133 = scmp.ne.s32.totalorder %s125, %s127
      %p134 = scmp.eq.s32.totalorder %s38, 1
      %p135 = por %p133, %p134
      %p136 = scmp.ne.s32.totalorder %s127, %s128
      %p137 = scmp.eq.s32.totalorder %s38, 0
      %p138 = por %p136, %p137
      %p139 = scmp.ne.s32.totalorder %s127, %s128
      %p140 = scmp.eq.s32.totalorder %s39, 1
      %p141 = por %p139, %p140
      %p143 = scmp.ne.s32.totalorder %s128, %s142
      %p144 = scmp.eq.s32.totalorder %s39, 0
      %p145 = por %p143, %p144
      %s147 = sadd.s32 %s146, 1
      %p150 = scmp.eq.s32.totalorder %s33, 1
      %p151 = scmp.ne.s32.totalorder %s146, %s148
      %p152 = scmp.eq.s32.totalorder %s33, 0
      %p153 = por %p151, %p152
      %p154 = scmp.ne.s32.totalorder %s146, %s148
      %p155 = scmp.eq.s32.totalorder %s38, 1
      %p156 = por %p154, %p155
      %p157 = scmp.ne.s32.totalorder %s148, %s149
      %p158 = scmp.eq.s32.totalorder %s38, 0
      %p159 = por %p157, %p158
      %p160 = scmp.ne.s32.totalorder %s148, %s149
      %p161 = scmp.eq.s32.totalorder %s39, 1
      %p162 = por %p160, %p161
      %p164 = scmp.ne.s32.totalorder %s149, %s163
      %p165 = scmp.eq.s32.totalorder %s39, 0
      %p166 = por %p164, %p165
      %s168 = sadd.s32 %s167, 1
      %p171 = scmp.eq.s32.totalorder %s33, 1
      %p172 = scmp.ne.s32.totalorder %s167, %s169
      %p173 = scmp.eq.s32.totalorder %s33, 0
      %p174 = por %p172, %p173
      %p175 = scmp.ne.s32.totalorder %s167, %s169
      %p176 = scmp.eq.s32.totalorder %s38, 1
      %p177 = por %p175, %p176
      %p178 = scmp.ne.s32.totalorder %s169, %s170
      %p179 = scmp.eq.s32.totalorder %s38, 0
      %p180 = por %p178, %p179
      %p181 = scmp.ne.s32.totalorder %s169, %s170
      %p182 = scmp.eq.s32.totalorder %s39, 1
      %p183 = por %p181, %p182
      %p185 = scmp.ne.s32.totalorder %s170, %s184
      %p186 = scmp.eq.s32.totalorder %s39, 0
      %p187 = por %p185, %p186
      %s189 = sadd.s32 %s188, 1
      %p192 = scmp.eq.s32.totalorder %s33, 1
      %p193 = scmp.ne.s32.totalorder %s188, %s190
      %p194 = scmp.eq.s32.totalorder %s33, 0
      %p195 = por %p193, %p194
      %p196 = scmp.ne.s32.totalorder %s188, %s190
      %p197 = scmp.eq.s32.totalorder %s38, 1
      %p198 = por %p196, %p197
      %p199 = scmp.ne.s32.totalorder %s190, %s191
      %p200 = scmp.eq.s32.totalorder %s38, 0
      %p201 = por %p199, %p200
      %p202 = scmp.ne.s32.totalorder %s190, %s191
      %p203 = scmp.eq.s32.totalorder %s39, 1
      %p204 = por %p202, %p203
      %p206 = scmp.ne.s32.totalorder %s191, %s205
      %p207 = scmp.eq.s32.totalorder %s39, 0
      %p208 = por %p206, %p207
      %s210 = sadd.s32 %s209, 1
      %p213 = scmp.eq.s32.totalorder %s33, 1
      %p214 = scmp.ne.s32.totalorder %s209, %s211
      %p215 = scmp.eq.s32.totalorder %s33, 0
      %p216 = por %p214, %p215
      %p217 = scmp.ne.s32.totalorder %s209, %s211
      %p218 = scmp.eq.s32.totalorder %s38, 1
      %p219 = por %p217, %p218
      %p220 = scmp.ne.s32.totalorder %s211, %s212
      %p221 = scmp.eq.s32.totalorder %s38, 0
      %p222 = por %p220, %p221
      %p223 = scmp.ne.s32.totalorder %s211, %s212
      %p224 = scmp.eq.s32.totalorder %s39, 1
      %p225 = por %p223, %p224
      %p227 = scmp.ne.s32.totalorder %s212, %s226
      %p228 = scmp.eq.s32.totalorder %s39, 0
      %p229 = por %p227, %p228
      %s231 = sadd.s32 %s230, 1
      %p234 = scmp.eq.s32.totalorder %s33, 1
      %p235 = scmp.ne.s32.totalorder %s230, %s232
      %p236 = scmp.eq.s32.totalorder %s33, 0
      %p237 = por %p235, %p236
      %p238 = scmp.ne.s32.totalorder %s230, %s232
      %p239 = scmp.eq.s32.totalorder %s38, 1
      %p240 = por %p238, %p239
      %p241 = scmp.ne.s32.totalorder %s232, %s233
      %p242 = scmp.eq.s32.totalorder %s38, 0
      %p243 = por %p241, %p242
      %p244 = scmp.ne.s32.totalorder %s232, %s233
      %p245 = scmp.eq.s32.totalorder %s39, 1
      %p246 = por %p244, %p245
      %p248 = scmp.ne.s32.totalorder %s233, %s247
      %p249 = scmp.eq.s32.totalorder %s39, 0
      %p250 = por %p248, %p249
      %s252 = sadd.s32 %s251, 1
      %p255 = scmp.eq.s32.totalorder %s33, 1
      %p256 = scmp.ne.s32.totalorder %s251, %s253
      %p257 = scmp.eq.s32.totalorder %s33, 0
      %p258 = por %p256, %p257
      %p259 = scmp.ne.s32.totalorder %s251, %s253
      %p260 = scmp.eq.s32.totalorder %s38, 1
      %p261 = por %p259, %p260
      %p262 = scmp.ne.s32.totalorder %s253, %s254
      %p263 = scmp.eq.s32.totalorder %s38, 0
      %p264 = por %p262, %p263
      %p265 = scmp.ne.s32.totalorder %s253, %s254
      %p266 = scmp.eq.s32.totalorder %s39, 1
      %p267 = por %p265, %p266
      %p269 = scmp.ne.s32.totalorder %s254, %s268
      %p270 = scmp.eq.s32.totalorder %s39, 0
      %p271 = por %p269, %p270
      %s273 = sadd.s32 %s272, 1
      %p276 = scmp.eq.s32.totalorder %s33, 1
      %p277 = scmp.ne.s32.totalorder %s272, %s274
      %p278 = scmp.eq.s32.totalorder %s33, 0
      %p279 = por %p277, %p278
      %p280 = scmp.ne.s32.totalorder %s272, %s274
      %p281 = scmp.eq.s32.totalorder %s38, 1
      %p282 = por %p280, %p281
      %p283 = scmp.ne.s32.totalorder %s274, %s275
      %p284 = scmp.eq.s32.totalorder %s38, 0
      %p285 = por %p283, %p284
      %p286 = scmp.ne.s32.totalorder %s274, %s275
      %p287 = scmp.eq.s32.totalorder %s39, 1
      %p288 = por %p286, %p287
      %p290 = scmp.ne.s32.totalorder %s275, %s289
      %p291 = scmp.eq.s32.totalorder %s39, 0
      %p292 = por %p290, %p291
      %s294 = sadd.s32 %s293, 1
      %p297 = scmp.eq.s32.totalorder %s33, 1
      %p298 = scmp.ne.s32.totalorder %s293, %s295
      %p299 = scmp.eq.s32.totalorder %s33, 0
      %p300 = por %p298, %p299
      %p301 = scmp.ne.s32.totalorder %s293, %s295
      %p302 = scmp.eq.s32.totalorder %s38, 1
      %p303 = por %p301, %p302
      %p304 = scmp.ne.s32.totalorder %s295, %s296
      %p305 = scmp.eq.s32.totalorder %s38, 0
      %p306 = por %p304, %p305
      %p307 = scmp.ne.s32.totalorder %s295, %s296
      %p308 = scmp.eq.s32.totalorder %s39, 1
      %p309 = por %p307, %p308
      %p311 = scmp.ne.s32.totalorder %s296, %s310
      %p312 = scmp.eq.s32.totalorder %s39, 0
      %p313 = por %p311, %p312
      %s315 = sadd.s32 %s314, 1
      %p318 = scmp.eq.s32.totalorder %s33, 1
      %p319 = scmp.ne.s32.totalorder %s314, %s316
      %p320 = scmp.eq.s32.totalorder %s33, 0
      %p321 = por %p319, %p320
      %p322 = scmp.ne.s32.totalorder %s314, %s316
      %p323 = scmp.eq.s32.totalorder %s38, 1
      %p324 = por %p322, %p323
      %p325 = scmp.ne.s32.totalorder %s316, %s317
      %p326 = scmp.eq.s32.totalorder %s38, 0
      %p327 = por %p325, %p326
      %p328 = scmp.ne.s32.totalorder %s316, %s317
      %p329 = scmp.eq.s32.totalorder %s39, 1
      %p330 = por %p328, %p329
      %p332 = scmp.ne.s32.totalorder %s317, %s331
      %p333 = scmp.eq.s32.totalorder %s39, 0
      %p334 = por %p332, %p333
      %s336 = sadd.s32 %s335, 1
      %p339 = scmp.eq.s32.totalorder %s33, 1
      %p340 = scmp.ne.s32.totalorder %s335, %s337
      %p341 = scmp.eq.s32.totalorder %s33, 0
      %p342 = por %p340, %p341
      %p343 = scmp.ne.s32.totalorder %s335, %s337
      %p344 = scmp.eq.s32.totalorder %s38, 1
      %p345 = por %p343, %p344
      %p346 = scmp.ne.s32.totalorder %s337, %s338
      %p347 = scmp.eq.s32.totalorder %s38, 0
      %p348 = por %p346, %p347
      %p349 = scmp.ne.s32.totalorder %s337, %s338
      %p350 = scmp.eq.s32.totalorder %s39, 1
      %p351 = por %p349, %p350
      %p353 = scmp.ne.s32.totalorder %s338, %s352
      %p354 = scmp.eq.s32.totalorder %s39, 0
      %p355 = por %p353, %p354
      %s357 = sadd.s32 %s356, 1
      %p360 = scmp.eq.s32.totalorder %s33, 1
      %p361 = scmp.ne.s32.totalorder %s356, %s358
      %p362 = scmp.eq.s32.totalorder %s33, 0
      %p363 = por %p361, %p362
      %p364 = scmp.ne.s32.totalorder %s356, %s358
      %p365 = scmp.eq.s32.totalorder %s38, 1
      %p366 = por %p364, %p365
      %p367 = scmp.ne.s32.totalorder %s358, %s359
      %p368 = scmp.eq.s32.totalorder %s38, 0
      %p369 = por %p367, %p368
      %p370 = scmp.ne.s32.totalorder %s358, %s359
      %p371 = scmp.eq.s32.totalorder %s39, 1
      %p372 = por %p370, %p371
      %p374 = scmp.ne.s32.totalorder %s359, %s373
      %p375 = scmp.eq.s32.totalorder %s39, 0
      %p376 = por %p374, %p375
      %s378 = sadd.s32 %s377, 1
      %p381 = scmp.eq.s32.totalorder %s33, 1
      %p382 = scmp.ne.s32.totalorder %s377, %s379
      %p383 = scmp.eq.s32.totalorder %s33, 0
      %p384 = por %p382, %p383
      %p385 = scmp.ne.s32.totalorder %s377, %s379
      %p386 = scmp.eq.s32.totalorder %s38, 1
      %p387 = por %p385, %p386
      %p388 = scmp.ne.s32.totalorder %s379, %s380
      %p389 = scmp.eq.s32.totalorder %s38, 0
      %p390 = por %p388, %p389
      %p391 = scmp.ne.s32.totalorder %s379, %s380
      %p392 = scmp.eq.s32.totalorder %s39, 1
      %p393 = por %p391, %p392
      %p395 = scmp.ne.s32.totalorder %s380, %s394
      %p396 = scmp.eq.s32.totalorder %s39, 0
      %p397 = por %p395, %p396
      %s398 = ssub.s32 %s33, %s40
      %p399 = scmp.eq.s32.totalorder %s398, 0
      %s401 = sadd.s32 %s400, 1
      %s402 = scalar_select %p399, %s400, %s401
      %p405 = pneg %p399
      %p406 = scmp.eq.s32.totalorder %s33, 1
      %p407 = por %p405, %p406
      %p408 = scmp.ne.s32.totalorder %s400, %s403
      %p409 = scmp.eq.s32.totalorder %s33, 0
      %p410 = por %p408, %p409
      %p411 = scmp.ne.s32.totalorder %s400, %s403
      %p412 = scmp.eq.s32.totalorder %s38, 1
      %p413 = por %p411, %p412
      %p414 = scmp.ne.s32.totalorder %s403, %s404
      %p415 = scmp.eq.s32.totalorder %s38, 0
      %p416 = por %p414, %p415
      %p417 = scmp.ne.s32.totalorder %s403, %s404
      %p418 = scmp.eq.s32.totalorder %s39, 1
      %p419 = por %p417, %p418
      %p421 = scmp.ne.s32.totalorder %s404, %s420
      %p422 = scmp.eq.s32.totalorder %s39, 0
      %p423 = por %p421, %p422
      %p424 = scmp.le.s32.totalorder 1, %s33
      %p425 = scmp.lt.s32.totalorder %s33, 3
      %p426 = pnand %p424, %p425
      %p427 = pneg %p426
      // Predicated region
      $region9: #{gpt_forward.1} parent=5 // pred_check
        _
      $region10: #{gpt_forward.1} parent=5 // pred_check_branch
        %429 = sbr.rel (%p426) target = $region12
      $region11: #{gpt_forward.1} parent=5 // pred_region
        %s430 = ssub.s32 %s33, 1
        // Predicated region
        $region13: #{gpt_forward.1} parent=11 // pred_check
          %p431 = pneg %p54
        $region14: #{gpt_forward.1} parent=11 // pred_check_branch
          %433 = sbr.rel (%p431) target = $region16
        $region15: #{gpt_forward.1} parent=11 // pred_region
          _
        $region16: #{gpt_forward.1} parent=11 // pred_fallthru
          _
        // Predicated region
        $region17: #{gpt_forward.1} parent=11 // pred_check
          %p434 = pneg %p75
        $region18: #{gpt_forward.1} parent=11 // pred_check_branch
          %436 = sbr.rel (%p434) target = $region20
        $region19: #{gpt_forward.1} parent=11 // pred_region
          _
        $region20: #{gpt_forward.1} parent=11 // pred_fallthru
          _
        // Predicated region
        $region21: #{gpt_forward.1} parent=11 // pred_check
          %p437 = pneg %p96
        $region22: #{gpt_forward.1} parent=11 // pred_check_branch
          %439 = sbr.rel (%p437) target = $region24
        $region23: #{gpt_forward.1} parent=11 // pred_region
          _
        $region24: #{gpt_forward.1} parent=11 // pred_fallthru
          _
        // Predicated region
        $region25: #{gpt_forward.1} parent=11 // pred_check
          %p440 = pneg %p117
        $region26: #{gpt_forward.1} parent=11 // pred_check_branch
          %442 = sbr.rel (%p440) target = $region28
        $region27: #{gpt_forward.1} parent=11 // pred_region
          _
        $region28: #{gpt_forward.1} parent=11 // pred_fallthru
          _
        // Predicated region
        $region29: #{gpt_forward.1} parent=11 // pred_check
          %p443 = pneg %p138
        $region30: #{gpt_forward.1} parent=11 // pred_check_branch
          %445 = sbr.rel (%p443) target = $region32
        $region31: #{gpt_forward.1} parent=11 // pred_region
          _
        $region32: #{gpt_forward.1} parent=11 // pred_fallthru
          _
        // Predicated region
        $region33: #{gpt_forward.1} parent=11 // pred_check
          %p446 = pneg %p159
        $region34: #{gpt_forward.1} parent=11 // pred_check_branch
          %448 = sbr.rel (%p446) target = $region36
        $region35: #{gpt_forward.1} parent=11 // pred_region
          _
        $region36: #{gpt_forward.1} parent=11 // pred_fallthru
          _
        // Predicated region
        $region37: #{gpt_forward.1} parent=11 // pred_check
          %p449 = pneg %p180
        $region38: #{gpt_forward.1} parent=11 // pred_check_branch
          %451 = sbr.rel (%p449) target = $region40
        $region39: #{gpt_forward.1} parent=11 // pred_region
          _
        $region40: #{gpt_forward.1} parent=11 // pred_fallthru
          _
        // Predicated region
        $region41: #{gpt_forward.1} parent=11 // pred_check
          %p452 = pneg %p201
        $region42: #{gpt_forward.1} parent=11 // pred_check_branch
          %454 = sbr.rel (%p452) target = $region44
        $region43: #{gpt_forward.1} parent=11 // pred_region
          _
        $region44: #{gpt_forward.1} parent=11 // pred_fallthru
          _
        // Predicated region
        $region45: #{gpt_forward.1} parent=11 // pred_check
          %p455 = pneg %p222
        $region46: #{gpt_forward.1} parent=11 // pred_check_branch
          %457 = sbr.rel (%p455) target = $region48
        $region47: #{gpt_forward.1} parent=11 // pred_region
          _
        $region48: #{gpt_forward.1} parent=11 // pred_fallthru
          _
        // Predicated region
        $region49: #{gpt_forward.1} parent=11 // pred_check
          %p458 = pneg %p243
        $region50: #{gpt_forward.1} parent=11 // pred_check_branch
          %460 = sbr.rel (%p458) target = $region52
        $region51: #{gpt_forward.1} parent=11 // pred_region
          _
        $region52: #{gpt_forward.1} parent=11 // pred_fallthru
          _
        // Predicated region
        $region53: #{gpt_forward.1} parent=11 // pred_check
          %p461 = pneg %p264
        $region54: #{gpt_forward.1} parent=11 // pred_check_branch
          %463 = sbr.rel (%p461) target = $region56
        $region55: #{gpt_forward.1} parent=11 // pred_region
          _
        $region56: #{gpt_forward.1} parent=11 // pred_fallthru
          _
        // Predicated region
        $region57: #{gpt_forward.1} parent=11 // pred_check
          %p464 = pneg %p285
        $region58: #{gpt_forward.1} parent=11 // pred_check_branch
          %466 = sbr.rel (%p464) target = $region60
        $region59: #{gpt_forward.1} parent=11 // pred_region
          _
        $region60: #{gpt_forward.1} parent=11 // pred_fallthru
          _
        // Predicated region
        $region61: #{gpt_forward.1} parent=11 // pred_check
          %p467 = pneg %p306
        $region62: #{gpt_forward.1} parent=11 // pred_check_branch
          %469 = sbr.rel (%p467) target = $region64
        $region63: #{gpt_forward.1} parent=11 // pred_region
          _
        $region64: #{gpt_forward.1} parent=11 // pred_fallthru
          _
        // Predicated region
        $region65: #{gpt_forward.1} parent=11 // pred_check
          %p470 = pneg %p327
        $region66: #{gpt_forward.1} parent=11 // pred_check_branch
          %472 = sbr.rel (%p470) target = $region68
        $region67: #{gpt_forward.1} parent=11 // pred_region
          _
        $region68: #{gpt_forward.1} parent=11 // pred_fallthru
          _
        // Predicated region
        $region69: #{gpt_forward.1} parent=11 // pred_check
          %p473 = pneg %p348
        $region70: #{gpt_forward.1} parent=11 // pred_check_branch
          %475 = sbr.rel (%p473) target = $region72
        $region71: #{gpt_forward.1} parent=11 // pred_region
          _
        $region72: #{gpt_forward.1} parent=11 // pred_fallthru
          _
        // Predicated region
        $region73: #{gpt_forward.1} parent=11 // pred_check
          %p476 = pneg %p369
        $region74: #{gpt_forward.1} parent=11 // pred_check_branch
          %478 = sbr.rel (%p476) target = $region76
        $region75: #{gpt_forward.1} parent=11 // pred_region
          _
        $region76: #{gpt_forward.1} parent=11 // pred_fallthru
          _
        // Predicated region
        $region77: #{gpt_forward.1} parent=11 // pred_check
          %p479 = pneg %p390
        $region78: #{gpt_forward.1} parent=11 // pred_check_branch
          %481 = sbr.rel (%p479) target = $region80
        $region79: #{gpt_forward.1} parent=11 // pred_region
          _
        $region80: #{gpt_forward.1} parent=11 // pred_fallthru
          _
      $region12: #{gpt_forward.1} parent=5 // pred_fallthru
        _
      %p482 = scmp.lt.s32.totalorder %s33, 2
      // Predicated region
      $region81: #{gpt_forward.1} parent=5 // pred_check
        %p483 = pneg %p482
      $region82: #{gpt_forward.1} parent=5 // pred_check_branch
        %485 = sbr.rel (%p483) target = $region84
      $region83: #{gpt_forward.1} parent=5 // pred_region
        _
      $region84: #{gpt_forward.1} parent=5 // pred_fallthru
        _
      %p486 = scmp.le.s32.totalorder 1, %s33
      %p487 = scmp.lt.s32.totalorder %s33, 3
      %p488 = pnand %p486, %p487
      %p489 = pneg %p488
      // Predicated region
      $region85: #{gpt_forward.1} parent=5 // pred_check
        _
      $region86: #{gpt_forward.1} parent=5 // pred_check_branch
        %491 = sbr.rel (%p488) target = $region88
      $region87: #{gpt_forward.1} parent=5 // pred_region
        %s492 = ssub.s32 %s33, 1
        %p493 = pneg %p54
        %p494 = pneg %p51
        %p495 = pneg %p75
        %p496 = pneg %p72
        %p497 = pneg %p96
        %p498 = pneg %p93
        %p499 = pneg %p117
        %p500 = pneg %p114
        %p501 = pneg %p138
        %p502 = pneg %p135
        %p503 = pneg %p159
        %p504 = pneg %p156
        %p505 = pneg %p180
        %p506 = pneg %p177
        %p507 = pneg %p201
        %p508 = pneg %p198
        %p509 = pneg %p222
        %p510 = pneg %p219
        %p511 = pneg %p243
        %p512 = pneg %p240
        %p513 = pneg %p264
        %p514 = pneg %p261
        %p515 = pneg %p285
        %p516 = pneg %p282
        %p517 = pneg %p306
        %p518 = pneg %p303
        %p519 = pneg %p327
        %p520 = pneg %p324
        %p521 = pneg %p348
        %p522 = pneg %p345
        %p523 = pneg %p369
        %p524 = pneg %p366
        %p525 = pneg %p390
        %p526 = pneg %p387
        %p527 = pneg %p416
        %p528 = pneg %p413
        %s529 = sand.u32 %s403, 1
        %s530 = scalar_lea.sflag [#allocation6], %s529
        %s531 = sand.u32 %s403, 1
        %s532 = smul.addr %s531, 8
        %s533 = scalar_lea.vmem [#allocation5], %s532
        %s535 = smul.u32 %s38, 128
        %s536 = sld [smem:[#allocation4 + %s535]]
        %s537 = scalar_lea.vmem %s1, %s536
        %v538 = vld [vmem:[%s537] sm:$0x1]
        %vm539 = vcmask 253952
        %540 = vst.msk [vmem:[#allocation2] sm:$0x1] %vm539, %v538
        %s541 = sadd.s32 %s535, 1
        %s542 = sld [smem:[#allocation4 + %s541]]
        %s543 = scalar_lea.vmem %s1, %s542
        %v544 = vld [vmem:[%s543] sm:$0x1]
        %545 = vst.msk [vmem:[#allocation2 + $0x1] sm:$0x1] %vm539, %v544
        %s546 = sadd.s32 %s535, 2
        %s547 = sld [smem:[#allocation4 + %s546]]
        %s548 = scalar_lea.vmem %s1, %s547
        %v549 = vld [vmem:[%s548] sm:$0x1]
        %550 = vst.msk [vmem:[#allocation2 + $0x2] sm:$0x1] %vm539, %v549
        %s551 = sadd.s32 %s535, 3
        %s552 = sld [smem:[#allocation4 + %s551]]
        %s553 = scalar_lea.vmem %s1, %s552
        %v554 = vld [vmem:[%s553] sm:$0x1]
        %555 = vst.msk [vmem:[#allocation2 + $0x3] sm:$0x1] %vm539, %v554
        %s556 = sadd.s32 %s535, 4
        %s557 = sld [smem:[#allocation4 + %s556]]
        %s558 = scalar_lea.vmem %s1, %s557
        %v559 = vld [vmem:[%s558] sm:$0x1]
        %560 = vst.msk [vmem:[#allocation2 + $0x4] sm:$0x1] %vm539, %v559
        %s561 = sadd.s32 %s535, 5
        %s562 = sld [smem:[#allocation4 + %s561]]
        %s563 = scalar_lea.vmem %s1, %s562
        %v564 = vld [vmem:[%s563] sm:$0x1]
        %565 = vst.msk [vmem:[#allocation2 + $0x5] sm:$0x1] %vm539, %v564
        %s566 = sadd.s32 %s535, 6
        %s567 = sld [smem:[#allocation4 + %s566]]
        %s568 = scalar_lea.vmem %s1, %s567
        %v569 = vld [vmem:[%s568] sm:$0x1]
        %570 = vst.msk [vmem:[#allocation2 + $0x6] sm:$0x1] %vm539, %v569
        %s571 = sadd.s32 %s535, 7
        %s572 = sld [smem:[#allocation4 + %s571]]
        %s573 = scalar_lea.vmem %s1, %s572
        %v574 = vld [vmem:[%s573] sm:$0x1]
        %575 = vst.msk [vmem:[#allocation2 + $0x7] sm:$0x1] %vm539, %v574
        %v576 = vld [vmem:[#allocation2] sm:$0xff]
        %v577 = vld [vmem:[%s2] sm:$0xff]
        %v578 = vadd.f32 %v576, %v577
        %v579 = vlaneseq
        %v580 = vshrl.u32 %v579, 7
        %v581 = vlaneseq
        %v582 = vand.u32 %v581, 127
        %vm583 = vcmp.ge.s32.totalorder %v580, %v582
        %v584 = vsel %vm583, 0.0, -1e+30
        %v585 = vld [vmem:[%s3] sm:$0x1]
        %v586 = vld [vmem:[%s4] sm:$0x1]
        %vm587 = vcmask 261120
        %v588 = vsel %vm587, %v578, 0.0
        %589 = vadd.xlane.f32.xlu0 %v588
        %v590 = vpop.xlane.xlu0 %589
        %v591 = vrcp.pop 32.0
        %v592 = vmul.f32 %v590, %v591
        %v593 = vsub.f32 %v578, %v592
        %v594 = vmul.f32 %v593, %v593
        %v595 = vsel %vm587, %v594, 0.0
        %596 = vadd.xlane.f32.xlu0 %v595
        %v597 = vpop.xlane.xlu0 %596
        %v598 = vmul.f32 %v597, %v591
        %v599 = vadd.f32 %v598, 1e-05
        %v600 = vrsqrt.pop %v599
        %v601 = vmul.f32 %v593, %v600
        %v603 = vlaneseq
        %v604 = vshrl.u32 %v603, 7
        %v605 = vsub.s32 0, %v604
        %v606 = vrot.slane %v585, %v605
        %v608 = vmul.f32 %v601, %v606
        %v610 = vlaneseq
        %v611 = vshrl.u32 %v610, 7
        %v612 = vsub.s32 0, %v611
        %v613 = vrot.slane %v586, %v612
        %v615 = vadd.f32 %v608, %v613
        %v616 = vpack.c.bf16 %v615, %v615
        %v617 = vld [vmem:[%s5] sm:$0xf]
        %v618 = vld [vmem:[%s5 + $0x4] sm:$0xf]
        %v619 = vld [vmem:[%s5 + $0x8] sm:$0xf]
        %v620 = vld [vmem:[%s5 + $0xc] sm:$0xf]
        %v621 = vld [vmem:[%s5 + $0x10] sm:$0xf]
        %v622 = vld [vmem:[%s5 + $0x14] sm:$0xf]
        %v623 = vld [vmem:[%s5 + $0x18] sm:$0xf]
        %v624 = vld [vmem:[%s5 + $0x1c] sm:$0xf]
        %v625 = vld [vmem:[%s5 + $0x20] sm:$0xf]
        %v626 = vld [vmem:[%s5 + $0x24] sm:$0xf]
        %v627 = vld [vmem:[%s5 + $0x28] sm:$0xf]
        %v628 = vld [vmem:[%s5 + $0x2c] sm:$0xf]
        %v629 = vld [vmem:[%s5 + $0x30] sm:$0xf]
        %v630 = vld [vmem:[%s5 + $0x34] sm:$0xf]
        %v631 = vld [vmem:[%s5 + $0x38] sm:$0xf]
        %v632 = vld [vmem:[%s5 + $0x3c] sm:$0xf]
        %v633 = vld [vmem:[%s5 + $0x40] sm:$0xf]
        %v634 = vld [vmem:[%s5 + $0x44] sm:$0xf]
        %v635 = vld [vmem:[%s5 + $0x48] sm:$0xf]
        %v636 = vld [vmem:[%s5 + $0x4c] sm:$0xf]
        %v637 = vld [vmem:[%s5 + $0x50] sm:$0xf]
        %v638 = vld [vmem:[%s5 + $0x54] sm:$0xf]
        %v639 = vld [vmem:[%s5 + $0x58] sm:$0xf]
        %v640 = vld [vmem:[%s5 + $0x5c] sm:$0xf]
        %v641 = vld [vmem:[%s5 + $0x60] sm:$0xf]
        %v642 = vld [vmem:[%s5 + $0x64] sm:$0xf]
        %v643 = vld [vmem:[%s5 + $0x68] sm:$0xf]
        %v644 = vld [vmem:[%s5 + $0x6c] sm:$0xf]
        %v645 = vld [vmem:[%s5 + $0x70] sm:$0xf]
        %v646 = vld [vmem:[%s5 + $0x74] sm:$0xf]
        %v647 = vld [vmem:[%s5 + $0x78] sm:$0xf]
        %v648 = vld [vmem:[%s5 + $0x7c] sm:$0xf]
        %v649 = vld [vmem:[%s5 + $0x80] sm:$0xf]
        %v650 = vld [vmem:[%s5 + $0x84] sm:$0xf]
        %v651 = vld [vmem:[%s5 + $0x88] sm:$0xf]
        %v652 = vld [vmem:[%s5 + $0x8c] sm:$0xf]
        %v653 = vld [vmem:[%s5 + $0x90] sm:$0xf]
        %v654 = vld [vmem:[%s5 + $0x94] sm:$0xf]
        %v655 = vld [vmem:[%s5 + $0x98] sm:$0xf]
        %v656 = vld [vmem:[%s5 + $0x9c] sm:$0xf]
        %v657 = vld [vmem:[%s5 + $0xa0] sm:$0xf]
        %v658 = vld [vmem:[%s5 + $0xa4] sm:$0xf]
        %v659 = vld [vmem:[%s5 + $0xa8] sm:$0xf]
        %v660 = vld [vmem:[%s5 + $0xac] sm:$0xf]
        %v661 = vld [vmem:[%s5 + $0xb0] sm:$0xf]
        %v662 = vld [vmem:[%s5 + $0xb4] sm:$0xf]
        %v663 = vld [vmem:[%s5 + $0xb8] sm:$0xf]
        %v664 = vld [vmem:[%s5 + $0xbc] sm:$0xf]
        %v669 = vunpack.c.l.b16 %v617
        %v670 = vunpack.c.l.b16 %v618
        %v671 = vunpack.c.l.b16 %v619
        %v672 = vunpack.c.l.b16 %v620
        %v673 = vpack.c.b16 %v670, %v669
        %v674 = vpack.c.b16 %v672, %v671
        %v678 = vsel %vm587, %v616, 0
        %680 = vmatprep.subr.bf16.mxu0 0
        %681 = vmatpush1.bf16.msra.mxu0 %v673
        %682 = vmatprep.subr.bf16.mxu0 0
        %683 = vmatpush1.bf16.msra.mxu0 %v674
        %684 = vmatprep.subr.bf16.mxu0 0
        %685 = vmatpush1.bf16.msra.mxu0 0
        %686 = vmatprep.subr.bf16.mxu0 0
        %687 = vmatpush1.bf16.msra.mxu0 0
        %688 = vmatprep.subr.bf16.mxu0 0
        %689 = vmatpush1.bf16.msra.mxu0 0
        %690 = vmatprep.subr.bf16.mxu0 0
        %691 = vmatpush1.bf16.msra.mxu0 0
        %692 = vmatprep.subr.bf16.mxu0 0
        %693 = vmatpush1.bf16.msra.mxu0 0
        %694 = vmatprep.subr.bf16.mxu0 0
        %695 = vmatpush1.bf16.msra.mxu0 0
        %696 = vmatprep.subr.bf16.mxu0 0
        %697 = vmatpush1.bf16.msra.mxu0 0
        %698 = vmatprep.subr.bf16.mxu0 0
        %699 = vmatpush1.bf16.msra.mxu0 0
        %700 = vmatprep.subr.bf16.mxu0 0
        %701 = vmatpush1.bf16.msra.mxu0 0
        %702 = vmatprep.subr.bf16.mxu0 0
        %703 = vmatpush1.bf16.msra.mxu0 0
        %704 = vmatprep.subr.bf16.mxu0 0
        %705 = vmatpush1.bf16.msra.mxu0 0
        %706 = vmatprep.subr.bf16.mxu0 0
        %707 = vmatpush1.bf16.msra.mxu0 0
        %708 = vmatprep.subr.bf16.mxu0 0
        %709 = vmatpush1.bf16.msra.mxu0 0
        %710 = vmatprep.subr.bf16.mxu0 0
        %711 = vmatpush1.bf16.msra.mxu0 0
        %712 = vmatprep.mubr.bf16.mxu0 0
        %713 = vmatmul.mubr.bf16.gmra.mrb[0].mxu0 %v678
        %v714 = vpop.f32.mrb[0].mxu0
        %v715 = vadd.f32 0.0, %v714
        %v716 = vpop.f32.mrb[0].mxu0
        %v717 = vpop.f32.mrb[0].mxu0
        %v718 = vpop.f32.mrb[0].mxu0
        %719 = vdwg.mxu0
        %v724 = vunpack.c.l.b16 %v621
        %v725 = vunpack.c.l.b16 %v622
        %v726 = vunpack.c.l.b16 %v623
        %v727 = vunpack.c.l.b16 %v624
        %v728 = vpack.c.b16 %v725, %v724
        %v729 = vpack.c.b16 %v727, %v726
        %732 = vmatprep.subr.bf16.mxu0 0
        %733 = vmatpush1.bf16.msra.mxu0 %v728
        %734 = vmatprep.subr.bf16.mxu0 0
        %735 = vmatpush1.bf16.msra.mxu0 %v729
        %736 = vmatprep.subr.bf16.mxu0 0
        %737 = vmatpush1.bf16.msra.mxu0 0
        %738 = vmatprep.subr.bf16.mxu0 0
        %739 = vmatpush1.bf16.msra.mxu0 0
        %740 = vmatprep.subr.bf16.mxu0 0
        %741 = vmatpush1.bf16.msra.mxu0 0
        %742 = vmatprep.subr.bf16.mxu0 0
        %743 = vmatpush1.bf16.msra.mxu0 0
        %744 = vmatprep.subr.bf16.mxu0 0
        %745 = vmatpush1.bf16.msra.mxu0 0
        %746 = vmatprep.subr.bf16.mxu0 0
        %747 = vmatpush1.bf16.msra.mxu0 0
        %748 = vmatprep.subr.bf16.mxu0 0
        %749 = vmatpush1.bf16.msra.mxu0 0
        %750 = vmatprep.subr.bf16.mxu0 0
        %751 = vmatpush1.bf16.msra.mxu0 0
        %752 = vmatprep.subr.bf16.mxu0 0
        %753 = vmatpush1.bf16.msra.mxu0 0
        %754 = vmatprep.subr.bf16.mxu0 0
        %755 = vmatpush1.bf16.msra.mxu0 0
        %756 = vmatprep.subr.bf16.mxu0 0
        %757 = vmatpush1.bf16.msra.mxu0 0
        %758 = vmatprep.subr.bf16.mxu0 0
        %759 = vmatpush1.bf16.msra.mxu0 0
        %760 = vmatprep.subr.bf16.mxu0 0
        %761 = vmatpush1.bf16.msra.mxu0 0
        %762 = vmatprep.subr.bf16.mxu0 0
        %763 = vmatpush1.bf16.msra.mxu0 0
        %764 = vmatprep.mubr.bf16.mxu0 0
        %765 = vmatmul.mubr.bf16.gmra.mrb[0].mxu0 %v678
        %v766 = vpop.f32.mrb[0].mxu0
        %v767 = vadd.f32 0.0, %v766
        %v768 = vpop.f32.mrb[0].mxu0
        %v769 = vpop.f32.mrb[0].mxu0
        %v770 = vpop.f32.mrb[0].mxu0
        %771 = vdwg.mxu0
        %v776 = vunpack.c.l.b16 %v625
        %v777 = vunpack.c.l.b16 %v626
        %v778 = vunpack.c.l.b16 %v627
        %v779 = vunpack.c.l.b16 %v628
        %v780 = vpack.c.b16 %v777, %v776
        %v781 = vpack.c.b16 %v779, %v778
        %784 = vmatprep.subr.bf16.mxu0 0
        %785 = vmatpush1.bf16.msra.mxu0 %v780
        %786 = vmatprep.subr.bf16.mxu0 0
        %787 = vmatpush1.bf16.msra.mxu0 %v781
        %788 = vmatprep.subr.bf16.mxu0 0
        %789 = vmatpush1.bf16.msra.mxu0 0
        %790 = vmatprep.subr.bf16.mxu0 0
        %791 = vmatpush1.bf16.msra.mxu0 0
        %792 = vmatprep.subr.bf16.mxu0 0
        %793 = vmatpush1.bf16.msra.mxu0 0
        %794 = vmatprep.subr.bf16.mxu0 0
        %795 = vmatpush1.bf16.msra.mxu0 0
        %796 = vmatprep.subr.bf16.mxu0 0
        %797 = vmatpush1.bf16.msra.mxu0 0
        %798 = vmatprep.subr.bf16.mxu0 0
        %799 = vmatpush1.bf16.msra.mxu0 0
        %800 = vmatprep.subr.bf16.mxu0 0
        %801 = vmatpush1.bf16.msra.mxu0 0
        %802 = vmatprep.subr.bf16.mxu0 0
        %803 = vmatpush1.bf16.msra.mxu0 0
        %804 = vmatprep.subr.bf16.mxu0 0
        %805 = vmatpush1.bf16.msra.mxu0 0
        %806 = vmatprep.subr.bf16.mxu0 0
        %807 = vmatpush1.bf16.msra.mxu0 0
        %808 = vmatprep.subr.bf16.mxu0 0
        %809 = vmatpush1.bf16.msra.mxu0 0
        %810 = vmatprep.subr.bf16.mxu0 0
        %811 = vmatpush1.bf16.msra.mxu0 0
        %812 = vmatprep.subr.bf16.mxu0 0
        %813 = vmatpush1.bf16.msra.mxu0 0
        %814 = vmatprep.subr.bf16.mxu0 0
        %815 = vmatpush1.bf16.msra.mxu0 0
        %816 = vmatprep.mubr.bf16.mxu0 0
        %817 = vmatmul.mubr.bf16.gmra.mrb[0].mxu0 %v678
        %v818 = vpop.f32.mrb[0].mxu0
        %v819 = vadd.f32 0.0, %v818
        %v820 = vpop.f32.mrb[0].mxu0
        %v821 = vpop.f32.mrb[0].mxu0
        %v822 = vpop.f32.mrb[0].mxu0
        %823 = vdwg.mxu0
        %v828 = vunpack.c.l.b16 %v629
        %v829 = vunpack.c.l.b16 %v630
        %v830 = vunpack.c.l.b16 %v631
        %v831 = vunpack.c.l.b16 %v632
        %v832 = vpack.c.b16 %v829, %v828
        %v833 = vpack.c.b16 %v831, %v830
        %836 = vmatprep.subr.bf16.mxu0 0
        %837 = vmatpush1.bf16.msra.mxu0 %v832
        %838 = vmatprep.subr.bf16.mxu0 0
        %839 = vmatpush1.bf16.msra.mxu0 %v833
        %840 = vmatprep.subr.bf16.mxu0 0
        %841 = vmatpush1.bf16.msra.mxu0 0
        %842 = vmatprep.subr.bf16.mxu0 0
        %843 = vmatpush1.bf16.msra.mxu0 0
        %844 = vmatprep.subr.bf16.mxu0 0
        %845 = vmatpush1.bf16.msra.mxu0 0
        %846 = vmatprep.subr.bf16.mxu0 0
        %847 = vmatpush1.bf16.msra.mxu0 0
        %848 = vmatprep.subr.bf16.mxu0 0
        %849 = vmatpush1.bf16.msra.mxu0 0
        %850 = vmatprep.subr.bf16.mxu0 0
        %851 = vmatpush1.bf16.msra.mxu0 0
        %852 = vmatprep.subr.bf16.mxu0 0
        %853 = vmatpush1.bf16.msra.mxu0 0
        %854 = vmatprep.subr.bf16.mxu0 0
        %855 = vmatpush1.bf16.msra.mxu0 0
        %856 = vmatprep.subr.bf16.mxu0 0
        %857 = vmatpush1.bf16.msra.mxu0 0
        %858 = vmatprep.subr.bf16.mxu0 0
        %859 = vmatpush1.bf16.msra.mxu0 0
        %860 = vmatprep.subr.bf16.mxu0 0
        %861 = vmatpush1.bf16.msra.mxu0 0
        %862 = vmatprep.subr.bf16.mxu0 0
        %863 = vmatpush1.bf16.msra.mxu0 0
        %864 = vmatprep.subr.bf16.mxu0 0
        %865 = vmatpush1.bf16.msra.mxu0 0
        %866 = vmatprep.subr.bf16.mxu0 0
        %867 = vmatpush1.bf16.msra.mxu0 0
        %868 = vmatprep.mubr.bf16.mxu0 0
        %869 = vmatmul.mubr.bf16.gmra.mrb[0].mxu0 %v678
        %v870 = vpop.f32.mrb[0].mxu0
        %v871 = vadd.f32 0.0, %v870
        %v872 = vpop.f32.mrb[0].mxu0
        %v873 = vpop.f32.mrb[0].mxu0
        %v874 = vpop.f32.mrb[0].mxu0
        %875 = vdwg.mxu0
        %v880 = vunpack.c.l.b16 %v633
        %v881 = vunpack.c.l.b16 %v634
        %v882 = vunpack.c.l.b16 %v635
        %v883 = vunpack.c.l.b16 %v636
        %v884 = vpack.c.b16 %v881, %v880
        %v885 = vpack.c.b16 %v883, %v882
        %888 = vmatprep.subr.bf16.mxu0 0
        %889 = vmatpush1.bf16.msra.mxu0 %v884
        %890 = vmatprep.subr.bf16.mxu0 0
        %891 = vmatpush1.bf16.msra.mxu0 %v885
        %892 = vmatprep.subr.bf16.mxu0 0
        %893 = vmatpush1.bf16.msra.mxu0 0
        %894 = vmatprep.subr.bf16.mxu0 0
        %895 = vmatpush1.bf16.msra.mxu0 0
        %896 = vmatprep.subr.bf16.mxu0 0
        %897 = vmatpush1.bf16.msra.mxu0 0
        %898 = vmatprep.subr.bf16.mxu0 0
        %899 = vmatpush1.bf16.msra.mxu0 0
        %900 = vmatprep.subr.bf16.mxu0 0
        %901 = vmatpush1.bf16.msra.mxu0 0
        %902 = vmatprep.subr.bf16.mxu0 0
        %903 = vmatpush1.bf16.msra.mxu0 0
        %904 = vmatprep.subr.bf16.mxu0 0
        %905 = vmatpush1.bf16.msra.mxu0 0
        %906 = vmatprep.subr.bf16.mxu0 0
        %907 = vmatpush1.bf16.msra.mxu0 0
        %908 = vmatprep.subr.bf16.mxu0 0
        %909 = vmatpush1.bf16.msra.mxu0 0
        %910 = vmatprep.subr.bf16.mxu0 0
        %911 = vmatpush1.bf16.msra.mxu0 0
        %912 = vmatprep.subr.bf16.mxu0 0
        %913 = vmatpush1.bf16.msra.mxu0 0
        %914 = vmatprep.subr.bf16.mxu0 0
        %915 = vmatpush1.bf16.msra.mxu0 0
        %916 = vmatprep.subr.bf16.mxu0 0
        %917 = vmatpush1.bf16.msra.mxu0 0
        %918 = vmatprep.subr.bf16.mxu0 0
        %919 = vmatpush1.bf16.msra.mxu0 0
        %920 = vmatprep.mubr.bf16.mxu0 0
        %921 = vmatmul.mubr.bf16.gmra.mrb[0].mxu0 %v678
        %v922 = vpop.f32.mrb[0].mxu0
        %v923 = vadd.f32 0.0, %v922
        %v924 = vpop.f32.mrb[0].mxu0
        %v925 = vpop.f32.mrb[0].mxu0
        %v926 = vpop.f32.mrb[0].mxu0
        %927 = vdwg.mxu0
        %v932 = vunpack.c.l.b16 %v637
        %v933 = vunpack.c.l.b16 %v638
        %v934 = vunpack.c.l.b16 %v639
        %v935 = vunpack.c.l.b16 %v640
        %v936 = vpack.c.b16 %v933, %v932
        %v937 = vpack.c.b16 %v935, %v934
        %940 = vmatprep.subr.bf16.mxu0 0
        %941 = vmatpush1.bf16.msra.mxu0 %v936
        %942 = vmatprep.subr.bf16.mxu0 0
        %943 = vmatpush1.bf16.msra.mxu0 %v937
        %944 = vmatprep.subr.bf16.mxu0 0
        %945 = vmatpush1.bf16.msra.mxu0 0
        %946 = vmatprep.subr.bf16.mxu0 0
        %947 = vmatpush1.bf16.msra.mxu0 0
        %948 = vmatprep.subr.bf16.mxu0 0
        %949 = vmatpush1.bf16.msra.mxu0 0
        %950 = vmatprep.subr.bf16.mxu0 0
        %951 = vmatpush1.bf16.msra.mxu0 0
        %952 = vmatprep.subr.bf16.mxu0 0
        %953 = vmatpush1.bf16.msra.mxu0 0
        %954 = vmatprep.subr.bf16.mxu0 0
        %955 = vmatpush1.bf16.msra.mxu0 0
        %956 = vmatprep.subr.bf16.mxu0 0
        %957 = vmatpush1.bf16.msra.mxu0 0
        %958 = vmatprep.subr.bf16.mxu0 0
        %959 = vmatpush1.bf16.msra.mxu0 0
        %960 = vmatprep.subr.bf16.mxu0 0
        %961 = vmatpush1.bf16.msra.mxu0 0
        %962 = vmatprep.subr.bf16.mxu0 0
        %963 = vmatpush1.bf16.msra.mxu0 0
        %964 = vmatprep.subr.bf16.mxu0 0
        %965 = vmatpush1.bf16.msra.mxu0 0
        %966 = vmatprep.subr.bf16.mxu0 0
        %967 = vmatpush1.bf16.msra.mxu0 0
        %968 = vmatprep.subr.bf16.mxu0 0
        %969 = vmatpush1.bf16.msra.mxu0 0
        %970 = vmatprep.subr.bf16.mxu0 0
        %971 = vmatpush1.bf16.msra.mxu0 0
        %972 = vmatprep.mubr.bf16.mxu0 0
        %973 = vmatmul.mubr.bf16.gmra.mrb[0].mxu0 %v678
        %v974 = vpop.f32.mrb[0].mxu0
        %v975 = vadd.f32 0.0, %v974
        %v976 = vpop.f32.mrb[0].mxu0
        %v977 = vpop.f32.mrb[0].mxu0
        %v978 = vpop.f32.mrb[0].mxu0
        %979 = vdwg.mxu0
        %v984 = vunpack.c.l.b16 %v641
        %v985 = vunpack.c.l.b16 %v642
        %v986 = vunpack.c.l.b16 %v643
        %v987 = vunpack.c.l.b16 %v644
        %v988 = vpack.c.b16 %v985, %v984
        %v989 = vpack.c.b16 %v987, %v986
        %992 = vmatprep.subr.bf16.mxu0 0
        %993 = vmatpush1.bf16.msra.mxu0 %v988
        %994 = vmatprep.subr.bf16.mxu0 0
        %995 = vmatpush1.bf16.msra.mxu0 %v989
        %996 = vmatprep.subr.bf16.mxu0 0
        %997 = vmatpush1.bf16.msra.mxu0 0
        %998 = vmatprep.subr.bf16.mxu0 0
        %999 = vmatpush1.bf16.msra.mxu0 0
        %1000 = vmatprep.subr.bf16.mxu0 0
        %1001 = vmatpush1.bf16.msra.mxu0 0
        %1002 = vmatprep.subr.bf16.mxu0 0
        %1003 = vmatpush1.bf16.msra.mxu0 0
        %1004 = vmatprep.subr.bf16.mxu0 0
        %1005 = vmatpush1.bf16.msra.mxu0 0
        %1006 = vmatprep.subr.bf16.mxu0 0
        %1007 = vmatpush1.bf16.msra.mxu0 0
        %1008 = vmatprep.subr.bf16.mxu0 0
        %1009 = vmatpush1.bf16.msra.mxu0 0
        %1010 = vmatprep.subr.bf16.mxu0 0
        %1011 = vmatpush1.bf16.msra.mxu0 0
        %1012 = vmatprep.subr.bf16.mxu0 0
        %1013 = vmatpush1.bf16.msra.mxu0 0
        %1014 = vmatprep.subr.bf16.mxu0 0
        %1015 = vmatpush1.bf16.msra.mxu0 0
        %1016 = vmatprep.subr.bf16.mxu0 0
        %1017 = vmatpush1.bf16.msra.mxu0 0
        %1018 = vmatprep.subr.bf16.mxu0 0
        %1019 = vmatpush1.bf16.msra.mxu0 0
        %1020 = vmatprep.subr.bf16.mxu0 0
        %1021 = vmatpush1.bf16.msra.mxu0 0
        %1022 = vmatprep.subr.bf16.mxu0 0
        %1023 = vmatpush1.bf16.msra.mxu0 0
        %1024 = vmatprep.mubr.bf16.mxu0 0
        %1025 = vmatmul.mubr.bf16.gmra.mrb[0].mxu0 %v678
        %v1026 = vpop.f32.mrb[0].mxu0
        %v1027 = vadd.f32 0.0, %v1026
        %v1028 = vpop.f32.mrb[0].mxu0
        %v1029 = vpop.f32.mrb[0].mxu0
        %v1030 = vpop.f32.mrb[0].mxu0
        %1031 = vdwg.mxu0
        %v1036 = vunpack.c.l.b16 %v645
        %v1037 = vunpack.c.l.b16 %v646
        %v1038 = vunpack.c.l.b16 %v647
        %v1039 = vunpack.c.l.b16 %v648
        %v1040 = vpack.c.b16 %v1037, %v1036
        %v1041 = vpack.c.b16 %v1039, %v1038
        %1044 = vmatprep.subr.bf16.mxu0 0
        %1045 = vmatpush1.bf16.msra.mxu0 %v1040
        %1046 = vmatprep.subr.bf16.mxu0 0
        %1047 = vmatpush1.bf16.msra.mxu0 %v1041
        %1048 = vmatprep.subr.bf16.mxu0 0
        %1049 = vmatpush1.bf16.msra.mxu0 0
        %1050 = vmatprep.subr.bf16.mxu0 0
        %1051 = vmatpush1.bf16.msra.mxu0 0
        %1052 = vmatprep.subr.bf16.mxu0 0
        %1053 = vmatpush1.bf16.msra.mxu0 0
        %1054 = vmatprep.subr.bf16.mxu0 0
        %1055 = vmatpush1.bf16.msra.mxu0 0
        %1056 = vmatprep.subr.bf16.mxu0 0
        %1057 = vmatpush1.bf16.msra.mxu0 0
        %1058 = vmatprep.subr.bf16.mxu0 0
        %1059 = vmatpush1.bf16.msra.mxu0 0
        %1060 = vmatprep.subr.bf16.mxu0 0
        %1061 = vmatpush1.bf16.msra.mxu0 0
        %1062 = vmatprep.subr.bf16.mxu0 0
        %1063 = vmatpush1.bf16.msra.mxu0 0
        %1064 = vmatprep.subr.bf16.mxu0 0
        %1065 = vmatpush1.bf16.msra.mxu0 0
        %1066 = vmatprep.subr.bf16.mxu0 0
        %1067 = vmatpush1.bf16.msra.mxu0 0
        %1068 = vmatprep.subr.bf16.mxu0 0
        %1069 = vmatpush1.bf16.msra.mxu0 0
        %1070 = vmatprep.subr.bf16.mxu0 0
        %1071 = vmatpush1.bf16.msra.mxu0 0
        %1072 = vmatprep.subr.bf16.mxu0 0
        %1073 = vmatpush1.bf16.msra.mxu0 0
        %1074 = vmatprep.subr.bf16.mxu0 0
        %1075 = vmatpush1.bf16.msra.mxu0 0
        %1076 = vmatprep.mubr.bf16.mxu0 0
        %1077 = vmatmul.mubr.bf16.gmra.mrb[0].mxu0 %v678
        %v1078 = vpop.f32.mrb[0].mxu0
        %v1079 = vadd.f32 0.0, %v1078
        %v1080 = vpop.f32.mrb[0].mxu0
        %v1081 = vpop.f32.mrb[0].mxu0
        %v1082 = vpop.f32.mrb[0].mxu0
        %1083 = vdwg.mxu0
        %v1088 = vunpack.c.l.b16 %v649
        %v1089 = vunpack.c.l.b16 %v650
        %v1090 = vunpack.c.l.b16 %v651
        %v1091 = vunpack.c.l.b16 %v652
        %v1092 = vpack.c.b16 %v1089, %v1088
        %v1093 = vpack.c.b16 %v1091, %v1090
        %1096 = vmatprep.subr.bf16.mxu0 0
        %1097 = vmatpush1.bf16.msra.mxu0 %v1092
        %1098 = vmatprep.subr.bf16.mxu0 0
        %1099 = vmatpush1.bf16.msra.mxu0 %v1093
        %1100 = vmatprep.subr.bf16.mxu0 0
        %1101 = vmatpush1.bf16.msra.mxu0 0
        %1102 = vmatprep.subr.bf16.mxu0 0
        %1103 = vmatpush1.bf16.msra.mxu0 0
        %1104 = vmatprep.subr.bf16.mxu0 0
        %1105 = vmatpush1.bf16.msra.mxu0 0
        %1106 = vmatprep.subr.bf16.mxu0 0
        %1107 = vmatpush1.bf16.msra.mxu0 0
        %1108 = vmatprep.subr.bf16.mxu0 0
        %1109 = vmatpush1.bf16.msra.mxu0 0
        %1110 = vmatprep.subr.bf16.mxu0 0
        %1111 = vmatpush1.bf16.msra.mxu0 0
        %1112 = vmatprep.subr.bf16.mxu0 0
        %1113 = vmatpush1.bf16.msra.mxu0 0
        %1114 = vmatprep.subr.bf16.mxu0 0
        %1115 = vmatpush1.bf16.msra.mxu0 0
        %1116 = vmatprep.subr.bf16.mxu0 0
        %1117 = vmatpush1.bf16.msra.mxu0 0
        %1118 = vmatprep.subr.bf16.mxu0 0
        %1119 = vmatpush1.bf16.msra.mxu0 0
        %1120 = vmatprep.subr.bf16.mxu0 0
        %1121 = vmatpush1.bf16.msra.mxu0 0
        %1122 = vmatprep.subr.bf16.mxu0 0
        %1123 = vmatpush1.bf16.msra.mxu0 0
        %1124 = vmatprep.subr.bf16.mxu0 0
        %1125 = vmatpush1.bf16.msra.mxu0 0
        %1126 = vmatprep.subr.bf16.mxu0 0
        %1127 = vmatpush1.bf16.msra.mxu0 0
        %1128 = vmatprep.mubr.bf16.mxu0 0
        %1129 = vmatmul.mubr.bf16.gmra.mrb[0].mxu0 %v678
        %v1130 = vpop.f32.mrb[0].mxu0
        %v1131 = vadd.f32 0.0, %v1130
        %v1132 = vpop.f32.mrb[0].mxu0
        %v1133 = vpop.f32.mrb[0].mxu0
        %v1134 = vpop.f32.mrb[0].mxu0
        %1135 = vdwg.mxu0
        %v1140 = vunpack.c.l.b16 %v653
        %v1141 = vunpack.c.l.b16 %v654
        %v1142 = vunpack.c.l.b16 %v655
        %v1143 = vunpack.c.l.b16 %v656
        %v1144 = vpack.c.b16 %v1141, %v1140
        %v1145 = vpack.c.b16 %v1143, %v1142
        %1148 = vmatprep.subr.bf16.mxu0 0
        %1149 = vmatpush1.bf16.msra.mxu0 %v1144
        %1150 = vmatprep.subr.bf16.mxu0 0
        %1151 = vmatpush1.bf16.msra.mxu0 %v1145
        %1152 = vmatprep.subr.bf16.mxu0 0
        %1153 = vmatpush1.bf16.msra.mxu0 0
        %1154 = vmatprep.subr.bf16.mxu0 0
        %1155 = vmatpush1.bf16.msra.mxu0 0
        %1156 = vmatprep.subr.bf16.mxu0 0
        %1157 = vmatpush1.bf16.msra.mxu0 0
        %1158 = vmatprep.subr.bf16.mxu0 0
        %1159 = vmatpush1.bf16.msra.mxu0 0
        %1160 = vmatprep.subr.bf16.mxu0 0
        %1161 = vmatpush1.bf16.msra.mxu0 0
        %1162 = vmatprep.subr.bf16.mxu0 0
        %1163 = vmatpush1.bf16.msra.mxu0 0
        %1164 = vmatprep.subr.bf16.mxu0 0
        %1165 = vmatpush1.bf16.msra.mxu0 0
        %1166 = vmatprep.subr.bf16.mxu0 0
        %1167 = vmatpush1.bf16.msra.mxu0 0
        %1168 = vmatprep.subr.bf16.mxu0 0
        %1169 = vmatpush1.bf16.msra.mxu0 0
        %1170 = vmatprep.subr.bf16.mxu0 0
        %1171 = vmatpush1.bf16.msra.mxu0 0
        %1172 = vmatprep.subr.bf16.mxu0 0
        %1173 = vmatpush1.bf16.msra.mxu0 0
        %1174 = vmatprep.subr.bf16.mxu0 0
        %1175 = vmatpush1.bf16.msra.mxu0 0
        %1176 = vmatprep.subr.bf16.mxu0 0
        %1177 = vmatpush1.bf16.msra.mxu0 0
        %1178 = vmatprep.subr.bf16.mxu0 0
        %1179 = vmatpush1.bf16.msra.mxu0 0
        %1180 = vmatprep.mubr.bf16.mxu0 0
        %1181 = vmatmul.mubr.bf16.gmra.mrb[0].mxu0 %v678
        %v1182 = vpop.f32.mrb[0].mxu0
        %v1183 = vadd.f32 0.0, %v1182
        %v1184 = vpop.f32.mrb[0].mxu0
        %v1185 = vpop.f32.mrb[0].mxu0
        %v1186 = vpop.f32.mrb[0].mxu0
        %1187 = vdwg.mxu0
        %v1192 = vunpack.c.l.b16 %v657
        %v1193 = vunpack.c.l.b16 %v658
        %v1194 = vunpack.c.l.b16 %v659
        %v1195 = vunpack.c.l.b16 %v660
        %v1196 = vpack.c.b16 %v1193, %v1192
        %v1197 = vpack.c.b16 %v1195, %v1194
        %1200 = vmatprep.subr.bf16.mxu0 0
        %1201 = vmatpush1.bf16.msra.mxu0 %v1196
        %1202 = vmatprep.subr.bf16.mxu0 0
        %1203 = vmatpush1.bf16.msra.mxu0 %v1197
        %1204 = vmatprep.subr.bf16.mxu0 0
        %1205 = vmatpush1.bf16.msra.mxu0 0
        %1206 = vmatprep.subr.bf16.mxu0 0
        %1207 = vmatpush1.bf16.msra.mxu0 0
        %1208 = vmatprep.subr.bf16.mxu0 0
        %1209 = vmatpush1.bf16.msra.mxu0 0
        %1210 = vmatprep.subr.bf16.mxu0 0
        %1211 = vmatpush1.bf16.msra.mxu0 0
        %1212 = vmatprep.subr.bf16.mxu0 0
        %1213 = vmatpush1.bf16.msra.mxu0 0
        %1214 = vmatprep.subr.bf16.mxu0 0
        %1215 = vmatpush1.bf16.msra.mxu0 0
        %1216 = vmatprep.subr.bf16.mxu0 0
        %1217 = vmatpush1.bf16.msra.mxu0 0
        %1218 = vmatprep.subr.bf16.mxu0 0
        %1219 = vmatpush1.bf16.msra.mxu0 0
        %1220 = vmatprep.subr.bf16.mxu0 0
        %1221 = vmatpush1.bf16.msra.mxu0 0
        %1222 = vmatprep.subr.bf16.mxu0 0
        %1223 = vmatpush1.bf16.msra.mxu0 0
        %1224 = vmatprep.subr.bf16.mxu0 0
        %1225 = vmatpush1.bf16.msra.mxu0 0
        %1226 = vmatprep.subr.bf16.mxu0 0
        %1227 = vmatpush1.bf16.msra.mxu0 0
        %1228 = vmatprep.subr.bf16.mxu0 0
        %1229 = vmatpush1.bf16.msra.mxu0 0
        %1230 = vmatprep.subr.bf16.mxu0 0
        %1231 = vmatpush1.bf16.msra.mxu0 0
        %1232 = vmatprep.mubr.bf16.mxu0 0
        %1233 = vmatmul.mubr.bf16.gmra.mrb[0].mxu0 %v678
        %v1234 = vpop.f32.mrb[0].mxu0
        %v1235 = vadd.f32 0.0, %v1234
        %v1236 = vpop.f32.mrb[0].mxu0
        %v1237 = vpop.f32.mrb[0].mxu0
        %v1238 = vpop.f32.mrb[0].mxu0
        %1239 = vdwg.mxu0
        %v1244 = vunpack.c.l.b16 %v661
        %v1245 = vunpack.c.l.b16 %v662
        %v1246 = vunpack.c.l.b16 %v663
        %v1247 = vunpack.c.l.b16 %v664
        %v1248 = vpack.c.b16 %v1245, %v1244
        %v1249 = vpack.c.b16 %v1247, %v1246
        %1252 = vmatprep.subr.bf16.mxu0 0
        %1253 = vmatpush1.bf16.msra.mxu0 %v1248
        %1254 = vmatprep.subr.bf16.mxu0 0
        %1255 = vmatpush1.bf16.msra.mxu0 %v1249
        %1256 = vmatprep.subr.bf16.mxu0 0
        %1257 = vmatpush1.bf16.msra.mxu0 0
        %1258 = vmatprep.subr.bf16.mxu0 0
        %1259 = vmatpush1.bf16.msra.mxu0 0
        %1260 = vmatprep.subr.bf16.mxu0 0
        %1261 = vmatpush1.bf16.msra.mxu0 0
        %1262 = vmatprep.subr.bf16.mxu0 0
        %1263 = vmatpush1.bf16.msra.mxu0 0
        %1264 = vmatprep.subr.bf16.mxu0 0
        %1265 = vmatpush1.bf16.msra.mxu0 0
        %1266 = vmatprep.subr.bf16.mxu0 0
        %1267 = vmatpush1.bf16.msra.mxu0 0
        %1268 = vmatprep.subr.bf16.mxu0 0
        %1269 = vmatpush1.bf16.msra.mxu0 0
        %1270 = vmatprep.subr.bf16.mxu0 0
        %1271 = vmatpush1.bf16.msra.mxu0 0
        %1272 = vmatprep.subr.bf16.mxu0 0
        %1273 = vmatpush1.bf16.msra.mxu0 0
        %1274 = vmatprep.subr.bf16.mxu0 0
        %1275 = vmatpush1.bf16.msra.mxu0 0
        %1276 = vmatprep.subr.bf16.mxu0 0
        %1277 = vmatpush1.bf16.msra.mxu0 0
        %1278 = vmatprep.subr.bf16.mxu0 0
        %1279 = vmatpush1.bf16.msra.mxu0 0
        %1280 = vmatprep.subr.bf16.mxu0 0
        %1281 = vmatpush1.bf16.msra.mxu0 0
        %1282 = vmatprep.subr.bf16.mxu0 0
        %1283 = vmatpush1.bf16.msra.mxu0 0
        %1284 = vmatprep.mubr.bf16.mxu0 0
        %1285 = vmatmul.mubr.bf16.gmra.mrb[0].mxu0 %v678
        %v1286 = vpop.f32.mrb[0].mxu0
        %v1287 = vadd.f32 0.0, %v1286
        %v1288 = vpop.f32.mrb[0].mxu0
        %v1289 = vpop.f32.mrb[0].mxu0
        %v1290 = vpop.f32.mrb[0].mxu0
        %1291 = vdwg.mxu0
        %v1292 = vpack.c.bf16 %v715, %v715
        %v1293 = vpack.c.bf16 %v767, %v767
        %v1294 = vpack.c.bf16 %v819, %v819
        %v1295 = vpack.c.bf16 %v871, %v871
        %v1296 = vpack.c.bf16 %v923, %v923
        %v1297 = vpack.c.bf16 %v975, %v975
        %v1298 = vpack.c.bf16 %v1027, %v1027
        %v1299 = vpack.c.bf16 %v1079, %v1079
        %v1300 = vpack.c.bf16 %v1131, %v1131
        %v1301 = vpack.c.bf16 %v1183, %v1183
        %v1302 = vpack.c.bf16 %v1235, %v1235
        %v1303 = vpack.c.bf16 %v1287, %v1287
        %vm1304 = vcmask 64512
        %v1306 = vsel %vm1304, %v1292, 0
        %v1309 = vsel %vm1304, %v1296, 0
        %1311 = vmatprep.subr.bf16.mxu0 0
        %1312 = vmatpush1.bf16.xpose.msra.mxu0 %v1309
        %1313 = vmatprep.subr.bf16.mxu0 0
        %1314 = vmatpush1.bf16.xpose.msra.mxu0 0
        %1315 = vmatprep.subr.bf16.mxu0 0
        %1316 = vmatpush1.bf16.xpose.msra.mxu0 0
        %1317 = vmatprep.subr.bf16.mxu0 0
        %1318 = vmatpush1.bf16.xpose.msra.mxu0 0
        %1319 = vmatprep.subr.bf16.mxu0 0
        %1320 = vmatpush1.bf16.xpose.msra.mxu0 0
        %1321 = vmatprep.subr.bf16.mxu0 0
        %1322 = vmatpush1.bf16.xpose.msra.mxu0 0
        %1323 = vmatprep.subr.bf16.mxu0 0
        %1324 = vmatpush1.bf16.xpose.msra.mxu0 0
        %1325 = vmatprep.subr.bf16.mxu0 0
        %1326 = vmatpush1.bf16.xpose.msra.mxu0 0
        %1327 = vmatprep.subr.bf16.mxu0 0
        %1328 = vmatpush1.bf16.xpose.msra.mxu0 0
        %1329 = vmatprep.subr.bf16.mxu0 0
        %1330 = vmatpush1.bf16.xpose.msra.mxu0 0
        %1331 = vmatprep.subr.bf16.mxu0 0
        %1332 = vmatpush1.bf16.xpose.msra.mxu0 0
        %1333 = vmatprep.subr.bf16.mxu0 0
        %1334 = vmatpush1.bf16.xpose.msra.mxu0 0
        %1335 = vmatprep.subr.bf16.mxu0 0
        %1336 = vmatpush1.bf16.xpose.msra.mxu0 0
        %1337 = vmatprep.subr.bf16.mxu0 0
        %1338 = vmatpush1.bf16.xpose.msra.mxu0 0
        %1339 = vmatprep.subr.bf16.mxu0 0
        %1340 = vmatpush1.bf16.xpose.msra.mxu0 0
        %1341 = vmatprep.subr.bf16.mxu0 0
        %1342 = vmatpush1.bf16.xpose.msra.mxu0 0
        %1343 = vmatprep.mubr.bf16.mxu0 0
        %1344 = vmatmul.mubr.bf16.gmra.mrb[0].mxu0 %v1306
        %v1345 = vpop.f32.mrb[0].mxu0
        %v1346 = vadd.f32 %v584, %v1345
        %v1347 = vpop.f32.mrb[0].mxu0
        %v1348 = vpop.f32.mrb[0].mxu0
        %v1349 = vpop.f32.mrb[0].mxu0
        %1350 = vdwg.mxu0
        %v1352 = vsel %vm1304, %v1293, 0
        %v1355 = vsel %vm1304, %v1297, 0
        %1357 = vmatprep.subr.bf16.mxu0 0
        %1358 = vmatpush1.bf16.xpose.msra.mxu0 %v1355
        %1359 = vmatprep.subr.bf16.mxu0 0
        %1360 = vmatpush1.bf16.xpose.msra.mxu0 0
        %1361 = vmatprep.subr.bf16.mxu0 0
        %1362 = vmatpush1.bf16.xpose.msra.mxu0 0
        %1363 = vmatprep.subr.bf16.mxu0 0
        %1364 = vmatpush1.bf16.xpose.msra.mxu0 0
        %1365 = vmatprep.subr.bf16.mxu0 0
        %1366 = vmatpush1.bf16.xpose.msra.mxu0 0
        %1367 = vmatprep.subr.bf16.mxu0 0
        %1368 = vmatpush1.bf16.xpose.msra.mxu0 0
        %1369 = vmatprep.subr.bf16.mxu0 0
        %1370 = vmatpush1.bf16.xpose.msra.mxu0 0
        %1371 = vmatprep.subr.bf16.mxu0 0
        %1372 = vmatpush1.bf16.xpose.msra.mxu0 0
        %1373 = vmatprep.subr.bf16.mxu0 0
        %1374 = vmatpush1.bf16.xpose.msra.mxu0 0
        %1375 = vmatprep.subr.bf16.mxu0 0
        %1376 = vmatpush1.bf16.xpose.msra.mxu0 0
        %1377 = vmatprep.subr.bf16.mxu0 0
        %1378 = vmatpush1.bf16.xpose.msra.mxu0 0
        %1379 = vmatprep.subr.bf16.mxu0 0
        %1380 = vmatpush1.bf16.xpose.msra.mxu0 0
        %1381 = vmatprep.subr.bf16.mxu0 0
        %1382 = vmatpush1.bf16.xpose.msra.mxu0 0
        %1383 = vmatprep.subr.bf16.mxu0 0
        %1384 = vmatpush1.bf16.xpose.msra.mxu0 0
        %1385 = vmatprep.subr.bf16.mxu0 0
        %1386 = vmatpush1.bf16.xpose.msra.mxu0 0
        %1387 = vmatprep.subr.bf16.mxu0 0
        %1388 = vmatpush1.bf16.xpose.msra.mxu0 0
        %1389 = vmatprep.mubr.bf16.mxu0 0
        %1390 = vmatmul.mubr.bf16.gmra.mrb[0].mxu0 %v1352
        %v1391 = vpop.f32.mrb[0].mxu0
        %v1392 = vadd.f32 %v584, %v1391
        %v1393 = vpop.f32.mrb[0].mxu0
        %v1394 = vpop.f32.mrb[0].mxu0
        %v1395 = vpop.f32.mrb[0].mxu0
        %1396 = vdwg.mxu0
        %v1398 = vsel %vm1304, %v1294, 0
        %v1401 = vsel %vm1304, %v1298, 0
        %1403 = vmatprep.subr.bf16.mxu0 0
        %1404 = vmatpush1.bf16.xpose.msra.mxu0 %v1401
        %1405 = vmatprep.subr.bf16.mxu0 0
        %1406 = vmatpush1.bf16.xpose.msra.mxu0 0
        %1407 = vmatprep.subr.bf16.mxu0 0
        %1408 = vmatpush1.bf16.xpose.msra.mxu0 0
        %1409 = vmatprep.subr.bf16.mxu0 0
        %1410 = vmatpush1.bf16.xpose.msra.mxu0 0
        %1411 = vmatprep.subr.bf16.mxu0 0
        %1412 = vmatpush1.bf16.xpose.msra.mxu0 0
        %1413 = vmatprep.subr.bf16.mxu0 0
        %1414 = vmatpush1.bf16.xpose.msra.mxu0 0
        %1415 = vmatprep.subr.bf16.mxu0 0
        %1416 = vmatpush1.bf16.xpose.msra.mxu0 0
        %1417 = vmatprep.subr.bf16.mxu0 0
        %1418 = vmatpush1.bf16.xpose.msra.mxu0 0
        %1419 = vmatprep.subr.bf16.mxu0 0
        %1420 = vmatpush1.bf16.xpose.msra.mxu0 0
        %1421 = vmatprep.subr.bf16.mxu0 0
        %1422 = vmatpush1.bf16.xpose.msra.mxu0 0
        %1423 = vmatprep.subr.bf16.mxu0 0
        %1424 = vmatpush1.bf16.xpose.msra.mxu0 0
        %1425 = vmatprep.subr.bf16.mxu0 0
        %1426 = vmatpush1.bf16.xpose.msra.mxu0 0
        %1427 = vmatprep.subr.bf16.mxu0 0
        %1428 = vmatpush1.bf16.xpose.msra.mxu0 0
        %1429 = vmatprep.subr.bf16.mxu0 0
        %1430 = vmatpush1.bf16.xpose.msra.mxu0 0
        %1431 = vmatprep.subr.bf16.mxu0 0
        %1432 = vmatpush1.bf16.xpose.msra.mxu0 0
        %1433 = vmatprep.subr.bf16.mxu0 0
        %1434 = vmatpush1.bf16.xpose.msra.mxu0 0
        %1435 = vmatprep.mubr.bf16.mxu0 0
        %1436 = vmatmul.mubr.bf16.gmra.mrb[0].mxu0 %v1398
        %v1437 = vpop.f32.mrb[0].mxu0
        %v1438 = vadd.f32 %v584, %v1437
        %v1439 = vpop.f32.mrb[0].mxu0
        %v1440 = vpop.f32.mrb[0].mxu0
        %v1441 = vpop.f32.mrb[0].mxu0
        %1442 = vdwg.mxu0
        %v1444 = vsel %vm1304, %v1295, 0
        %v1447 = vsel %vm1304, %v1299, 0
        %1449 = vmatprep.subr.bf16.mxu0 0
        %1450 = vmatpush1.bf16.xpose.msra.mxu0 %v1447
        %1451 = vmatprep.subr.bf16.mxu0 0
        %1452 = vmatpush1.bf16.xpose.msra.mxu0 0
        %1453 = vmatprep.subr.bf16.mxu0 0
        %1454 = vmatpush1.bf16.xpose.msra.mxu0 0
        %1455 = vmatprep.subr.bf16.mxu0 0
        %1456 = vmatpush1.bf16.xpose.msra.mxu0 0
        %1457 = vmatprep.subr.bf16.mxu0 0
        %1458 = vmatpush1.bf16.xpose.msra.mxu0 0
        %1459 = vmatprep.subr.bf16.mxu0 0
        %1460 = vmatpush1.bf16.xpose.msra.mxu0 0
        %1461 = vmatprep.subr.bf16.mxu0 0
        %1462 = vmatpush1.bf16.xpose.msra.mxu0 0
        %1463 = vmatprep.subr.bf16.mxu0 0
        %1464 = vmatpush1.bf16.xpose.msra.mxu0 0
        %1465 = vmatprep.subr.bf16.mxu0 0
        %1466 = vmatpush1.bf16.xpose.msra.mxu0 0
        %1467 = vmatprep.subr.bf16.mxu0 0
        %1468 = vmatpush1.bf16.xpose.msra.mxu0 0
        %1469 = vmatprep.subr.bf16.mxu0 0
        %1470 = vmatpush1.bf16.xpose.msra.mxu0 0
        %1471 = vmatprep.subr.bf16.mxu0 0
        %1472 = vmatpush1.bf16.xpose.msra.mxu0 0
        %1473 = vmatprep.subr.bf16.mxu0 0
        %1474 = vmatpush1.bf16.xpose.msra.mxu0 0
        %1475 = vmatprep.subr.bf16.mxu0 0
        %1476 = vmatpush1.bf16.xpose.msra.mxu0 0
        %1477 = vmatprep.subr.bf16.mxu0 0
        %1478 = vmatpush1.bf16.xpose.msra.mxu0 0
        %1479 = vmatprep.subr.bf16.mxu0 0
        %1480 = vmatpush1.bf16.xpose.msra.mxu0 0
        %1481 = vmatprep.mubr.bf16.mxu0 0
        %1482 = vmatmul.mubr.bf16.gmra.mrb[0].mxu0 %v1444
        %v1483 = vpop.f32.mrb[0].mxu0
        %v1484 = vadd.f32 %v584, %v1483
        %v1485 = vpop.f32.mrb[0].mxu0
        %v1486 = vpop.f32.mrb[0].mxu0
        %v1487 = vpop.f32.mrb[0].mxu0
        %1488 = vdwg.mxu0
        %v1489 = vsel %vm1304, %v1346, -inf
        %1490 = vmax.xlane.f32.xlu0 %v1489
        %v1491 = vpop.xlane.xlu0 %1490
        %v1492 = vsel %vm1304, %v1392, -inf
        %1493 = vmax.xlane.f32.xlu0 %v1492
        %v1494 = vpop.xlane.xlu0 %1493
        %v1495 = vsel %vm1304, %v1438, -inf
        %1496 = vmax.xlane.f32.xlu0 %v1495
        %v1497 = vpop.xlane.xlu0 %1496
        %v1498 = vsel %vm1304, %v1484, -inf
        %1499 = vmax.xlane.f32.xlu0 %v1498
        %v1500 = vpop.xlane.xlu0 %1499
        %v1501 = vsub.f32 %v1346, %v1491
        %v1502 = vsub.f32 %v1392, %v1494
        %v1503 = vsub.f32 %v1438, %v1497
        %v1504 = vsub.f32 %v1484, %v1500
        %v1505 = vmul.f32 %v1501, 1.442695
        %v1506 = vpow.pop %v1505
        %v1507 = vmul.f32 %v1502, 1.442695
        %v1508 = vpow.pop %v1507
        %v1509 = vmul.f32 %v1503, 1.442695
        %v1510 = vpow.pop %v1509
        %v1511 = vmul.f32 %v1504, 1.442695
        %v1512 = vpow.pop %v1511
        %v1513 = vsel %vm1304, %v1506, 0.0
        %1514 = vadd.xlane.f32.xlu0 %v1513
        %v1515 = vpop.xlane.xlu0 %1514
        %v1516 = vsel %vm1304, %v1508, 0.0
        %1517 = vadd.xlane.f32.xlu0 %v1516
        %v1518 = vpop.xlane.xlu0 %1517
        %v1519 = vsel %vm1304, %v1510, 0.0
        %1520 = vadd.xlane.f32.xlu0 %v1519
        %v1521 = vpop.xlane.xlu0 %1520
        %v1522 = vsel %vm1304, %v1512, 0.0
        %1523 = vadd.xlane.f32.xlu0 %v1522
        %v1524 = vpop.xlane.xlu0 %1523
        %v1525 = vrcp.pop %v1515
        %v1526 = vrcp.pop %v1518
        %v1527 = vrcp.pop %v1521
        %v1528 = vrcp.pop %v1524
        %v1529 = vmul.f32 %v1506, %v1525
        %v1530 = vmul.f32 %v1508, %v1526
        %v1531 = vmul.f32 %v1510, %v1527
        %v1532 = vmul.f32 %v1512, %v1528
        %v1533 = vpack.c.bf16 %v1529, %v1529
        %v1534 = vpack.c.bf16 %v1530, %v1530
        %v1535 = vpack.c.bf16 %v1531, %v1531
        %v1536 = vpack.c.bf16 %v1532, %v1532
        %v1538 = vsel %vm1304, %v1533, 0
        %vm1540 = vcmask 1043456
        %v1542 = vsel %vm1540, %v1300, 0
        %1544 = vmatprep.subr.bf16.mxu0 0
        %1545 = vmatpush1.bf16.msra.mxu0 %v1542
        %1546 = vmatprep.subr.bf16.mxu0 0
        %1547 = vmatpush1.bf16.msra.mxu0 0
        %1548 = vmatprep.subr.bf16.mxu0 0
        %1549 = vmatpush1.bf16.msra.mxu0 0
        %1550 = vmatprep.subr.bf16.mxu0 0
        %1551 = vmatpush1.bf16.msra.mxu0 0
        %1552 = vmatprep.subr.bf16.mxu0 0
        %1553 = vmatpush1.bf16.msra.mxu0 0
        %1554 = vmatprep.subr.bf16.mxu0 0
        %1555 = vmatpush1.bf16.msra.mxu0 0
        %1556 = vmatprep.subr.bf16.mxu0 0
        %1557 = vmatpush1.bf16.msra.mxu0 0
        %1558 = vmatprep.subr.bf16.mxu0 0
        %1559 = vmatpush1.bf16.msra.mxu0 0
        %1560 = vmatprep.subr.bf16.mxu0 0
        %1561 = vmatpush1.bf16.msra.mxu0 0
        %1562 = vmatprep.subr.bf16.mxu0 0
        %1563 = vmatpush1.bf16.msra.mxu0 0
        %1564 = vmatprep.subr.bf16.mxu0 0
        %1565 = vmatpush1.bf16.msra.mxu0 0
        %1566 = vmatprep.subr.bf16.mxu0 0
        %1567 = vmatpush1.bf16.msra.mxu0 0
        %1568 = vmatprep.subr.bf16.mxu0 0
        %1569 = vmatpush1.bf16.msra.mxu0 0
        %1570 = vmatprep.subr.bf16.mxu0 0
        %1571 = vmatpush1.bf16.msra.mxu0 0
        %1572 = vmatprep.subr.bf16.mxu0 0
        %1573 = vmatpush1.bf16.msra.mxu0 0
        %1574 = vmatprep.subr.bf16.mxu0 0
        %1575 = vmatpush1.bf16.msra.mxu0 0
        %1576 = vmatprep.mubr.bf16.mxu0 0
        %1577 = vmatmul.mubr.bf16.gmra.mrb[0].mxu0 %v1538
        %v1578 = vpop.f32.mrb[0].mxu0
        %v1579 = vadd.f32 0.0, %v1578
        %v1580 = vpop.f32.mrb[0].mxu0
        %v1581 = vpop.f32.mrb[0].mxu0
        %v1582 = vpop.f32.mrb[0].mxu0
        %1583 = vdwg.mxu0
        %v1585 = vsel %vm1304, %v1534, 0
        %v1588 = vsel %vm1540, %v1301, 0
        %1590 = vmatprep.subr.bf16.mxu0 0
        %1591 = vmatpush1.bf16.msra.mxu0 %v1588
        %1592 = vmatprep.subr.bf16.mxu0 0
        %1593 = vmatpush1.bf16.msra.mxu0 0
        %1594 = vmatprep.subr.bf16.mxu0 0
        %1595 = vmatpush1.bf16.msra.mxu0 0
        %1596 = vmatprep.subr.bf16.mxu0 0
        %1597 = vmatpush1.bf16.msra.mxu0 0
        %1598 = vmatprep.subr.bf16.mxu0 0
        %1599 = vmatpush1.bf16.msra.mxu0 0
        %1600 = vmatprep.subr.bf16.mxu0 0
        %1601 = vmatpush1.bf16.msra.mxu0 0
        %1602 = vmatprep.subr.bf16.mxu0 0
        %1603 = vmatpush1.bf16.msra.mxu0 0
        %1604 = vmatprep.subr.bf16.mxu0 0
        %1605 = vmatpush1.bf16.msra.mxu0 0
        %1606 = vmatprep.subr.bf16.mxu0 0
        %1607 = vmatpush1.bf16.msra.mxu0 0
        %1608 = vmatprep.subr.bf16.mxu0 0
        %1609 = vmatpush1.bf16.msra.mxu0 0
        %1610 = vmatprep.subr.bf16.mxu0 0
        %1611 = vmatpush1.bf16.msra.mxu0 0
        %1612 = vmatprep.subr.bf16.mxu0 0
        %1613 = vmatpush1.bf16.msra.mxu0 0
        %1614 = vmatprep.subr.bf16.mxu0 0
        %1615 = vmatpush1.bf16.msra.mxu0 0
        %1616 = vmatprep.subr.bf16.mxu0 0
        %1617 = vmatpush1.bf16.msra.mxu0 0
        %1618 = vmatprep.subr.bf16.mxu0 0
        %1619 = vmatpush1.bf16.msra.mxu0 0
        %1620 = vmatprep.subr.bf16.mxu0 0
        %1621 = vmatpush1.bf16.msra.mxu0 0
        %1622 = vmatprep.mubr.bf16.mxu0 0
        %1623 = vmatmul.mubr.bf16.gmra.mrb[0].mxu0 %v1585
        %v1624 = vpop.f32.mrb[0].mxu0
        %v1625 = vadd.f32 0.0, %v1624
        %v1626 = vpop.f32.mrb[0].mxu0
        %v1627 = vpop.f32.mrb[0].mxu0
        %v1628 = vpop.f32.mrb[0].mxu0
        %1629 = vdwg.mxu0
        %v1631 = vsel %vm1304, %v1535, 0
        %v1634 = vsel %vm1540, %v1302, 0
        %1636 = vmatprep.subr.bf16.mxu0 0
        %1637 = vmatpush1.bf16.msra.mxu0 %v1634
        %1638 = vmatprep.subr.bf16.mxu0 0
        %1639 = vmatpush1.bf16.msra.mxu0 0
        %1640 = vmatprep.subr.bf16.mxu0 0
        %1641 = vmatpush1.bf16.msra.mxu0 0
        %1642 = vmatprep.subr.bf16.mxu0 0
        %1643 = vmatpush1.bf16.msra.mxu0 0
        %1644 = vmatprep.subr.bf16.mxu0 0
        %1645 = vmatpush1.bf16.msra.mxu0 0
        %1646 = vmatprep.subr.bf16.mxu0 0
        %1647 = vmatpush1.bf16.msra.mxu0 0
        %1648 = vmatprep.subr.bf16.mxu0 0
        %1649 = vmatpush1.bf16.msra.mxu0 0
        %1650 = vmatprep.subr.bf16.mxu0 0
        %1651 = vmatpush1.bf16.msra.mxu0 0
        %1652 = vmatprep.subr.bf16.mxu0 0
        %1653 = vmatpush1.bf16.msra.mxu0 0
        %1654 = vmatprep.subr.bf16.mxu0 0
        %1655 = vmatpush1.bf16.msra.mxu0 0
        %1656 = vmatprep.subr.bf16.mxu0 0
        %1657 = vmatpush1.bf16.msra.mxu0 0
        %1658 = vmatprep.subr.bf16.mxu0 0
        %1659 = vmatpush1.bf16.msra.mxu0 0
        %1660 = vmatprep.subr.bf16.mxu0 0
        %1661 = vmatpush1.bf16.msra.mxu0 0
        %1662 = vmatprep.subr.bf16.mxu0 0
        %1663 = vmatpush1.bf16.msra.mxu0 0
        %1664 = vmatprep.subr.bf16.mxu0 0
        %1665 = vmatpush1.bf16.msra.mxu0 0
        %1666 = vmatprep.subr.bf16.mxu0 0
        %1667 = vmatpush1.bf16.msra.mxu0 0
        %1668 = vmatprep.mubr.bf16.mxu0 0
        %1669 = vmatmul.mubr.bf16.gmra.mrb[0].mxu0 %v1631
        %v1670 = vpop.f32.mrb[0].mxu0
        %v1671 = vadd.f32 0.0, %v1670
        %v1672 = vpop.f32.mrb[0].mxu0
        %v1673 = vpop.f32.mrb[0].mxu0
        %v1674 = vpop.f32.mrb[0].mxu0
        %1675 = vdwg.mxu0
        %v1677 = vsel %vm1304, %v1536, 0
        %v1680 = vsel %vm1540, %v1303, 0
        %1682 = vmatprep.subr.bf16.mxu0 0
        %1683 = vmatpush1.bf16.msra.mxu0 %v1680
        %1684 = vmatprep.subr.bf16.mxu0 0
        %1685 = vmatpush1.bf16.msra.mxu0 0
        %1686 = vmatprep.subr.bf16.mxu0 0
        %1687 = vmatpush1.bf16.msra.mxu0 0
        %1688 = vmatprep.subr.bf16.mxu0 0
        %1689 = vmatpush1.bf16.msra.mxu0 0
        %1690 = vmatprep.subr.bf16.mxu0 0
        %1691 = vmatpush1.bf16.msra.mxu0 0
        %1692 = vmatprep.subr.bf16.mxu0 0
        %1693 = vmatpush1.bf16.msra.mxu0 0
        %1694 = vmatprep.subr.bf16.mxu0 0
        %1695 = vmatpush1.bf16.msra.mxu0 0
        %1696 = vmatprep.subr.bf16.mxu0 0
        %1697 = vmatpush1.bf16.msra.mxu0 0
        %1698 = vmatprep.subr.bf16.mxu0 0
        %1699 = vmatpush1.bf16.msra.mxu0 0
        %1700 = vmatprep.subr.bf16.mxu0 0
        %1701 = vmatpush1.bf16.msra.mxu0 0
        %1702 = vmatprep.subr.bf16.mxu0 0
        %1703 = vmatpush1.bf16.msra.mxu0 0
        %1704 = vmatprep.subr.bf16.mxu0 0
        %1705 = vmatpush1.bf16.msra.mxu0 0
        %1706 = vmatprep.subr.bf16.mxu0 0
        %1707 = vmatpush1.bf16.msra.mxu0 0
        %1708 = vmatprep.subr.bf16.mxu0 0
        %1709 = vmatpush1.bf16.msra.mxu0 0
        %1710 = vmatprep.subr.bf16.mxu0 0
        %1711 = vmatpush1.bf16.msra.mxu0 0
        %1712 = vmatprep.subr.bf16.mxu0 0
        %1713 = vmatpush1.bf16.msra.mxu0 0
        %1714 = vmatprep.mubr.bf16.mxu0 0
        %1715 = vmatmul.mubr.bf16.gmra.mrb[0].mxu0 %v1677
        %v1716 = vpop.f32.mrb[0].mxu0
        %v1717 = vadd.f32 0.0, %v1716
        %v1718 = vpop.f32.mrb[0].mxu0
        %v1719 = vpop.f32.mrb[0].mxu0
        %v1720 = vpop.f32.mrb[0].mxu0
        %1721 = vdwg.mxu0
        %v1722 = vpack.c.bf16 %v1579, %v1579
        %v1723 = vpack.c.bf16 %v1625, %v1625
        %v1724 = vpack.c.bf16 %v1671, %v1671
        %v1725 = vpack.c.bf16 %v1717, %v1717
        %v1726 = vld [vmem:[%s6] sm:$0xf]
        %v1727 = vld [vmem:[%s6 + $0x4] sm:$0xf]
        %v1728 = vld [vmem:[%s6 + $0x8] sm:$0xf]
        %v1729 = vld [vmem:[%s6 + $0xc] sm:$0xf]
        %v1731 = vsel %vm1304, %v1722, 0
        %v1734 = vsel %vm1540, %v1726, 0
        %1736 = vmatprep.subr.bf16.mxu0 0
        %1737 = vmatpush1.bf16.msra.mxu0 %v1734
        %1738 = vmatprep.subr.bf16.mxu0 0
        %1739 = vmatpush1.bf16.msra.mxu0 0
        %1740 = vmatprep.subr.bf16.mxu0 0
        %1741 = vmatpush1.bf16.msra.mxu0 0
        %1742 = vmatprep.subr.bf16.mxu0 0
        %1743 = vmatpush1.bf16.msra.mxu0 0
        %1744 = vmatprep.subr.bf16.mxu0 0
        %1745 = vmatpush1.bf16.msra.mxu0 0
        %1746 = vmatprep.subr.bf16.mxu0 0
        %1747 = vmatpush1.bf16.msra.mxu0 0
        %1748 = vmatprep.subr.bf16.mxu0 0
        %1749 = vmatpush1.bf16.msra.mxu0 0
        %1750 = vmatprep.subr.bf16.mxu0 0
        %1751 = vmatpush1.bf16.msra.mxu0 0
        %1752 = vmatprep.subr.bf16.mxu0 0
        %1753 = vmatpush1.bf16.msra.mxu0 0
        %1754 = vmatprep.subr.bf16.mxu0 0
        %1755 = vmatpush1.bf16.msra.mxu0 0
        %1756 = vmatprep.subr.bf16.mxu0 0
        %1757 = vmatpush1.bf16.msra.mxu0 0
        %1758 = vmatprep.subr.bf16.mxu0 0
        %1759 = vmatpush1.bf16.msra.mxu0 0
        %1760 = vmatprep.subr.bf16.mxu0 0
        %1761 = vmatpush1.bf16.msra.mxu0 0
        %1762 = vmatprep.subr.bf16.mxu0 0
        %1763 = vmatpush1.bf16.msra.mxu0 0
        %1764 = vmatprep.subr.bf16.mxu0 0
        %1765 = vmatpush1.bf16.msra.mxu0 0
        %1766 = vmatprep.subr.bf16.mxu0 0
        %1767 = vmatpush1.bf16.msra.mxu0 0
        %1768 = vmatprep.mubr.bf16.mxu0 0
        %1769 = vmatmul.mubr.bf16.gmra.mrb[0].mxu0 %v1731
        %v1770 = vpop.f32.mrb[0].mxu0
        %v1771 = vadd.f32 0.0, %v1770
        %v1772 = vpop.f32.mrb[0].mxu0
        %v1773 = vpop.f32.mrb[0].mxu0
        %v1774 = vpop.f32.mrb[0].mxu0
        %1775 = vdwg.mxu0
        %v1777 = vsel %vm1304, %v1723, 0
        %v1780 = vsel %vm1540, %v1727, 0
        %1782 = vmatprep.subr.bf16.mxu0 0
        %1783 = vmatpush1.bf16.msra.mxu0 %v1780
        %1784 = vmatprep.subr.bf16.mxu0 0
        %1785 = vmatpush1.bf16.msra.mxu0 0
        %1786 = vmatprep.subr.bf16.mxu0 0
        %1787 = vmatpush1.bf16.msra.mxu0 0
        %1788 = vmatprep.subr.bf16.mxu0 0
        %1789 = vmatpush1.bf16.msra.mxu0 0
        %1790 = vmatprep.subr.bf16.mxu0 0
        %1791 = vmatpush1.bf16.msra.mxu0 0
        %1792 = vmatprep.subr.bf16.mxu0 0
        %1793 = vmatpush1.bf16.msra.mxu0 0
        %1794 = vmatprep.subr.bf16.mxu0 0
        %1795 = vmatpush1.bf16.msra.mxu0 0
        %1796 = vmatprep.subr.bf16.mxu0 0
        %1797 = vmatpush1.bf16.msra.mxu0 0
        %1798 = vmatprep.subr.bf16.mxu0 0
        %1799 = vmatpush1.bf16.msra.mxu0 0
        %1800 = vmatprep.subr.bf16.mxu0 0
        %1801 = vmatpush1.bf16.msra.mxu0 0
        %1802 = vmatprep.subr.bf16.mxu0 0
        %1803 = vmatpush1.bf16.msra.mxu0 0
        %1804 = vmatprep.subr.bf16.mxu0 0
        %1805 = vmatpush1.bf16.msra.mxu0 0
        %1806 = vmatprep.subr.bf16.mxu0 0
        %1807 = vmatpush1.bf16.msra.mxu0 0
        %1808 = vmatprep.subr.bf16.mxu0 0
        %1809 = vmatpush1.bf16.msra.mxu0 0
        %1810 = vmatprep.subr.bf16.mxu0 0
        %1811 = vmatpush1.bf16.msra.mxu0 0
        %1812 = vmatprep.subr.bf16.mxu0 0
        %1813 = vmatpush1.bf16.msra.mxu0 0
        %1814 = vmatprep.mubr.bf16.mxu0 0
        %1815 = vmatmul.mubr.bf16.gmra.mrb[0].mxu0 %v1777
        %v1816 = vpop.f32.mrb[0].mxu0
        %v1817 = vadd.f32 0.0, %v1816
        %v1818 = vpop.f32.mrb[0].mxu0
        %v1819 = vpop.f32.mrb[0].mxu0
        %v1820 = vpop.f32.mrb[0].mxu0
        %1821 = vdwg.mxu0
        %v1823 = vsel %vm1304, %v1724, 0
        %v1826 = vsel %vm1540, %v1728, 0
        %1828 = vmatprep.subr.bf16.mxu0 0
        %1829 = vmatpush1.bf16.msra.mxu0 %v1826
        %1830 = vmatprep.subr.bf16.mxu0 0
        %1831 = vmatpush1.bf16.msra.mxu0 0
        %1832 = vmatprep.subr.bf16.mxu0 0
        %1833 = vmatpush1.bf16.msra.mxu0 0
        %1834 = vmatprep.subr.bf16.mxu0 0
        %1835 = vmatpush1.bf16.msra.mxu0 0
        %1836 = vmatprep.subr.bf16.mxu0 0
        %1837 = vmatpush1.bf16.msra.mxu0 0
        %1838 = vmatprep.subr.bf16.mxu0 0
        %1839 = vmatpush1.bf16.msra.mxu0 0
        %1840 = vmatprep.subr.bf16.mxu0 0
        %1841 = vmatpush1.bf16.msra.mxu0 0
        %1842 = vmatprep.subr.bf16.mxu0 0
        %1843 = vmatpush1.bf16.msra.mxu0 0
        %1844 = vmatprep.subr.bf16.mxu0 0
        %1845 = vmatpush1.bf16.msra.mxu0 0
        %1846 = vmatprep.subr.bf16.mxu0 0
        %1847 = vmatpush1.bf16.msra.mxu0 0
        %1848 = vmatprep.subr.bf16.mxu0 0
        %1849 = vmatpush1.bf16.msra.mxu0 0
        %1850 = vmatprep.subr.bf16.mxu0 0
        %1851 = vmatpush1.bf16.msra.mxu0 0
        %1852 = vmatprep.subr.bf16.mxu0 0
        %1853 = vmatpush1.bf16.msra.mxu0 0
        %1854 = vmatprep.subr.bf16.mxu0 0
        %1855 = vmatpush1.bf16.msra.mxu0 0
        %1856 = vmatprep.subr.bf16.mxu0 0
        %1857 = vmatpush1.bf16.msra.mxu0 0
        %1858 = vmatprep.subr.bf16.mxu0 0
        %1859 = vmatpush1.bf16.msra.mxu0 0
        %1860 = vmatprep.mubr.bf16.mxu0 0
        %1861 = vmatmul.mubr.bf16.gmra.mrb[0].mxu0 %v1823
        %v1862 = vpop.f32.mrb[0].mxu0
        %v1863 = vadd.f32 0.0, %v1862
        %v1864 = vpop.f32.mrb[0].mxu0
        %v1865 = vpop.f32.mrb[0].mxu0
        %v1866 = vpop.f32.mrb[0].mxu0
        %1867 = vdwg.mxu0
        %v1869 = vsel %vm1304, %v1725, 0
        %v1872 = vsel %vm1540, %v1729, 0
        %1874 = vmatprep.subr.bf16.mxu0 0
        %1875 = vmatpush1.bf16.msra.mxu0 %v1872
        %1876 = vmatprep.subr.bf16.mxu0 0
        %1877 = vmatpush1.bf16.msra.mxu0 0
        %1878 = vmatprep.subr.bf16.mxu0 0
        %1879 = vmatpush1.bf16.msra.mxu0 0
        %1880 = vmatprep.subr.bf16.mxu0 0
        %1881 = vmatpush1.bf16.msra.mxu0 0
        %1882 = vmatprep.subr.bf16.mxu0 0
        %1883 = vmatpush1.bf16.msra.mxu0 0
        %1884 = vmatprep.subr.bf16.mxu0 0
        %1885 = vmatpush1.bf16.msra.mxu0 0
        %1886 = vmatprep.subr.bf16.mxu0 0
        %1887 = vmatpush1.bf16.msra.mxu0 0
        %1888 = vmatprep.subr.bf16.mxu0 0
        %1889 = vmatpush1.bf16.msra.mxu0 0
        %1890 = vmatprep.subr.bf16.mxu0 0
        %1891 = vmatpush1.bf16.msra.mxu0 0
        %1892 = vmatprep.subr.bf16.mxu0 0
        %1893 = vmatpush1.bf16.msra.mxu0 0
        %1894 = vmatprep.subr.bf16.mxu0 0
        %1895 = vmatpush1.bf16.msra.mxu0 0
        %1896 = vmatprep.subr.bf16.mxu0 0
        %1897 = vmatpush1.bf16.msra.mxu0 0
        %1898 = vmatprep.subr.bf16.mxu0 0
        %1899 = vmatpush1.bf16.msra.mxu0 0
        %1900 = vmatprep.subr.bf16.mxu0 0
        %1901 = vmatpush1.bf16.msra.mxu0 0
        %1902 = vmatprep.subr.bf16.mxu0 0
        %1903 = vmatpush1.bf16.msra.mxu0 0
        %1904 = vmatprep.subr.bf16.mxu0 0
        %1905 = vmatpush1.bf16.msra.mxu0 0
        %1906 = vmatprep.mubr.bf16.mxu0 0
        %1907 = vmatmul.mubr.bf16.gmra.mrb[0].mxu0 %v1869
        %v1908 = vpop.f32.mrb[0].mxu0
        %v1909 = vadd.f32 0.0, %v1908
        %v1910 = vpop.f32.mrb[0].mxu0
        %v1911 = vpop.f32.mrb[0].mxu0
        %v1912 = vpop.f32.mrb[0].mxu0
        %1913 = vdwg.mxu0
        %v1914 = vsel %vm587, %v1771, 0.0
        %v1915 = vsel %vm587, %v1817, 0.0
        %v1916 = vadd.f32 %v1914, %v1915
        %v1917 = vsel %vm587, %v1863, 0.0
        %v1918 = vadd.f32 %v1916, %v1917
        %v1919 = vsel %vm587, %v1909, 0.0
        %v1920 = vadd.f32 %v1918, %v1919
        %v1921 = vadd.f32 %v578, %v1920
        %v1922 = vld [vmem:[%s7] sm:$0x1]
        %v1924 = vlaneseq
        %v1925 = vshrl.u32 %v1924, 7
        %v1926 = vsub.s32 0, %v1925
        %v1927 = vrot.slane %v1922, %v1926
        %v1929 = vadd.f32 %v1921, %v1927
        %v1930 = vld [vmem:[%s8] sm:$0x1]
        %v1931 = vld [vmem:[%s9] sm:$0x1]
        %v1932 = vsel %vm587, %v1929, 0.0
        %1933 = vadd.xlane.f32.xlu0 %v1932
        %v1934 = vpop.xlane.xlu0 %1933
        %v1935 = vmul.f32 %v1934, %v591
        %v1936 = vsub.f32 %v1929, %v1935
        %v1937 = vmul.f32 %v1936, %v1936
        %v1938 = vsel %vm587, %v1937, 0.0
        %1939 = vadd.xlane.f32.xlu0 %v1938
        %v1940 = vpop.xlane.xlu0 %1939
        %v1941 = vmul.f32 %v1940, %v591
        %v1942 = vadd.f32 %v1941, 1e-05
        %v1943 = vrsqrt.pop %v1942
        %v1944 = vmul.f32 %v1936, %v1943
        %v1946 = vlaneseq
        %v1947 = vshrl.u32 %v1946, 7
        %v1948 = vsub.s32 0, %v1947
        %v1949 = vrot.slane %v1930, %v1948
        %v1951 = vmul.f32 %v1944, %v1949
        %v1953 = vlaneseq
        %v1954 = vshrl.u32 %v1953, 7
        %v1955 = vsub.s32 0, %v1954
        %v1956 = vrot.slane %v1931, %v1955
        %v1958 = vadd.f32 %v1951, %v1956
        %v1959 = vpack.c.bf16 %v1958, %v1958
        %v1960 = vld [vmem:[%s10] sm:$0xf]
        %v1961 = vld [vmem:[%s10 + $0x4] sm:$0xf]
        %v1962 = vld [vmem:[%s10 + $0x8] sm:$0xf]
        %v1963 = vld [vmem:[%s10 + $0xc] sm:$0xf]
        %v1964 = vld [vmem:[%s11] sm:$0x1]
        %v1966 = vlaneseq
        %v1967 = vshrl.u32 %v1966, 7
        %v1968 = vsub.s32 0, %v1967
        %v1969 = vrot.slane %v1964, %v1968
        %v1975 = vunpack.c.l.b16 %v1960
        %v1976 = vunpack.c.l.b16 %v1961
        %v1977 = vunpack.c.l.b16 %v1962
        %v1978 = vunpack.c.l.b16 %v1963
        %v1979 = vpack.c.b16 %v1976, %v1975
        %v1980 = vpack.c.b16 %v1978, %v1977
        %v1984 = vsel %vm587, %v1959, 0
        %1986 = vmatprep.subr.bf16.mxu0 0
        %1987 = vmatpush1.bf16.msra.mxu0 %v1979
        %1988 = vmatprep.subr.bf16.mxu0 0
        %1989 = vmatpush1.bf16.msra.mxu0 %v1980
        %1990 = vmatprep.subr.bf16.mxu0 0
        %1991 = vmatpush1.bf16.msra.mxu0 0
        %1992 = vmatprep.subr.bf16.mxu0 0
        %1993 = vmatpush1.bf16.msra.mxu0 0
        %1994 = vmatprep.subr.bf16.mxu0 0
        %1995 = vmatpush1.bf16.msra.mxu0 0
        %1996 = vmatprep.subr.bf16.mxu0 0
        %1997 = vmatpush1.bf16.msra.mxu0 0
        %1998 = vmatprep.subr.bf16.mxu0 0
        %1999 = vmatpush1.bf16.msra.mxu0 0
        %2000 = vmatprep.subr.bf16.mxu0 0
        %2001 = vmatpush1.bf16.msra.mxu0 0
        %2002 = vmatprep.subr.bf16.mxu0 0
        %2003 = vmatpush1.bf16.msra.mxu0 0
        %2004 = vmatprep.subr.bf16.mxu0 0
        %2005 = vmatpush1.bf16.msra.mxu0 0
        %2006 = vmatprep.subr.bf16.mxu0 0
        %2007 = vmatpush1.bf16.msra.mxu0 0
        %2008 = vmatprep.subr.bf16.mxu0 0
        %2009 = vmatpush1.bf16.msra.mxu0 0
        %2010 = vmatprep.subr.bf16.mxu0 0
        %2011 = vmatpush1.bf16.msra.mxu0 0
        %2012 = vmatprep.subr.bf16.mxu0 0
        %2013 = vmatpush1.bf16.msra.mxu0 0
        %2014 = vmatprep.subr.bf16.mxu0 0
        %2015 = vmatpush1.bf16.msra.mxu0 0
        %2016 = vmatprep.subr.bf16.mxu0 0
        %2017 = vmatpush1.bf16.msra.mxu0 0
        %2018 = vmatprep.mubr.bf16.mxu0 0
        %2019 = vmatmul.mubr.bf16.gmra.mrb[0].mxu0 %v1984
        %v2020 = vpop.f32.mrb[0].mxu0
        %v2021 = vadd.f32 %v1969, %v2020
        %v2022 = vpop.f32.mrb[0].mxu0
        %v2023 = vpop.f32.mrb[0].mxu0
        %v2024 = vpop.f32.mrb[0].mxu0
        %2025 = vdwg.mxu0
        %v2026 = vmax.f32 %v2021, 0.0
        %v2027 = vpack.c.bf16 %v2026, %v2026
        %v2028 = vld [vmem:[%s12] sm:$0xf]
        %v2029 = vld [vmem:[%s12 + $0x4] sm:$0xf]
        %v2030 = vld [vmem:[%s12 + $0x8] sm:$0xf]
        %v2031 = vld [vmem:[%s12 + $0xc] sm:$0xf]
        %v2032 = vld [vmem:[%s12 + $0x10] sm:$0xf]
        %v2033 = vld [vmem:[%s12 + $0x14] sm:$0xf]
        %v2034 = vld [vmem:[%s12 + $0x18] sm:$0xf]
        %v2035 = vld [vmem:[%s12 + $0x1c] sm:$0xf]
        %v2036 = vld [vmem:[%s12 + $0x20] sm:$0xf]
        %v2037 = vld [vmem:[%s12 + $0x24] sm:$0xf]
        %v2038 = vld [vmem:[%s12 + $0x28] sm:$0xf]
        %v2039 = vld [vmem:[%s12 + $0x2c] sm:$0xf]
        %v2040 = vld [vmem:[%s12 + $0x30] sm:$0xf]
        %v2041 = vld [vmem:[%s12 + $0x34] sm:$0xf]
        %v2042 = vld [vmem:[%s12 + $0x38] sm:$0xf]
        %v2043 = vld [vmem:[%s12 + $0x3c] sm:$0xf]
        %v2044 = vld [vmem:[%s13] sm:$0x1]
        %v2046 = vlaneseq
        %v2047 = vshrl.u32 %v2046, 7
        %v2048 = vsub.s32 0, %v2047
        %v2049 = vrot.slane %v2044, %v2048
        %v2067 = vunpack.c.l.b16 %v2028
        %v2068 = vunpack.c.l.b16 %v2029
        %v2069 = vunpack.c.l.b16 %v2030
        %v2070 = vunpack.c.l.b16 %v2031
        %v2071 = vunpack.c.l.b16 %v2032
        %v2072 = vunpack.c.l.b16 %v2033
        %v2073 = vunpack.c.l.b16 %v2034
        %v2074 = vunpack.c.l.b16 %v2035
        %v2075 = vunpack.c.l.b16 %v2036
        %v2076 = vunpack.c.l.b16 %v2037
        %v2077 = vunpack.c.l.b16 %v2038
        %v2078 = vunpack.c.l.b16 %v2039
        %v2079 = vunpack.c.l.b16 %v2040
        %v2080 = vunpack.c.l.b16 %v2041
        %v2081 = vunpack.c.l.b16 %v2042
        %v2082 = vunpack.c.l.b16 %v2043
        %v2083 = vpack.c.b16 %v2068, %v2067
        %v2084 = vpack.c.b16 %v2070, %v2069
        %v2085 = vpack.c.b16 %v2072, %v2071
        %v2086 = vpack.c.b16 %v2074, %v2073
        %v2087 = vpack.c.b16 %v2076, %v2075
        %v2088 = vpack.c.b16 %v2078, %v2077
        %v2089 = vpack.c.b16 %v2080, %v2079
        %v2090 = vpack.c.b16 %v2082, %v2081
        %2099 = vmatprep.subr.bf16.mxu0 0
        %2100 = vmatpush1.bf16.msra.mxu0 %v2083
        %2101 = vmatprep.subr.bf16.mxu0 0
        %2102 = vmatpush1.bf16.msra.mxu0 %v2084
        %2103 = vmatprep.subr.bf16.mxu0 0
        %2104 = vmatpush1.bf16.msra.mxu0 %v2085
        %2105 = vmatprep.subr.bf16.mxu0 0
        %2106 = vmatpush1.bf16.msra.mxu0 %v2086
        %2107 = vmatprep.subr.bf16.mxu0 0
        %2108 = vmatpush1.bf16.msra.mxu0 %v2087
        %2109 = vmatprep.subr.bf16.mxu0 0
        %2110 = vmatpush1.bf16.msra.mxu0 %v2088
        %2111 = vmatprep.subr.bf16.mxu0 0
        %2112 = vmatpush1.bf16.msra.mxu0 %v2089
        %2113 = vmatprep.subr.bf16.mxu0 0
        %2114 = vmatpush1.bf16.msra.mxu0 %v2090
        %2115 = vmatprep.subr.bf16.mxu0 0
        %2116 = vmatpush1.bf16.msra.mxu0 0
        %2117 = vmatprep.subr.bf16.mxu0 0
        %2118 = vmatpush1.bf16.msra.mxu0 0
        %2119 = vmatprep.subr.bf16.mxu0 0
        %2120 = vmatpush1.bf16.msra.mxu0 0
        %2121 = vmatprep.subr.bf16.mxu0 0
        %2122 = vmatpush1.bf16.msra.mxu0 0
        %2123 = vmatprep.subr.bf16.mxu0 0
        %2124 = vmatpush1.bf16.msra.mxu0 0
        %2125 = vmatprep.subr.bf16.mxu0 0
        %2126 = vmatpush1.bf16.msra.mxu0 0
        %2127 = vmatprep.subr.bf16.mxu0 0
        %2128 = vmatpush1.bf16.msra.mxu0 0
        %2129 = vmatprep.subr.bf16.mxu0 0
        %2130 = vmatpush1.bf16.msra.mxu0 0
        %2131 = vmatprep.mubr.bf16.mxu0 0
        %2132 = vmatmul.mubr.bf16.gmra.mrb[0].mxu0 %v2027
        %v2133 = vpop.f32.mrb[0].mxu0
        %v2134 = vadd.f32 %v2049, %v2133
        %v2135 = vpop.f32.mrb[0].mxu0
        %v2136 = vpop.f32.mrb[0].mxu0
        %v2137 = vpop.f32.mrb[0].mxu0
        %2138 = vdwg.mxu0
        %v2139 = vadd.f32 %v1929, %v2134
        %s2140 = scalar_lea.vmem %s3, 1
        %v2141 = vld [vmem:[%s2140] sm:$0x1]
        %s2142 = scalar_lea.vmem %s4, 1
        %v2143 = vld [vmem:[%s2142] sm:$0x1]
        %v2144 = vsel %vm587, %v2139, 0.0
        %2145 = vadd.xlane.f32.xlu0 %v2144
        %v2146 = vpop.xlane.xlu0 %2145
        %v2147 = vmul.f32 %v2146, %v591
        %v2148 = vsub.f32 %v2139, %v2147
        %v2149 = vmul.f32 %v2148, %v2148
        %v2150 = vsel %vm587, %v2149, 0.0
        %2151 = vadd.xlane.f32.xlu0 %v2150
        %v2152 = vpop.xlane.xlu0 %2151
        %v2153 = vmul.f32 %v2152, %v591
        %v2154 = vadd.f32 %v2153, 1e-05
        %v2155 = vrsqrt.pop %v2154
        %v2156 = vmul.f32 %v2148, %v2155
        %v2158 = vlaneseq
        %v2159 = vshrl.u32 %v2158, 7
        %v2160 = vsub.s32 0, %v2159
        %v2161 = vrot.slane %v2141, %v2160
        %v2163 = vmul.f32 %v2156, %v2161
        %v2165 = vlaneseq
        %v2166 = vshrl.u32 %v2165, 7
        %v2167 = vsub.s32 0, %v2166
        %v2168 = vrot.slane %v2143, %v2167
        %v2170 = vadd.f32 %v2163, %v2168
        %v2171 = vpack.c.bf16 %v2170, %v2170
        %s2172 = scalar_lea.vmem %s5, 192
        %v2173 = vld [vmem:[%s2172] sm:$0xf]
        %v2174 = vld [vmem:[%s2172 + $0x4] sm:$0xf]
        %v2175 = vld [vmem:[%s2172 + $0x8] sm:$0xf]
        %v2176 = vld [vmem:[%s2172 + $0xc] sm:$0xf]
        %v2177 = vld [vmem:[%s2172 + $0x10] sm:$0xf]
        %v2178 = vld [vmem:[%s2172 + $0x14] sm:$0xf]
        %v2179 = vld [vmem:[%s2172 + $0x18] sm:$0xf]
        %v2180 = vld [vmem:[%s2172 + $0x1c] sm:$0xf]
        %v2181 = vld [vmem:[%s2172 + $0x20] sm:$0xf]
        %v2182 = vld [vmem:[%s2172 + $0x24] sm:$0xf]
        %v2183 = vld [vmem:[%s2172 + $0x28] sm:$0xf]
        %v2184 = vld [vmem:[%s2172 + $0x2c] sm:$0xf]
        %v2185 = vld [vmem:[%s2172 + $0x30] sm:$0xf]
        %v2186 = vld [vmem:[%s2172 + $0x34] sm:$0xf]
        %v2187 = vld [vmem:[%s2172 + $0x38] sm:$0xf]
        %v2188 = vld [vmem:[%s2172 + $0x3c] sm:$0xf]
        %v2189 = vld [vmem:[%s2172 + $0x40] sm:$0xf]
        %v2190 = vld [vmem:[%s2172 + $0x44] sm:$0xf]
        %v2191 = vld [vmem:[%s2172 + $0x48] sm:$0xf]
        %v2192 = vld [vmem:[%s2172 + $0x4c] sm:$0xf]
        %v2193 = vld [vmem:[%s2172 + $0x50] sm:$0xf]
        %v2194 = vld [vmem:[%s2172 + $0x54] sm:$0xf]
        %v2195 = vld [vmem:[%s2172 + $0x58] sm:$0xf]
        %v2196 = vld [vmem:[%s2172 + $0x5c] sm:$0xf]
        %v2197 = vld [vmem:[%s2172 + $0x60] sm:$0xf]
        %v2198 = vld [vmem:[%s2172 + $0x64] sm:$0xf]
        %v2199 = vld [vmem:[%s2172 + $0x68] sm:$0xf]
        %v2200 = vld [vmem:[%s2172 + $0x6c] sm:$0xf]
        %v2201 = vld [vmem:[%s2172 + $0x70] sm:$0xf]
        %v2202 = vld [vmem:[%s2172 + $0x74] sm:$0xf]
        %v2203 = vld [vmem:[%s2172 + $0x78] sm:$0xf]
        %v2204 = vld [vmem:[%s2172 + $0x7c] sm:$0xf]
        %v2205 = vld [vmem:[%s2172 + $0x80] sm:$0xf]
        %v2206 = vld [vmem:[%s2172 + $0x84] sm:$0xf]
        %v2207 = vld [vmem:[%s2172 + $0x88] sm:$0xf]
        %v2208 = vld [vmem:[%s2172 + $0x8c] sm:$0xf]
        %v2209 = vld [vmem:[%s2172 + $0x90] sm:$0xf]
        %v2210 = vld [vmem:[%s2172 + $0x94] sm:$0xf]
        %v2211 = vld [vmem:[%s2172 + $0x98] sm:$0xf]
        %v2212 = vld [vmem:[%s2172 + $0x9c] sm:$0xf]
        %v2213 = vld [vmem:[%s2172 + $0xa0] sm:$0xf]
        %v2214 = vld [vmem:[%s2172 + $0xa4] sm:$0xf]
        %v2215 = vld [vmem:[%s2172 + $0xa8] sm:$0xf]
        %v2216 = vld [vmem:[%s2172 + $0xac] sm:$0xf]
        %v2217 = vld [vmem:[%s2172 + $0xb0] sm:$0xf]
        %v2218 = vld [vmem:[%s2172 + $0xb4] sm:$0xf]
        %v2219 = vld [vmem:[%s2172 + $0xb8] sm:$0xf]
        %v2220 = vld [vmem:[%s2172 + $0xbc] sm:$0xf]
        %v2225 = vunpack.c.l.b16 %v2173
        %v2226 = vunpack.c.l.b16 %v2174
        %v2227 = vunpack.c.l.b16 %v2175
        %v2228 = vunpack.c.l.b16 %v2176
        %v2229 = vpack.c.b16 %v2226, %v2225
        %v2230 = vpack.c.b16 %v2228, %v2227
        %v2234 = vsel %vm587, %v2171, 0
        %2236 = vmatprep.subr.bf16.mxu0 0
        %2237 = vmatpush1.bf16.msra.mxu0 %v2229
        %2238 = vmatprep.subr.bf16.mxu0 0
        %2239 = vmatpush1.bf16.msra.mxu0 %v2230
        %2240 = vmatprep.subr.bf16.mxu0 0
        %2241 = vmatpush1.bf16.msra.mxu0 0
        %2242 = vmatprep.subr.bf16.mxu0 0
        %2243 = vmatpush1.bf16.msra.mxu0 0
        %2244 = vmatprep.subr.bf16.mxu0 0
        %2245 = vmatpush1.bf16.msra.mxu0 0
        %2246 = vmatprep.subr.bf16.mxu0 0
        %2247 = vmatpush1.bf16.msra.mxu0 0
        %2248 = vmatprep.subr.bf16.mxu0 0
        %2249 = vmatpush1.bf16.msra.mxu0 0
        %2250 = vmatprep.subr.bf16.mxu0 0
        %2251 = vmatpush1.bf16.msra.mxu0 0
        %2252 = vmatprep.subr.bf16.mxu0 0
        %2253 = vmatpush1.bf16.msra.mxu0 0
        %2254 = vmatprep.subr.bf16.mxu0 0
        %2255 = vmatpush1.bf16.msra.mxu0 0
        %2256 = vmatprep.subr.bf16.mxu0 0
        %2257 = vmatpush1.bf16.msra.mxu0 0
        %2258 = vmatprep.subr.bf16.mxu0 0
        %2259 = vmatpush1.bf16.msra.mxu0 0
        %2260 = vmatprep.subr.bf16.mxu0 0
        %2261 = vmatpush1.bf16.msra.mxu0 0
        %2262 = vmatprep.subr.bf16.mxu0 0
        %2263 = vmatpush1.bf16.msra.mxu0 0
        %2264 = vmatprep.subr.bf16.mxu0 0
        %2265 = vmatpush1.bf16.msra.mxu0 0
        %2266 = vmatprep.subr.bf16.mxu0 0
        %2267 = vmatpush1.bf16.msra.mxu0 0
        %2268 = vmatprep.mubr.bf16.mxu0 0
        %2269 = vmatmul.mubr.bf16.gmra.mrb[0].mxu0 %v2234
        %v2270 = vpop.f32.mrb[0].mxu0
        %v2271 = vadd.f32 0.0, %v2270
        %v2272 = vpop.f32.mrb[0].mxu0
        %v2273 = vpop.f32.mrb[0].mxu0
        %v2274 = vpop.f32.mrb[0].mxu0
        %2275 = vdwg.mxu0
        %v2280 = vunpack.c.l.b16 %v2177
        %v2281 = vunpack.c.l.b16 %v2178
        %v2282 = vunpack.c.l.b16 %v2179
        %v2283 = vunpack.c.l.b16 %v2180
        %v2284 = vpack.c.b16 %v2281, %v2280
        %v2285 = vpack.c.b16 %v2283, %v2282
        %2288 = vmatprep.subr.bf16.mxu0 0
        %2289 = vmatpush1.bf16.msra.mxu0 %v2284
        %2290 = vmatprep.subr.bf16.mxu0 0
        %2291 = vmatpush1.bf16.msra.mxu0 %v2285
        %2292 = vmatprep.subr.bf16.mxu0 0
        %2293 = vmatpush1.bf16.msra.mxu0 0
        %2294 = vmatprep.subr.bf16.mxu0 0
        %2295 = vmatpush1.bf16.msra.mxu0 0
        %2296 = vmatprep.subr.bf16.mxu0 0
        %2297 = vmatpush1.bf16.msra.mxu0 0
        %2298 = vmatprep.subr.bf16.mxu0 0
        %2299 = vmatpush1.bf16.msra.mxu0 0
        %2300 = vmatprep.subr.bf16.mxu0 0
        %2301 = vmatpush1.bf16.msra.mxu0 0
        %2302 = vmatprep.subr.bf16.mxu0 0
        %2303 = vmatpush1.bf16.msra.mxu0 0
        %2304 = vmatprep.subr.bf16.mxu0 0
        %2305 = vmatpush1.bf16.msra.mxu0 0
        %2306 = vmatprep.subr.bf16.mxu0 0
        %2307 = vmatpush1.bf16.msra.mxu0 0
        %2308 = vmatprep.subr.bf16.mxu0 0
        %2309 = vmatpush1.bf16.msra.mxu0 0
        %2310 = vmatprep.subr.bf16.mxu0 0
        %2311 = vmatpush1.bf16.msra.mxu0 0
        %2312 = vmatprep.subr.bf16.mxu0 0
        %2313 = vmatpush1.bf16.msra.mxu0 0
        %2314 = vmatprep.subr.bf16.mxu0 0
        %2315 = vmatpush1.bf16.msra.mxu0 0
        %2316 = vmatprep.subr.bf16.mxu0 0
        %2317 = vmatpush1.bf16.msra.mxu0 0
        %2318 = vmatprep.subr.bf16.mxu0 0
        %2319 = vmatpush1.bf16.msra.mxu0 0
        %2320 = vmatprep.mubr.bf16.mxu0 0
        %2321 = vmatmul.mubr.bf16.gmra.mrb[0].mxu0 %v2234
        %v2322 = vpop.f32.mrb[0].mxu0
        %v2323 = vadd.f32 0.0, %v2322
        %v2324 = vpop.f32.mrb[0].mxu0
        %v2325 = vpop.f32.mrb[0].mxu0
        %v2326 = vpop.f32.mrb[0].mxu0
        %2327 = vdwg.mxu0
        %v2332 = vunpack.c.l.b16 %v2181
        %v2333 = vunpack.c.l.b16 %v2182
        %v2334 = vunpack.c.l.b16 %v2183
        %v2335 = vunpack.c.l.b16 %v2184
        %v2336 = vpack.c.b16 %v2333, %v2332
        %v2337 = vpack.c.b16 %v2335, %v2334
        %2340 = vmatprep.subr.bf16.mxu0 0
        %2341 = vmatpush1.bf16.msra.mxu0 %v2336
        %2342 = vmatprep.subr.bf16.mxu0 0
        %2343 = vmatpush1.bf16.msra.mxu0 %v2337
        %2344 = vmatprep.subr.bf16.mxu0 0
        %2345 = vmatpush1.bf16.msra.mxu0 0
        %2346 = vmatprep.subr.bf16.mxu0 0
        %2347 = vmatpush1.bf16.msra.mxu0 0
        %2348 = vmatprep.subr.bf16.mxu0 0
        %2349 = vmatpush1.bf16.msra.mxu0 0
        %2350 = vmatprep.subr.bf16.mxu0 0
        %2351 = vmatpush1.bf16.msra.mxu0 0
        %2352 = vmatprep.subr.bf16.mxu0 0
        %2353 = vmatpush1.bf16.msra.mxu0 0
        %2354 = vmatprep.subr.bf16.mxu0 0
        %2355 = vmatpush1.bf16.msra.mxu0 0
        %2356 = vmatprep.subr.bf16.mxu0 0
        %2357 = vmatpush1.bf16.msra.mxu0 0
        %2358 = vmatprep.subr.bf16.mxu0 0
        %2359 = vmatpush1.bf16.msra.mxu0 0
        %2360 = vmatprep.subr.bf16.mxu0 0
        %2361 = vmatpush1.bf16.msra.mxu0 0
        %2362 = vmatprep.subr.bf16.mxu0 0
        %2363 = vmatpush1.bf16.msra.mxu0 0
        %2364 = vmatprep.subr.bf16.mxu0 0
        %2365 = vmatpush1.bf16.msra.mxu0 0
        %2366 = vmatprep.subr.bf16.mxu0 0
        %2367 = vmatpush1.bf16.msra.mxu0 0
        %2368 = vmatprep.subr.bf16.mxu0 0
        %2369 = vmatpush1.bf16.msra.mxu0 0
        %2370 = vmatprep.subr.bf16.mxu0 0
        %2371 = vmatpush1.bf16.msra.mxu0 0
        %2372 = vmatprep.mubr.bf16.mxu0 0
        %2373 = vmatmul.mubr.bf16.gmra.mrb[0].mxu0 %v2234
        %v2374 = vpop.f32.mrb[0].mxu0
        %v2375 = vadd.f32 0.0, %v2374
        %v2376 = vpop.f32.mrb[0].mxu0
        %v2377 = vpop.f32.mrb[0].mxu0
        %v2378 = vpop.f32.mrb[0].mxu0
        %2379 = vdwg.mxu0
        %v2384 = vunpack.c.l.b16 %v2185
        %v2385 = vunpack.c.l.b16 %v2186
        %v2386 = vunpack.c.l.b16 %v2187
        %v2387 = vunpack.c.l.b16 %v2188
        %v2388 = vpack.c.b16 %v2385, %v2384
        %v2389 = vpack.c.b16 %v2387, %v2386
        %2392 = vmatprep.subr.bf16.mxu0 0
        %2393 = vmatpush1.bf16.msra.mxu0 %v2388
        %2394 = vmatprep.subr.bf16.mxu0 0
        %2395 = vmatpush1.bf16.msra.mxu0 %v2389
        %2396 = vmatprep.subr.bf16.mxu0 0
        %2397 = vmatpush1.bf16.msra.mxu0 0
        %2398 = vmatprep.subr.bf16.mxu0 0
        %2399 = vmatpush1.bf16.msra.mxu0 0
        %2400 = vmatprep.subr.bf16.mxu0 0
        %2401 = vmatpush1.bf16.msra.mxu0 0
        %2402 = vmatprep.subr.bf16.mxu0 0
        %2403 = vmatpush1.bf16.msra.mxu0 0
        %2404 = vmatprep.subr.bf16.mxu0 0
        %2405 = vmatpush1.bf16.msra.mxu0 0
        %2406 = vmatprep.subr.bf16.mxu0 0
        %2407 = vmatpush1.bf16.msra.mxu0 0
        %2408 = vmatprep.subr.bf16.mxu0 0
        %2409 = vmatpush1.bf16.msra.mxu0 0
        %2410 = vmatprep.subr.bf16.mxu0 0
        %2411 = vmatpush1.bf16.msra.mxu0 0
        %2412 = vmatprep.subr.bf16.mxu0 0
        %2413 = vmatpush1.bf16.msra.mxu0 0
        %2414 = vmatprep.subr.bf16.mxu0 0
        %2415 = vmatpush1.bf16.msra.mxu0 0
        %2416 = vmatprep.subr.bf16.mxu0 0
        %2417 = vmatpush1.bf16.msra.mxu0 0
        %2418 = vmatprep.subr.bf16.mxu0 0
        %2419 = vmatpush1.bf16.msra.mxu0 0
        %2420 = vmatprep.subr.bf16.mxu0 0
        %2421 = vmatpush1.bf16.msra.mxu0 0
        %2422 = vmatprep.subr.bf16.mxu0 0
        %2423 = vmatpush1.bf16.msra.mxu0 0
        %2424 = vmatprep.mubr.bf16.mxu0 0
        %2425 = vmatmul.mubr.bf16.gmra.mrb[0].mxu0 %v2234
        %v2426 = vpop.f32.mrb[0].mxu0
        %v2427 = vadd.f32 0.0, %v2426
        %v2428 = vpop.f32.mrb[0].mxu0
        %v2429 = vpop.f32.mrb[0].mxu0
        %v2430 = vpop.f32.mrb[0].mxu0
        %2431 = vdwg.mxu0
        %v2436 = vunpack.c.l.b16 %v2189
        %v2437 = vunpack.c.l.b16 %v2190
        %v2438 = vunpack.c.l.b16 %v2191
        %v2439 = vunpack.c.l.b16 %v2192
        %v2440 = vpack.c.b16 %v2437, %v2436
        %v2441 = vpack.c.b16 %v2439, %v2438
        %2444 = vmatprep.subr.bf16.mxu0 0
        %2445 = vmatpush1.bf16.msra.mxu0 %v2440
        %2446 = vmatprep.subr.bf16.mxu0 0
        %2447 = vmatpush1.bf16.msra.mxu0 %v2441
        %2448 = vmatprep.subr.bf16.mxu0 0
        %2449 = vmatpush1.bf16.msra.mxu0 0
        %2450 = vmatprep.subr.bf16.mxu0 0
        %2451 = vmatpush1.bf16.msra.mxu0 0
        %2452 = vmatprep.subr.bf16.mxu0 0
        %2453 = vmatpush1.bf16.msra.mxu0 0
        %2454 = vmatprep.subr.bf16.mxu0 0
        %2455 = vmatpush1.bf16.msra.mxu0 0
        %2456 = vmatprep.subr.bf16.mxu0 0
        %2457 = vmatpush1.bf16.msra.mxu0 0
        %2458 = vmatprep.subr.bf16.mxu0 0
        %2459 = vmatpush1.bf16.msra.mxu0 0
        %2460 = vmatprep.subr.bf16.mxu0 0
        %2461 = vmatpush1.bf16.msra.mxu0 0
        %2462 = vmatprep.subr.bf16.mxu0 0
        %2463 = vmatpush1.bf16.msra.mxu0 0
        %2464 = vmatprep.subr.bf16.mxu0 0
        %2465 = vmatpush1.bf16.msra.mxu0 0
        %2466 = vmatprep.subr.bf16.mxu0 0
        %2467 = vmatpush1.bf16.msra.mxu0 0
        %2468 = vmatprep.subr.bf16.mxu0 0
        %2469 = vmatpush1.bf16.msra.mxu0 0
        %2470 = vmatprep.subr.bf16.mxu0 0
        %2471 = vmatpush1.bf16.msra.mxu0 0
        %2472 = vmatprep.subr.bf16.mxu0 0
        %2473 = vmatpush1.bf16.msra.mxu0 0
        %2474 = vmatprep.subr.bf16.mxu0 0
        %2475 = vmatpush1.bf16.msra.mxu0 0
        %2476 = vmatprep.mubr.bf16.mxu0 0
        %2477 = vmatmul.mubr.bf16.gmra.mrb[0].mxu0 %v2234
        %v2478 = vpop.f32.mrb[0].mxu0
        %v2479 = vadd.f32 0.0, %v2478
        %v2480 = vpop.f32.mrb[0].mxu0
        %v2481 = vpop.f32.mrb[0].mxu0
        %v2482 = vpop.f32.mrb[0].mxu0
        %2483 = vdwg.mxu0
        %v2488 = vunpack.c.l.b16 %v2193
        %v2489 = vunpack.c.l.b16 %v2194
        %v2490 = vunpack.c.l.b16 %v2195
        %v2491 = vunpack.c.l.b16 %v2196
        %v2492 = vpack.c.b16 %v2489, %v2488
        %v2493 = vpack.c.b16 %v2491, %v2490
        %2496 = vmatprep.subr.bf16.mxu0 0
        %2497 = vmatpush1.bf16.msra.mxu0 %v2492
        %2498 = vmatprep.subr.bf16.mxu0 0
        %2499 = vmatpush1.bf16.msra.mxu0 %v2493
        %2500 = vmatprep.subr.bf16.mxu0 0
        %2501 = vmatpush1.bf16.msra.mxu0 0
        %2502 = vmatprep.subr.bf16.mxu0 0
        %2503 = vmatpush1.bf16.msra.mxu0 0
        %2504 = vmatprep.subr.bf16.mxu0 0
        %2505 = vmatpush1.bf16.msra.mxu0 0
        %2506 = vmatprep.subr.bf16.mxu0 0
        %2507 = vmatpush1.bf16.msra.mxu0 0
        %2508 = vmatprep.subr.bf16.mxu0 0
        %2509 = vmatpush1.bf16.msra.mxu0 0
        %2510 = vmatprep.subr.bf16.mxu0 0
        %2511 = vmatpush1.bf16.msra.mxu0 0
        %2512 = vmatprep.subr.bf16.mxu0 0
        %2513 = vmatpush1.bf16.msra.mxu0 0
        %2514 = vmatprep.subr.bf16.mxu0 0
        %2515 = vmatpush1.bf16.msra.mxu0 0
        %2516 = vmatprep.subr.bf16.mxu0 0
        %2517 = vmatpush1.bf16.msra.mxu0 0
        %2518 = vmatprep.subr.bf16.mxu0 0
        %2519 = vmatpush1.bf16.msra.mxu0 0
        %2520 = vmatprep.subr.bf16.mxu0 0
        %2521 = vmatpush1.bf16.msra.mxu0 0
        %2522 = vmatprep.subr.bf16.mxu0 0
        %2523 = vmatpush1.bf16.msra.mxu0 0
        %2524 = vmatprep.subr.bf16.mxu0 0
        %2525 = vmatpush1.bf16.msra.mxu0 0
        %2526 = vmatprep.subr.bf16.mxu0 0
        %2527 = vmatpush1.bf16.msra.mxu0 0
        %2528 = vmatprep.mubr.bf16.mxu0 0
        %2529 = vmatmul.mubr.bf16.gmra.mrb[0].mxu0 %v2234
        %v2530 = vpop.f32.mrb[0].mxu0
        %v2531 = vadd.f32 0.0, %v2530
        %v2532 = vpop.f32.mrb[0].mxu0
        %v2533 = vpop.f32.mrb[0].mxu0
        %v2534 = vpop.f32.mrb[0].mxu0
        %2535 = vdwg.mxu0
        %v2540 = vunpack.c.l.b16 %v2197
        %v2541 = vunpack.c.l.b16 %v2198
        %v2542 = vunpack.c.l.b16 %v2199
        %v2543 = vunpack.c.l.b16 %v2200
        %v2544 = vpack.c.b16 %v2541, %v2540
        %v2545 = vpack.c.b16 %v2543, %v2542
        %2548 = vmatprep.subr.bf16.mxu0 0
        %2549 = vmatpush1.bf16.msra.mxu0 %v2544
        %2550 = vmatprep.subr.bf16.mxu0 0
        %2551 = vmatpush1.bf16.msra.mxu0 %v2545
        %2552 = vmatprep.subr.bf16.mxu0 0
        %2553 = vmatpush1.bf16.msra.mxu0 0
        %2554 = vmatprep.subr.bf16.mxu0 0
        %2555 = vmatpush1.bf16.msra.mxu0 0
        %2556 = vmatprep.subr.bf16.mxu0 0
        %2557 = vmatpush1.bf16.msra.mxu0 0
        %2558 = vmatprep.subr.bf16.mxu0 0
        %2559 = vmatpush1.bf16.msra.mxu0 0
        %2560 = vmatprep.subr.bf16.mxu0 0
        %2561 = vmatpush1.bf16.msra.mxu0 0
        %2562 = vmatprep.subr.bf16.mxu0 0
        %2563 = vmatpush1.bf16.msra.mxu0 0
        %2564 = vmatprep.subr.bf16.mxu0 0
        %2565 = vmatpush1.bf16.msra.mxu0 0
        %2566 = vmatprep.subr.bf16.mxu0 0
        %2567 = vmatpush1.bf16.msra.mxu0 0
        %2568 = vmatprep.subr.bf16.mxu0 0
        %2569 = vmatpush1.bf16.msra.mxu0 0
        %2570 = vmatprep.subr.bf16.mxu0 0
        %2571 = vmatpush1.bf16.msra.mxu0 0
        %2572 = vmatprep.subr.bf16.mxu0 0
        %2573 = vmatpush1.bf16.msra.mxu0 0
        %2574 = vmatprep.subr.bf16.mxu0 0
        %2575 = vmatpush1.bf16.msra.mxu0 0
        %2576 = vmatprep.subr.bf16.mxu0 0
        %2577 = vmatpush1.bf16.msra.mxu0 0
        %2578 = vmatprep.subr.bf16.mxu0 0
        %2579 = vmatpush1.bf16.msra.mxu0 0
        %2580 = vmatprep.mubr.bf16.mxu0 0
        %2581 = vmatmul.mubr.bf16.gmra.mrb[0].mxu0 %v2234
        %v2582 = vpop.f32.mrb[0].mxu0
        %v2583 = vadd.f32 0.0, %v2582
        %v2584 = vpop.f32.mrb[0].mxu0
        %v2585 = vpop.f32.mrb[0].mxu0
        %v2586 = vpop.f32.mrb[0].mxu0
        %2587 = vdwg.mxu0
        %v2592 = vunpack.c.l.b16 %v2201
        %v2593 = vunpack.c.l.b16 %v2202
        %v2594 = vunpack.c.l.b16 %v2203
        %v2595 = vunpack.c.l.b16 %v2204
        %v2596 = vpack.c.b16 %v2593, %v2592
        %v2597 = vpack.c.b16 %v2595, %v2594
        %2600 = vmatprep.subr.bf16.mxu0 0
        %2601 = vmatpush1.bf16.msra.mxu0 %v2596
        %2602 = vmatprep.subr.bf16.mxu0 0
        %2603 = vmatpush1.bf16.msra.mxu0 %v2597
        %2604 = vmatprep.subr.bf16.mxu0 0
        %2605 = vmatpush1.bf16.msra.mxu0 0
        %2606 = vmatprep.subr.bf16.mxu0 0
        %2607 = vmatpush1.bf16.msra.mxu0 0
        %2608 = vmatprep.subr.bf16.mxu0 0
        %2609 = vmatpush1.bf16.msra.mxu0 0
        %2610 = vmatprep.subr.bf16.mxu0 0
        %2611 = vmatpush1.bf16.msra.mxu0 0
        %2612 = vmatprep.subr.bf16.mxu0 0
        %2613 = vmatpush1.bf16.msra.mxu0 0
        %2614 = vmatprep.subr.bf16.mxu0 0
        %2615 = vmatpush1.bf16.msra.mxu0 0
        %2616 = vmatprep.subr.bf16.mxu0 0
        %2617 = vmatpush1.bf16.msra.mxu0 0
        %2618 = vmatprep.subr.bf16.mxu0 0
        %2619 = vmatpush1.bf16.msra.mxu0 0
        %2620 = vmatprep.subr.bf16.mxu0 0
        %2621 = vmatpush1.bf16.msra.mxu0 0
        %2622 = vmatprep.subr.bf16.mxu0 0
        %2623 = vmatpush1.bf16.msra.mxu0 0
        %2624 = vmatprep.subr.bf16.mxu0 0
        %2625 = vmatpush1.bf16.msra.mxu0 0
        %2626 = vmatprep.subr.bf16.mxu0 0
        %2627 = vmatpush1.bf16.msra.mxu0 0
        %2628 = vmatprep.subr.bf16.mxu0 0
        %2629 = vmatpush1.bf16.msra.mxu0 0
        %2630 = vmatprep.subr.bf16.mxu0 0
        %2631 = vmatpush1.bf16.msra.mxu0 0
        %2632 = vmatprep.mubr.bf16.mxu0 0
        %2633 = vmatmul.mubr.bf16.gmra.mrb[0].mxu0 %v2234
        %v2634 = vpop.f32.mrb[0].mxu0
        %v2635 = vadd.f32 0.0, %v2634
        %v2636 = vpop.f32.mrb[0].mxu0
        %v2637 = vpop.f32.mrb[0].mxu0
        %v2638 = vpop.f32.mrb[0].mxu0
        %2639 = vdwg.mxu0
        %v2644 = vunpack.c.l.b16 %v2205
        %v2645 = vunpack.c.l.b16 %v2206
        %v2646 = vunpack.c.l.b16 %v2207
        %v2647 = vunpack.c.l.b16 %v2208
        %v2648 = vpack.c.b16 %v2645, %v2644
        %v2649 = vpack.c.b16 %v2647, %v2646
        %2652 = vmatprep.subr.bf16.mxu0 0
        %2653 = vmatpush1.bf16.msra.mxu0 %v2648
        %2654 = vmatprep.subr.bf16.mxu0 0
        %2655 = vmatpush1.bf16.msra.mxu0 %v2649
        %2656 = vmatprep.subr.bf16.mxu0 0
        %2657 = vmatpush1.bf16.msra.mxu0 0
        %2658 = vmatprep.subr.bf16.mxu0 0
        %2659 = vmatpush1.bf16.msra.mxu0 0
        %2660 = vmatprep.subr.bf16.mxu0 0
        %2661 = vmatpush1.bf16.msra.mxu0 0
        %2662 = vmatprep.subr.bf16.mxu0 0
        %2663 = vmatpush1.bf16.msra.mxu0 0
        %2664 = vmatprep.subr.bf16.mxu0 0
        %2665 = vmatpush1.bf16.msra.mxu0 0
        %2666 = vmatprep.subr.bf16.mxu0 0
        %2667 = vmatpush1.bf16.msra.mxu0 0
        %2668 = vmatprep.subr.bf16.mxu0 0
        %2669 = vmatpush1.bf16.msra.mxu0 0
        %2670 = vmatprep.subr.bf16.mxu0 0
        %2671 = vmatpush1.bf16.msra.mxu0 0
        %2672 = vmatprep.subr.bf16.mxu0 0
        %2673 = vmatpush1.bf16.msra.mxu0 0
        %2674 = vmatprep.subr.bf16.mxu0 0
        %2675 = vmatpush1.bf16.msra.mxu0 0
        %2676 = vmatprep.subr.bf16.mxu0 0
        %2677 = vmatpush1.bf16.msra.mxu0 0
        %2678 = vmatprep.subr.bf16.mxu0 0
        %2679 = vmatpush1.bf16.msra.mxu0 0
        %2680 = vmatprep.subr.bf16.mxu0 0
        %2681 = vmatpush1.bf16.msra.mxu0 0
        %2682 = vmatprep.subr.bf16.mxu0 0
        %2683 = vmatpush1.bf16.msra.mxu0 0
        %2684 = vmatprep.mubr.bf16.mxu0 0
        %2685 = vmatmul.mubr.bf16.gmra.mrb[0].mxu0 %v2234
        %v2686 = vpop.f32.mrb[0].mxu0
        %v2687 = vadd.f32 0.0, %v2686
        %v2688 = vpop.f32.mrb[0].mxu0
        %v2689 = vpop.f32.mrb[0].mxu0
        %v2690 = vpop.f32.mrb[0].mxu0
        %2691 = vdwg.mxu0
        %v2696 = vunpack.c.l.b16 %v2209
        %v2697 = vunpack.c.l.b16 %v2210
        %v2698 = vunpack.c.l.b16 %v2211
        %v2699 = vunpack.c.l.b16 %v2212
        %v2700 = vpack.c.b16 %v2697, %v2696
        %v2701 = vpack.c.b16 %v2699, %v2698
        %2704 = vmatprep.subr.bf16.mxu0 0
        %2705 = vmatpush1.bf16.msra.mxu0 %v2700
        %2706 = vmatprep.subr.bf16.mxu0 0
        %2707 = vmatpush1.bf16.msra.mxu0 %v2701
        %2708 = vmatprep.subr.bf16.mxu0 0
        %2709 = vmatpush1.bf16.msra.mxu0 0
        %2710 = vmatprep.subr.bf16.mxu0 0
        %2711 = vmatpush1.bf16.msra.mxu0 0
        %2712 = vmatprep.subr.bf16.mxu0 0
        %2713 = vmatpush1.bf16.msra.mxu0 0
        %2714 = vmatprep.subr.bf16.mxu0 0
        %2715 = vmatpush1.bf16.msra.mxu0 0
        %2716 = vmatprep.subr.bf16.mxu0 0
        %2717 = vmatpush1.bf16.msra.mxu0 0
        %2718 = vmatprep.subr.bf16.mxu0 0
        %2719 = vmatpush1.bf16.msra.mxu0 0
        %2720 = vmatprep.subr.bf16.mxu0 0
        %2721 = vmatpush1.bf16.msra.mxu0 0
        %2722 = vmatprep.subr.bf16.mxu0 0
        %2723 = vmatpush1.bf16.msra.mxu0 0
        %2724 = vmatprep.subr.bf16.mxu0 0
        %2725 = vmatpush1.bf16.msra.mxu0 0
        %2726 = vmatprep.subr.bf16.mxu0 0
        %2727 = vmatpush1.bf16.msra.mxu0 0
        %2728 = vmatprep.subr.bf16.mxu0 0
        %2729 = vmatpush1.bf16.msra.mxu0 0
        %2730 = vmatprep.subr.bf16.mxu0 0
        %2731 = vmatpush1.bf16.msra.mxu0 0
        %2732 = vmatprep.subr.bf16.mxu0 0
        %2733 = vmatpush1.bf16.msra.mxu0 0
        %2734 = vmatprep.subr.bf16.mxu0 0
        %2735 = vmatpush1.bf16.msra.mxu0 0
        %2736 = vmatprep.mubr.bf16.mxu0 0
        %2737 = vmatmul.mubr.bf16.gmra.mrb[0].mxu0 %v2234
        %v2738 = vpop.f32.mrb[0].mxu0
        %v2739 = vadd.f32 0.0, %v2738
        %v2740 = vpop.f32.mrb[0].mxu0
        %v2741 = vpop.f32.mrb[0].mxu0
        %v2742 = vpop.f32.mrb[0].mxu0
        %2743 = vdwg.mxu0
        %v2748 = vunpack.c.l.b16 %v2213
        %v2749 = vunpack.c.l.b16 %v2214
        %v2750 = vunpack.c.l.b16 %v2215
        %v2751 = vunpack.c.l.b16 %v2216
        %v2752 = vpack.c.b16 %v2749, %v2748
        %v2753 = vpack.c.b16 %v2751, %v2750
        %2756 = vmatprep.subr.bf16.mxu0 0
        %2757 = vmatpush1.bf16.msra.mxu0 %v2752
        %2758 = vmatprep.subr.bf16.mxu0 0
        %2759 = vmatpush1.bf16.msra.mxu0 %v2753
        %2760 = vmatprep.subr.bf16.mxu0 0
        %2761 = vmatpush1.bf16.msra.mxu0 0
        %2762 = vmatprep.subr.bf16.mxu0 0
        %2763 = vmatpush1.bf16.msra.mxu0 0
        %2764 = vmatprep.subr.bf16.mxu0 0
        %2765 = vmatpush1.bf16.msra.mxu0 0
        %2766 = vmatprep.subr.bf16.mxu0 0
        %2767 = vmatpush1.bf16.msra.mxu0 0
        %2768 = vmatprep.subr.bf16.mxu0 0
        %2769 = vmatpush1.bf16.msra.mxu0 0
        %2770 = vmatprep.subr.bf16.mxu0 0
        %2771 = vmatpush1.bf16.msra.mxu0 0
        %2772 = vmatprep.subr.bf16.mxu0 0
        %2773 = vmatpush1.bf16.msra.mxu0 0
        %2774 = vmatprep.subr.bf16.mxu0 0
        %2775 = vmatpush1.bf16.msra.mxu0 0
        %2776 = vmatprep.subr.bf16.mxu0 0
        %2777 = vmatpush1.bf16.msra.mxu0 0
        %2778 = vmatprep.subr.bf16.mxu0 0
        %2779 = vmatpush1.bf16.msra.mxu0 0
        %2780 = vmatprep.subr.bf16.mxu0 0
        %2781 = vmatpush1.bf16.msra.mxu0 0
        %2782 = vmatprep.subr.bf16.mxu0 0
        %2783 = vmatpush1.bf16.msra.mxu0 0
        %2784 = vmatprep.subr.bf16.mxu0 0
        %2785 = vmatpush1.bf16.msra.mxu0 0
        %2786 = vmatprep.subr.bf16.mxu0 0
        %2787 = vmatpush1.bf16.msra.mxu0 0
        %2788 = vmatprep.mubr.bf16.mxu0 0
        %2789 = vmatmul.mubr.bf16.gmra.mrb[0].mxu0 %v2234
        %v2790 = vpop.f32.mrb[0].mxu0
        %v2791 = vadd.f32 0.0, %v2790
        %v2792 = vpop.f32.mrb[0].mxu0
        %v2793 = vpop.f32.mrb[0].mxu0
        %v2794 = vpop.f32.mrb[0].mxu0
        %2795 = vdwg.mxu0
        %v2800 = vunpack.c.l.b16 %v2217
        %v2801 = vunpack.c.l.b16 %v2218
        %v2802 = vunpack.c.l.b16 %v2219
        %v2803 = vunpack.c.l.b16 %v2220
        %v2804 = vpack.c.b16 %v2801, %v2800
        %v2805 = vpack.c.b16 %v2803, %v2802
        %2808 = vmatprep.subr.bf16.mxu0 0
        %2809 = vmatpush1.bf16.msra.mxu0 %v2804
        %2810 = vmatprep.subr.bf16.mxu0 0
        %2811 = vmatpush1.bf16.msra.mxu0 %v2805
        %2812 = vmatprep.subr.bf16.mxu0 0
        %2813 = vmatpush1.bf16.msra.mxu0 0
        %2814 = vmatprep.subr.bf16.mxu0 0
        %2815 = vmatpush1.bf16.msra.mxu0 0
        %2816 = vmatprep.subr.bf16.mxu0 0
        %2817 = vmatpush1.bf16.msra.mxu0 0
        %2818 = vmatprep.subr.bf16.mxu0 0
        %2819 = vmatpush1.bf16.msra.mxu0 0
        %2820 = vmatprep.subr.bf16.mxu0 0
        %2821 = vmatpush1.bf16.msra.mxu0 0
        %2822 = vmatprep.subr.bf16.mxu0 0
        %2823 = vmatpush1.bf16.msra.mxu0 0
        %2824 = vmatprep.subr.bf16.mxu0 0
        %2825 = vmatpush1.bf16.msra.mxu0 0
        %2826 = vmatprep.subr.bf16.mxu0 0
        %2827 = vmatpush1.bf16.msra.mxu0 0
        %2828 = vmatprep.subr.bf16.mxu0 0
        %2829 = vmatpush1.bf16.msra.mxu0 0
        %2830 = vmatprep.subr.bf16.mxu0 0
        %2831 = vmatpush1.bf16.msra.mxu0 0
        %2832 = vmatprep.subr.bf16.mxu0 0
        %2833 = vmatpush1.bf16.msra.mxu0 0
        %2834 = vmatprep.subr.bf16.mxu0 0
        %2835 = vmatpush1.bf16.msra.mxu0 0
        %2836 = vmatprep.subr.bf16.mxu0 0
        %2837 = vmatpush1.bf16.msra.mxu0 0
        %2838 = vmatprep.subr.bf16.mxu0 0
        %2839 = vmatpush1.bf16.msra.mxu0 0
        %2840 = vmatprep.mubr.bf16.mxu0 0
        %2841 = vmatmul.mubr.bf16.gmra.mrb[0].mxu0 %v2234
        %v2842 = vpop.f32.mrb[0].mxu0
        %v2843 = vadd.f32 0.0, %v2842
        %v2844 = vpop.f32.mrb[0].mxu0
        %v2845 = vpop.f32.mrb[0].mxu0
        %v2846 = vpop.f32.mrb[0].mxu0
        %2847 = vdwg.mxu0
        %v2848 = vpack.c.bf16 %v2271, %v2271
        %v2849 = vpack.c.bf16 %v2323, %v2323
        %v2850 = vpack.c.bf16 %v2375, %v2375
        %v2851 = vpack.c.bf16 %v2427, %v2427
        %v2852 = vpack.c.bf16 %v2479, %v2479
        %v2853 = vpack.c.bf16 %v2531, %v2531
        %v2854 = vpack.c.bf16 %v2583, %v2583
        %v2855 = vpack.c.bf16 %v2635, %v2635
        %v2856 = vpack.c.bf16 %v2687, %v2687
        %v2857 = vpack.c.bf16 %v2739, %v2739
        %v2858 = vpack.c.bf16 %v2791, %v2791
        %v2859 = vpack.c.bf16 %v2843, %v2843
        %v2861 = vsel %vm1304, %v2848, 0
        %v2864 = vsel %vm1304, %v2852, 0
        %2866 = vmatprep.subr.bf16.mxu0 0
        %2867 = vmatpush1.bf16.xpose.msra.mxu0 %v2864
        %2868 = vmatprep.subr.bf16.mxu0 0
        %2869 = vmatpush1.bf16.xpose.msra.mxu0 0
        %2870 = vmatprep.subr.bf16.mxu0 0
        %2871 = vmatpush1.bf16.xpose.msra.mxu0 0
        %2872 = vmatprep.subr.bf16.mxu0 0
        %2873 = vmatpush1.bf16.xpose.msra.mxu0 0
        %2874 = vmatprep.subr.bf16.mxu0 0
        %2875 = vmatpush1.bf16.xpose.msra.mxu0 0
        %2876 = vmatprep.subr.bf16.mxu0 0
        %2877 = vmatpush1.bf16.xpose.msra.mxu0 0
        %2878 = vmatprep.subr.bf16.mxu0 0
        %2879 = vmatpush1.bf16.xpose.msra.mxu0 0
        %2880 = vmatprep.subr.bf16.mxu0 0
        %2881 = vmatpush1.bf16.xpose.msra.mxu0 0
        %2882 = vmatprep.subr.bf16.mxu0 0
        %2883 = vmatpush1.bf16.xpose.msra.mxu0 0
        %2884 = vmatprep.subr.bf16.mxu0 0
        %2885 = vmatpush1.bf16.xpose.msra.mxu0 0
        %2886 = vmatprep.subr.bf16.mxu0 0
        %2887 = vmatpush1.bf16.xpose.msra.mxu0 0
        %2888 = vmatprep.subr.bf16.mxu0 0
        %2889 = vmatpush1.bf16.xpose.msra.mxu0 0
        %2890 = vmatprep.subr.bf16.mxu0 0
        %2891 = vmatpush1.bf16.xpose.msra.mxu0 0
        %2892 = vmatprep.subr.bf16.mxu0 0
        %2893 = vmatpush1.bf16.xpose.msra.mxu0 0
        %2894 = vmatprep.subr.bf16.mxu0 0
        %2895 = vmatpush1.bf16.xpose.msra.mxu0 0
        %2896 = vmatprep.subr.bf16.mxu0 0
        %2897 = vmatpush1.bf16.xpose.msra.mxu0 0
        %2898 = vmatprep.mubr.bf16.mxu0 0
        %2899 = vmatmul.mubr.bf16.gmra.mrb[0].mxu0 %v2861
        %v2900 = vpop.f32.mrb[0].mxu0
        %v2901 = vadd.f32 %v584, %v2900
        %v2902 = vpop.f32.mrb[0].mxu0
        %v2903 = vpop.f32.mrb[0].mxu0
        %v2904 = vpop.f32.mrb[0].mxu0
        %2905 = vdwg.mxu0
        %v2907 = vsel %vm1304, %v2849, 0
        %v2910 = vsel %vm1304, %v2853, 0
        %2912 = vmatprep.subr.bf16.mxu0 0
        %2913 = vmatpush1.bf16.xpose.msra.mxu0 %v2910
        %2914 = vmatprep.subr.bf16.mxu0 0
        %2915 = vmatpush1.bf16.xpose.msra.mxu0 0
        %2916 = vmatprep.subr.bf16.mxu0 0
        %2917 = vmatpush1.bf16.xpose.msra.mxu0 0
        %2918 = vmatprep.subr.bf16.mxu0 0
        %2919 = vmatpush1.bf16.xpose.msra.mxu0 0
        %2920 = vmatprep.subr.bf16.mxu0 0
        %2921 = vmatpush1.bf16.xpose.msra.mxu0 0
        %2922 = vmatprep.subr.bf16.mxu0 0
        %2923 = vmatpush1.bf16.xpose.msra.mxu0 0
        %2924 = vmatprep.subr.bf16.mxu0 0
        %2925 = vmatpush1.bf16.xpose.msra.mxu0 0
        %2926 = vmatprep.subr.bf16.mxu0 0
        %2927 = vmatpush1.bf16.xpose.msra.mxu0 0
        %2928 = vmatprep.subr.bf16.mxu0 0
        %2929 = vmatpush1.bf16.xpose.msra.mxu0 0
        %2930 = vmatprep.subr.bf16.mxu0 0
        %2931 = vmatpush1.bf16.xpose.msra.mxu0 0
        %2932 = vmatprep.subr.bf16.mxu0 0
        %2933 = vmatpush1.bf16.xpose.msra.mxu0 0
        %2934 = vmatprep.subr.bf16.mxu0 0
        %2935 = vmatpush1.bf16.xpose.msra.mxu0 0
        %2936 = vmatprep.subr.bf16.mxu0 0
        %2937 = vmatpush1.bf16.xpose.msra.mxu0 0
        %2938 = vmatprep.subr.bf16.mxu0 0
        %2939 = vmatpush1.bf16.xpose.msra.mxu0 0
        %2940 = vmatprep.subr.bf16.mxu0 0
        %2941 = vmatpush1.bf16.xpose.msra.mxu0 0
        %2942 = vmatprep.subr.bf16.mxu0 0
        %2943 = vmatpush1.bf16.xpose.msra.mxu0 0
        %2944 = vmatprep.mubr.bf16.mxu0 0
        %2945 = vmatmul.mubr.bf16.gmra.mrb[0].mxu0 %v2907
        %v2946 = vpop.f32.mrb[0].mxu0
        %v2947 = vadd.f32 %v584, %v2946
        %v2948 = vpop.f32.mrb[0].mxu0
        %v2949 = vpop.f32.mrb[0].mxu0
        %v2950 = vpop.f32.mrb[0].mxu0
        %2951 = vdwg.mxu0
        %v2953 = vsel %vm1304, %v2850, 0
        %v2956 = vsel %vm1304, %v2854, 0
        %2958 = vmatprep.subr.bf16.mxu0 0
        %2959 = vmatpush1.bf16.xpose.msra.mxu0 %v2956
        %2960 = vmatprep.subr.bf16.mxu0 0
        %2961 = vmatpush1.bf16.xpose.msra.mxu0 0
        %2962 = vmatprep.subr.bf16.mxu0 0
        %2963 = vmatpush1.bf16.xpose.msra.mxu0 0
        %2964 = vmatprep.subr.bf16.mxu0 0
        %2965 = vmatpush1.bf16.xpose.msra.mxu0 0
        %2966 = vmatprep.subr.bf16.mxu0 0
        %2967 = vmatpush1.bf16.xpose.msra.mxu0 0
        %2968 = vmatprep.subr.bf16.mxu0 0
        %2969 = vmatpush1.bf16.xpose.msra.mxu0 0
        %2970 = vmatprep.subr.bf16.mxu0 0
        %2971 = vmatpush1.bf16.xpose.msra.mxu0 0
        %2972 = vmatprep.subr.bf16.mxu0 0
        %2973 = vmatpush1.bf16.xpose.msra.mxu0 0
        %2974 = vmatprep.subr.bf16.mxu0 0
        %2975 = vmatpush1.bf16.xpose.msra.mxu0 0
        %2976 = vmatprep.subr.bf16.mxu0 0
        %2977 = vmatpush1.bf16.xpose.msra.mxu0 0
        %2978 = vmatprep.subr.bf16.mxu0 0
        %2979 = vmatpush1.bf16.xpose.msra.mxu0 0
        %2980 = vmatprep.subr.bf16.mxu0 0
        %2981 = vmatpush1.bf16.xpose.msra.mxu0 0
        %2982 = vmatprep.subr.bf16.mxu0 0
        %2983 = vmatpush1.bf16.xpose.msra.mxu0 0
        %2984 = vmatprep.subr.bf16.mxu0 0
        %2985 = vmatpush1.bf16.xpose.msra.mxu0 0
        %2986 = vmatprep.subr.bf16.mxu0 0
        %2987 = vmatpush1.bf16.xpose.msra.mxu0 0
        %2988 = vmatprep.subr.bf16.mxu0 0
        %2989 = vmatpush1.bf16.xpose.msra.mxu0 0
        %2990 = vmatprep.mubr.bf16.mxu0 0
        %2991 = vmatmul.mubr.bf16.gmra.mrb[0].mxu0 %v2953
        %v2992 = vpop.f32.mrb[0].mxu0
        %v2993 = vadd.f32 %v584, %v2992
        %v2994 = vpop.f32.mrb[0].mxu0
        %v2995 = vpop.f32.mrb[0].mxu0
        %v2996 = vpop.f32.mrb[0].mxu0
        %2997 = vdwg.mxu0
        %v2999 = vsel %vm1304, %v2851, 0
        %v3002 = vsel %vm1304, %v2855, 0
        %3004 = vmatprep.subr.bf16.mxu0 0
        %3005 = vmatpush1.bf16.xpose.msra.mxu0 %v3002
        %3006 = vmatprep.subr.bf16.mxu0 0
        %3007 = vmatpush1.bf16.xpose.msra.mxu0 0
        %3008 = vmatprep.subr.bf16.mxu0 0
        %3009 = vmatpush1.bf16.xpose.msra.mxu0 0
        %3010 = vmatprep.subr.bf16.mxu0 0
        %3011 = vmatpush1.bf16.xpose.msra.mxu0 0
        %3012 = vmatprep.subr.bf16.mxu0 0
        %3013 = vmatpush1.bf16.xpose.msra.mxu0 0
        %3014 = vmatprep.subr.bf16.mxu0 0
        %3015 = vmatpush1.bf16.xpose.msra.mxu0 0
        %3016 = vmatprep.subr.bf16.mxu0 0
        %3017 = vmatpush1.bf16.xpose.msra.mxu0 0
        %3018 = vmatprep.subr.bf16.mxu0 0
        %3019 = vmatpush1.bf16.xpose.msra.mxu0 0
        %3020 = vmatprep.subr.bf16.mxu0 0
        %3021 = vmatpush1.bf16.xpose.msra.mxu0 0
        %3022 = vmatprep.subr.bf16.mxu0 0
        %3023 = vmatpush1.bf16.xpose.msra.mxu0 0
        %3024 = vmatprep.subr.bf16.mxu0 0
        %3025 = vmatpush1.bf16.xpose.msra.mxu0 0
        %3026 = vmatprep.subr.bf16.mxu0 0
        %3027 = vmatpush1.bf16.xpose.msra.mxu0 0
        %3028 = vmatprep.subr.bf16.mxu0 0
        %3029 = vmatpush1.bf16.xpose.msra.mxu0 0
        %3030 = vmatprep.subr.bf16.mxu0 0
        %3031 = vmatpush1.bf16.xpose.msra.mxu0 0
        %3032 = vmatprep.subr.bf16.mxu0 0
        %3033 = vmatpush1.bf16.xpose.msra.mxu0 0
        %3034 = vmatprep.subr.bf16.mxu0 0
        %3035 = vmatpush1.bf16.xpose.msra.mxu0 0
        %3036 = vmatprep.mubr.bf16.mxu0 0
        %3037 = vmatmul.mubr.bf16.gmra.mrb[0].mxu0 %v2999
        %v3038 = vpop.f32.mrb[0].mxu0
        %v3039 = vadd.f32 %v584, %v3038
        %v3040 = vpop.f32.mrb[0].mxu0
        %v3041 = vpop.f32.mrb[0].mxu0
        %v3042 = vpop.f32.mrb[0].mxu0
        %3043 = vdwg.mxu0
        %v3044 = vsel %vm1304, %v2901, -inf
        %3045 = vmax.xlane.f32.xlu0 %v3044
        %v3046 = vpop.xlane.xlu0 %3045
        %v3047 = vsel %vm1304, %v2947, -inf
        %3048 = vmax.xlane.f32.xlu0 %v3047
        %v3049 = vpop.xlane.xlu0 %3048
        %v3050 = vsel %vm1304, %v2993, -inf
        %3051 = vmax.xlane.f32.xlu0 %v3050
        %v3052 = vpop.xlane.xlu0 %3051
        %v3053 = vsel %vm1304, %v3039, -inf
        %3054 = vmax.xlane.f32.xlu0 %v3053
        %v3055 = vpop.xlane.xlu0 %3054
        %v3056 = vsub.f32 %v2901, %v3046
        %v3057 = vsub.f32 %v2947, %v3049
        %v3058 = vsub.f32 %v2993, %v3052
        %v3059 = vsub.f32 %v3039, %v3055
        %v3060 = vmul.f32 %v3056, 1.442695
        %v3061 = vpow.pop %v3060
        %v3062 = vmul.f32 %v3057, 1.442695
        %v3063 = vpow.pop %v3062
        %v3064 = vmul.f32 %v3058, 1.442695
        %v3065 = vpow.pop %v3064
        %v3066 = vmul.f32 %v3059, 1.442695
        %v3067 = vpow.pop %v3066
        %v3068 = vsel %vm1304, %v3061, 0.0
        %3069 = vadd.xlane.f32.xlu0 %v3068
        %v3070 = vpop.xlane.xlu0 %3069
        %v3071 = vsel %vm1304, %v3063, 0.0
        %3072 = vadd.xlane.f32.xlu0 %v3071
        %v3073 = vpop.xlane.xlu0 %3072
        %v3074 = vsel %vm1304, %v3065, 0.0
        %3075 = vadd.xlane.f32.xlu0 %v3074
        %v3076 = vpop.xlane.xlu0 %3075
        %v3077 = vsel %vm1304, %v3067, 0.0
        %3078 = vadd.xlane.f32.xlu0 %v3077
        %v3079 = vpop.xlane.xlu0 %3078
        %v3080 = vrcp.pop %v3070
        %v3081 = vrcp.pop %v3073
        %v3082 = vrcp.pop %v3076
        %v3083 = vrcp.pop %v3079
        %v3084 = vmul.f32 %v3061, %v3080
        %v3085 = vmul.f32 %v3063, %v3081
        %v3086 = vmul.f32 %v3065, %v3082
        %v3087 = vmul.f32 %v3067, %v3083
        %v3088 = vpack.c.bf16 %v3084, %v3084
        %v3089 = vpack.c.bf16 %v3085, %v3085
        %v3090 = vpack.c.bf16 %v3086, %v3086
        %v3091 = vpack.c.bf16 %v3087, %v3087
        %v3093 = vsel %vm1304, %v3088, 0
        %v3096 = vsel %vm1540, %v2856, 0
        %3098 = vmatprep.subr.bf16.mxu0 0
        %3099 = vmatpush1.bf16.msra.mxu0 %v3096
        %3100 = vmatprep.subr.bf16.mxu0 0
        %3101 = vmatpush1.bf16.msra.mxu0 0
        %3102 = vmatprep.subr.bf16.mxu0 0
        %3103 = vmatpush1.bf16.msra.mxu0 0
        %3104 = vmatprep.subr.bf16.mxu0 0
        %3105 = vmatpush1.bf16.msra.mxu0 0
        %3106 = vmatprep.subr.bf16.mxu0 0
        %3107 = vmatpush1.bf16.msra.mxu0 0
        %3108 = vmatprep.subr.bf16.mxu0 0
        %3109 = vmatpush1.bf16.msra.mxu0 0
        %3110 = vmatprep.subr.bf16.mxu0 0
        %3111 = vmatpush1.bf16.msra.mxu0 0
        %3112 = vmatprep.subr.bf16.mxu0 0
        %3113 = vmatpush1.bf16.msra.mxu0 0
        %3114 = vmatprep.subr.bf16.mxu0 0
        %3115 = vmatpush1.bf16.msra.mxu0 0
        %3116 = vmatprep.subr.bf16.mxu0 0
        %3117 = vmatpush1.bf16.msra.mxu0 0
        %3118 = vmatprep.subr.bf16.mxu0 0
        %3119 = vmatpush1.bf16.msra.mxu0 0
        %3120 = vmatprep.subr.bf16.mxu0 0
        %3121 = vmatpush1.bf16.msra.mxu0 0
        %3122 = vmatprep.subr.bf16.mxu0 0
        %3123 = vmatpush1.bf16.msra.mxu0 0
        %3124 = vmatprep.subr.bf16.mxu0 0
        %3125 = vmatpush1.bf16.msra.mxu0 0
        %3126 = vmatprep.subr.bf16.mxu0 0
        %3127 = vmatpush1.bf16.msra.mxu0 0
        %3128 = vmatprep.subr.bf16.mxu0 0
        %3129 = vmatpush1.bf16.msra.mxu0 0
        %3130 = vmatprep.mubr.bf16.mxu0 0
        %3131 = vmatmul.mubr.bf16.gmra.mrb[0].mxu0 %v3093
        %v3132 = vpop.f32.mrb[0].mxu0
        %v3133 = vadd.f32 0.0, %v3132
        %v3134 = vpop.f32.mrb[0].mxu0
        %v3135 = vpop.f32.mrb[0].mxu0
        %v3136 = vpop.f32.mrb[0].mxu0
        %3137 = vdwg.mxu0
        %v3139 = vsel %vm1304, %v3089, 0
        %v3142 = vsel %vm1540, %v2857, 0
        %3144 = vmatprep.subr.bf16.mxu0 0
        %3145 = vmatpush1.bf16.msra.mxu0 %v3142
        %3146 = vmatprep.subr.bf16.mxu0 0
        %3147 = vmatpush1.bf16.msra.mxu0 0
        %3148 = vmatprep.subr.bf16.mxu0 0
        %3149 = vmatpush1.bf16.msra.mxu0 0
        %3150 = vmatprep.subr.bf16.mxu0 0
        %3151 = vmatpush1.bf16.msra.mxu0 0
        %3152 = vmatprep.subr.bf16.mxu0 0
        %3153 = vmatpush1.bf16.msra.mxu0 0
        %3154 = vmatprep.subr.bf16.mxu0 0
        %3155 = vmatpush1.bf16.msra.mxu0 0
        %3156 = vmatprep.subr.bf16.mxu0 0
        %3157 = vmatpush1.bf16.msra.mxu0 0
        %3158 = vmatprep.subr.bf16.mxu0 0
        %3159 = vmatpush1.bf16.msra.mxu0 0
        %3160 = vmatprep.subr.bf16.mxu0 0
        %3161 = vmatpush1.bf16.msra.mxu0 0
        %3162 = vmatprep.subr.bf16.mxu0 0
        %3163 = vmatpush1.bf16.msra.mxu0 0
        %3164 = vmatprep.subr.bf16.mxu0 0
        %3165 = vmatpush1.bf16.msra.mxu0 0
        %3166 = vmatprep.subr.bf16.mxu0 0
        %3167 = vmatpush1.bf16.msra.mxu0 0
        %3168 = vmatprep.subr.bf16.mxu0 0
        %3169 = vmatpush1.bf16.msra.mxu0 0
        %3170 = vmatprep.subr.bf16.mxu0 0
        %3171 = vmatpush1.bf16.msra.mxu0 0
        %3172 = vmatprep.subr.bf16.mxu0 0
        %3173 = vmatpush1.bf16.msra.mxu0 0
        %3174 = vmatprep.subr.bf16.mxu0 0
        %3175 = vmatpush1.bf16.msra.mxu0 0
        %3176 = vmatprep.mubr.bf16.mxu0 0
        %3177 = vmatmul.mubr.bf16.gmra.mrb[0].mxu0 %v3139
        %v3178 = vpop.f32.mrb[0].mxu0
        %v3179 = vadd.f32 0.0, %v3178
        %v3180 = vpop.f32.mrb[0].mxu0
        %v3181 = vpop.f32.mrb[0].mxu0
        %v3182 = vpop.f32.mrb[0].mxu0
        %3183 = vdwg.mxu0
        %v3185 = vsel %vm1304, %v3090, 0
        %v3188 = vsel %vm1540, %v2858, 0
        %3190 = vmatprep.subr.bf16.mxu0 0
        %3191 = vmatpush1.bf16.msra.mxu0 %v3188
        %3192 = vmatprep.subr.bf16.mxu0 0
        %3193 = vmatpush1.bf16.msra.mxu0 0
        %3194 = vmatprep.subr.bf16.mxu0 0
        %3195 = vmatpush1.bf16.msra.mxu0 0
        %3196 = vmatprep.subr.bf16.mxu0 0
        %3197 = vmatpush1.bf16.msra.mxu0 0
        %3198 = vmatprep.subr.bf16.mxu0 0
        %3199 = vmatpush1.bf16.msra.mxu0 0
        %3200 = vmatprep.subr.bf16.mxu0 0
        %3201 = vmatpush1.bf16.msra.mxu0 0
        %3202 = vmatprep.subr.bf16.mxu0 0
        %3203 = vmatpush1.bf16.msra.mxu0 0
        %3204 = vmatprep.subr.bf16.mxu0 0
        %3205 = vmatpush1.bf16.msra.mxu0 0
        %3206 = vmatprep.subr.bf16.mxu0 0
        %3207 = vmatpush1.bf16.msra.mxu0 0
        %3208 = vmatprep.subr.bf16.mxu0 0
        %3209 = vmatpush1.bf16.msra.mxu0 0
        %3210 = vmatprep.subr.bf16.mxu0 0
        %3211 = vmatpush1.bf16.msra.mxu0 0
        %3212 = vmatprep.subr.bf16.mxu0 0
        %3213 = vmatpush1.bf16.msra.mxu0 0
        %3214 = vmatprep.subr.bf16.mxu0 0
        %3215 = vmatpush1.bf16.msra.mxu0 0
        %3216 = vmatprep.subr.bf16.mxu0 0
        %3217 = vmatpush1.bf16.msra.mxu0 0
        %3218 = vmatprep.subr.bf16.mxu0 0
        %3219 = vmatpush1.bf16.msra.mxu0 0
        %3220 = vmatprep.subr.bf16.mxu0 0
        %3221 = vmatpush1.bf16.msra.mxu0 0
        %3222 = vmatprep.mubr.bf16.mxu0 0
        %3223 = vmatmul.mubr.bf16.gmra.mrb[0].mxu0 %v3185
        %v3224 = vpop.f32.mrb[0].mxu0
        %v3225 = vadd.f32 0.0, %v3224
        %v3226 = vpop.f32.mrb[0].mxu0
        %v3227 = vpop.f32.mrb[0].mxu0
        %v3228 = vpop.f32.mrb[0].mxu0
        %3229 = vdwg.mxu0
        %v3231 = vsel %vm1304, %v3091, 0
        %v3234 = vsel %vm1540, %v2859, 0
        %3236 = vmatprep.subr.bf16.mxu0 0
        %3237 = vmatpush1.bf16.msra.mxu0 %v3234
        %3238 = vmatprep.subr.bf16.mxu0 0
        %3239 = vmatpush1.bf16.msra.mxu0 0
        %3240 = vmatprep.subr.bf16.mxu0 0
        %3241 = vmatpush1.bf16.msra.mxu0 0
        %3242 = vmatprep.subr.bf16.mxu0 0
        %3243 = vmatpush1.bf16.msra.mxu0 0
        %3244 = vmatprep.subr.bf16.mxu0 0
        %3245 = vmatpush1.bf16.msra.mxu0 0
        %3246 = vmatprep.subr.bf16.mxu0 0
        %3247 = vmatpush1.bf16.msra.mxu0 0
        %3248 = vmatprep.subr.bf16.mxu0 0
        %3249 = vmatpush1.bf16.msra.mxu0 0
        %3250 = vmatprep.subr.bf16.mxu0 0
        %3251 = vmatpush1.bf16.msra.mxu0 0
        %3252 = vmatprep.subr.bf16.mxu0 0
        %3253 = vmatpush1.bf16.msra.mxu0 0
        %3254 = vmatprep.subr.bf16.mxu0 0
        %3255 = vmatpush1.bf16.msra.mxu0 0
        %3256 = vmatprep.subr.bf16.mxu0 0
        %3257 = vmatpush1.bf16.msra.mxu0 0
        %3258 = vmatprep.subr.bf16.mxu0 0
        %3259 = vmatpush1.bf16.msra.mxu0 0
        %3260 = vmatprep.subr.bf16.mxu0 0
        %3261 = vmatpush1.bf16.msra.mxu0 0
        %3262 = vmatprep.subr.bf16.mxu0 0
        %3263 = vmatpush1.bf16.msra.mxu0 0
        %3264 = vmatprep.subr.bf16.mxu0 0
        %3265 = vmatpush1.bf16.msra.mxu0 0
        %3266 = vmatprep.subr.bf16.mxu0 0
        %3267 = vmatpush1.bf16.msra.mxu0 0
        %3268 = vmatprep.mubr.bf16.mxu0 0
        %3269 = vmatmul.mubr.bf16.gmra.mrb[0].mxu0 %v3231
        %v3270 = vpop.f32.mrb[0].mxu0
        %v3271 = vadd.f32 0.0, %v3270
        %v3272 = vpop.f32.mrb[0].mxu0
        %v3273 = vpop.f32.mrb[0].mxu0
        %v3274 = vpop.f32.mrb[0].mxu0
        %3275 = vdwg.mxu0
        %v3276 = vpack.c.bf16 %v3133, %v3133
        %v3277 = vpack.c.bf16 %v3179, %v3179
        %v3278 = vpack.c.bf16 %v3225, %v3225
        %v3279 = vpack.c.bf16 %v3271, %v3271
        %s3280 = scalar_lea.vmem %s6, 16
        %v3281 = vld [vmem:[%s3280] sm:$0xf]
        %v3282 = vld [vmem:[%s3280 + $0x4] sm:$0xf]
        %v3283 = vld [vmem:[%s3280 + $0x8] sm:$0xf]
        %v3284 = vld [vmem:[%s3280 + $0xc] sm:$0xf]
        %v3286 = vsel %vm1304, %v3276, 0
        %v3289 = vsel %vm1540, %v3281, 0
        %3291 = vmatprep.subr.bf16.mxu0 0
        %3292 = vmatpush1.bf16.msra.mxu0 %v3289
        %3293 = vmatprep.subr.bf16.mxu0 0
        %3294 = vmatpush1.bf16.msra.mxu0 0
        %3295 = vmatprep.subr.bf16.mxu0 0
        %3296 = vmatpush1.bf16.msra.mxu0 0
        %3297 = vmatprep.subr.bf16.mxu0 0
        %3298 = vmatpush1.bf16.msra.mxu0 0
        %3299 = vmatprep.subr.bf16.mxu0 0
        %3300 = vmatpush1.bf16.msra.mxu0 0
        %3301 = vmatprep.subr.bf16.mxu0 0
        %3302 = vmatpush1.bf16.msra.mxu0 0
        %3303 = vmatprep.subr.bf16.mxu0 0
        %3304 = vmatpush1.bf16.msra.mxu0 0
        %3305 = vmatprep.subr.bf16.mxu0 0
        %3306 = vmatpush1.bf16.msra.mxu0 0
        %3307 = vmatprep.subr.bf16.mxu0 0
        %3308 = vmatpush1.bf16.msra.mxu0 0
        %3309 = vmatprep.subr.bf16.mxu0 0
        %3310 = vmatpush1.bf16.msra.mxu0 0
        %3311 = vmatprep.subr.bf16.mxu0 0
        %3312 = vmatpush1.bf16.msra.mxu0 0
        %3313 = vmatprep.subr.bf16.mxu0 0
        %3314 = vmatpush1.bf16.msra.mxu0 0
        %3315 = vmatprep.subr.bf16.mxu0 0
        %3316 = vmatpush1.bf16.msra.mxu0 0
        %3317 = vmatprep.subr.bf16.mxu0 0
        %3318 = vmatpush1.bf16.msra.mxu0 0
        %3319 = vmatprep.subr.bf16.mxu0 0
        %3320 = vmatpush1.bf16.msra.mxu0 0
        %3321 = vmatprep.subr.bf16.mxu0 0
        %3322 = vmatpush1.bf16.msra.mxu0 0
        %3323 = vmatprep.mubr.bf16.mxu0 0
        %3324 = vmatmul.mubr.bf16.gmra.mrb[0].mxu0 %v3286
        %v3325 = vpop.f32.mrb[0].mxu0
        %v3326 = vadd.f32 0.0, %v3325
        %v3327 = vpop.f32.mrb[0].mxu0
        %v3328 = vpop.f32.mrb[0].mxu0
        %v3329 = vpop.f32.mrb[0].mxu0
        %3330 = vdwg.mxu0
        %v3332 = vsel %vm1304, %v3277, 0
        %v3335 = vsel %vm1540, %v3282, 0
        %3337 = vmatprep.subr.bf16.mxu0 0
        %3338 = vmatpush1.bf16.msra.mxu0 %v3335
        %3339 = vmatprep.subr.bf16.mxu0 0
        %3340 = vmatpush1.bf16.msra.mxu0 0
        %3341 = vmatprep.subr.bf16.mxu0 0
        %3342 = vmatpush1.bf16.msra.mxu0 0
        %3343 = vmatprep.subr.bf16.mxu0 0
        %3344 = vmatpush1.bf16.msra.mxu0 0
        %3345 = vmatprep.subr.bf16.mxu0 0
        %3346 = vmatpush1.bf16.msra.mxu0 0
        %3347 = vmatprep.subr.bf16.mxu0 0
        %3348 = vmatpush1.bf16.msra.mxu0 0
        %3349 = vmatprep.subr.bf16.mxu0 0
        %3350 = vmatpush1.bf16.msra.mxu0 0
        %3351 = vmatprep.subr.bf16.mxu0 0
        %3352 = vmatpush1.bf16.msra.mxu0 0
        %3353 = vmatprep.subr.bf16.mxu0 0
        %3354 = vmatpush1.bf16.msra.mxu0 0
        %3355 = vmatprep.subr.bf16.mxu0 0
        %3356 = vmatpush1.bf16.msra.mxu0 0
        %3357 = vmatprep.subr.bf16.mxu0 0
        %3358 = vmatpush1.bf16.msra.mxu0 0
        %3359 = vmatprep.subr.bf16.mxu0 0
        %3360 = vmatpush1.bf16.msra.mxu0 0
        %3361 = vmatprep.subr.bf16.mxu0 0
        %3362 = vmatpush1.bf16.msra.mxu0 0
        %3363 = vmatprep.subr.bf16.mxu0 0
        %3364 = vmatpush1.bf16.msra.mxu0 0
        %3365 = vmatprep.subr.bf16.mxu0 0
        %3366 = vmatpush1.bf16.msra.mxu0 0
        %3367 = vmatprep.subr.bf16.mxu0 0
        %3368 = vmatpush1.bf16.msra.mxu0 0
        %3369 = vmatprep.mubr.bf16.mxu0 0
        %3370 = vmatmul.mubr.bf16.gmra.mrb[0].mxu0 %v3332
        %v3371 = vpop.f32.mrb[0].mxu0
        %v3372 = vadd.f32 0.0, %v3371
        %v3373 = vpop.f32.mrb[0].mxu0
        %v3374 = vpop.f32.mrb[0].mxu0
        %v3375 = vpop.f32.mrb[0].mxu0
        %3376 = vdwg.mxu0
        %v3378 = vsel %vm1304, %v3278, 0
        %v3381 = vsel %vm1540, %v3283, 0
        %3383 = vmatprep.subr.bf16.mxu0 0
        %3384 = vmatpush1.bf16.msra.mxu0 %v3381
        %3385 = vmatprep.subr.bf16.mxu0 0
        %3386 = vmatpush1.bf16.msra.mxu0 0
        %3387 = vmatprep.subr.bf16.mxu0 0
        %3388 = vmatpush1.bf16.msra.mxu0 0
        %3389 = vmatprep.subr.bf16.mxu0 0
        %3390 = vmatpush1.bf16.msra.mxu0 0
        %3391 = vmatprep.subr.bf16.mxu0 0
        %3392 = vmatpush1.bf16.msra.mxu0 0
        %3393 = vmatprep.subr.bf16.mxu0 0
        %3394 = vmatpush1.bf16.msra.mxu0 0
        %3395 = vmatprep.subr.bf16.mxu0 0
        %3396 = vmatpush1.bf16.msra.mxu0 0
        %3397 = vmatprep.subr.bf16.mxu0 0
        %3398 = vmatpush1.bf16.msra.mxu0 0
        %3399 = vmatprep.subr.bf16.mxu0 0
        %3400 = vmatpush1.bf16.msra.mxu0 0
        %3401 = vmatprep.subr.bf16.mxu0 0
        %3402 = vmatpush1.bf16.msra.mxu0 0
        %3403 = vmatprep.subr.bf16.mxu0 0
        %3404 = vmatpush1.bf16.msra.mxu0 0
        %3405 = vmatprep.subr.bf16.mxu0 0
        %3406 = vmatpush1.bf16.msra.mxu0 0
        %3407 = vmatprep.subr.bf16.mxu0 0
        %3408 = vmatpush1.bf16.msra.mxu0 0
        %3409 = vmatprep.subr.bf16.mxu0 0
        %3410 = vmatpush1.bf16.msra.mxu0 0
        %3411 = vmatprep.subr.bf16.mxu0 0
        %3412 = vmatpush1.bf16.msra.mxu0 0
        %3413 = vmatprep.subr.bf16.mxu0 0
        %3414 = vmatpush1.bf16.msra.mxu0 0
        %3415 = vmatprep.mubr.bf16.mxu0 0
        %3416 = vmatmul.mubr.bf16.gmra.mrb[0].mxu0 %v3378
        %v3417 = vpop.f32.mrb[0].mxu0
        %v3418 = vadd.f32 0.0, %v3417
        %v3419 = vpop.f32.mrb[0].mxu0
        %v3420 = vpop.f32.mrb[0].mxu0
        %v3421 = vpop.f32.mrb[0].mxu0
        %3422 = vdwg.mxu0
        %v3424 = vsel %vm1304, %v3279, 0
        %v3427 = vsel %vm1540, %v3284, 0
        %3429 = vmatprep.subr.bf16.mxu0 0
        %3430 = vmatpush1.bf16.msra.mxu0 %v3427
        %3431 = vmatprep.subr.bf16.mxu0 0
        %3432 = vmatpush1.bf16.msra.mxu0 0
        %3433 = vmatprep.subr.bf16.mxu0 0
        %3434 = vmatpush1.bf16.msra.mxu0 0
        %3435 = vmatprep.subr.bf16.mxu0 0
        %3436 = vmatpush1.bf16.msra.mxu0 0
        %3437 = vmatprep.subr.bf16.mxu0 0
        %3438 = vmatpush1.bf16.msra.mxu0 0
        %3439 = vmatprep.subr.bf16.mxu0 0
        %3440 = vmatpush1.bf16.msra.mxu0 0
        %3441 = vmatprep.subr.bf16.mxu0 0
        %3442 = vmatpush1.bf16.msra.mxu0 0
        %3443 = vmatprep.subr.bf16.mxu0 0
        %3444 = vmatpush1.bf16.msra.mxu0 0
        %3445 = vmatprep.subr.bf16.mxu0 0
        %3446 = vmatpush1.bf16.msra.mxu0 0
        %3447 = vmatprep.subr.bf16.mxu0 0
        %3448 = vmatpush1.bf16.msra.mxu0 0
        %3449 = vmatprep.subr.bf16.mxu0 0
        %3450 = vmatpush1.bf16.msra.mxu0 0
        %3451 = vmatprep.subr.bf16.mxu0 0
        %3452 = vmatpush1.bf16.msra.mxu0 0
        %3453 = vmatprep.subr.bf16.mxu0 0
        %3454 = vmatpush1.bf16.msra.mxu0 0
        %3455 = vmatprep.subr.bf16.mxu0 0
        %3456 = vmatpush1.bf16.msra.mxu0 0
        %3457 = vmatprep.subr.bf16.mxu0 0
        %3458 = vmatpush1.bf16.msra.mxu0 0
        %3459 = vmatprep.subr.bf16.mxu0 0
        %3460 = vmatpush1.bf16.msra.mxu0 0
        %3461 = vmatprep.mubr.bf16.mxu0 0
        %3462 = vmatmul.mubr.bf16.gmra.mrb[0].mxu0 %v3424
        %v3463 = vpop.f32.mrb[0].mxu0
        %v3464 = vadd.f32 0.0, %v3463
        %v3465 = vpop.f32.mrb[0].mxu0
        %v3466 = vpop.f32.mrb[0].mxu0
        %v3467 = vpop.f32.mrb[0].mxu0
        %3468 = vdwg.mxu0
        %v3469 = vsel %vm587, %v3326, 0.0
        %v3470 = vsel %vm587, %v3372, 0.0
        %v3471 = vadd.f32 %v3469, %v3470
        %v3472 = vsel %vm587, %v3418, 0.0
        %v3473 = vadd.f32 %v3471, %v3472
        %v3474 = vsel %vm587, %v3464, 0.0
        %v3475 = vadd.f32 %v3473, %v3474
        %v3476 = vadd.f32 %v2139, %v3475
        %s3477 = scalar_lea.vmem %s7, 1
        %v3478 = vld [vmem:[%s3477] sm:$0x1]
        %v3480 = vlaneseq
        %v3481 = vshrl.u32 %v3480, 7
        %v3482 = vsub.s32 0, %v3481
        %v3483 = vrot.slane %v3478, %v3482
        %v3485 = vadd.f32 %v3476, %v3483
        %s3486 = scalar_lea.vmem %s8, 1
        %v3487 = vld [vmem:[%s3486] sm:$0x1]
        %s3488 = scalar_lea.vmem %s9, 1
        %v3489 = vld [vmem:[%s3488] sm:$0x1]
        %v3490 = vsel %vm587, %v3485, 0.0
        %3491 = vadd.xlane.f32.xlu0 %v3490
        %v3492 = vpop.xlane.xlu0 %3491
        %v3493 = vmul.f32 %v3492, %v591
        %v3494 = vsub.f32 %v3485, %v3493
        %v3495 = vmul.f32 %v3494, %v3494
        %v3496 = vsel %vm587, %v3495, 0.0
        %3497 = vadd.xlane.f32.xlu0 %v3496
        %v3498 = vpop.xlane.xlu0 %3497
        %v3499 = vmul.f32 %v3498, %v591
        %v3500 = vadd.f32 %v3499, 1e-05
        %v3501 = vrsqrt.pop %v3500
        %v3502 = vmul.f32 %v3494, %v3501
        %v3504 = vlaneseq
        %v3505 = vshrl.u32 %v3504, 7
        %v3506 = vsub.s32 0, %v3505
        %v3507 = vrot.slane %v3487, %v3506
        %v3509 = vmul.f32 %v3502, %v3507
        %v3511 = vlaneseq
        %v3512 = vshrl.u32 %v3511, 7
        %v3513 = vsub.s32 0, %v3512
        %v3514 = vrot.slane %v3489, %v3513
        %v3516 = vadd.f32 %v3509, %v3514
        %v3517 = vpack.c.bf16 %v3516, %v3516
        %s3518 = scalar_lea.vmem %s10, 16
        %v3519 = vld [vmem:[%s3518] sm:$0xf]
        %v3520 = vld [vmem:[%s3518 + $0x4] sm:$0xf]
        %v3521 = vld [vmem:[%s3518 + $0x8] sm:$0xf]
        %v3522 = vld [vmem:[%s3518 + $0xc] sm:$0xf]
        %s3523 = scalar_lea.vmem %s11, 1
        %v3524 = vld [vmem:[%s3523] sm:$0x1]
        %v3526 = vlaneseq
        %v3527 = vshrl.u32 %v3526, 7
        %v3528 = vsub.s32 0, %v3527
        %v3529 = vrot.slane %v3524, %v3528
        %v3535 = vunpack.c.l.b16 %v3519
        %v3536 = vunpack.c.l.b16 %v3520
        %v3537 = vunpack.c.l.b16 %v3521
        %v3538 = vunpack.c.l.b16 %v3522
        %v3539 = vpack.c.b16 %v3536, %v3535
        %v3540 = vpack.c.b16 %v3538, %v3537
        %v3544 = vsel %vm587, %v3517, 0
        %3546 = vmatprep.subr.bf16.mxu0 0
        %3547 = vmatpush1.bf16.msra.mxu0 %v3539
        %3548 = vmatprep.subr.bf16.mxu0 0
        %3549 = vmatpush1.bf16.msra.mxu0 %v3540
        %3550 = vmatprep.subr.bf16.mxu0 0
        %3551 = vmatpush1.bf16.msra.mxu0 0
        %3552 = vmatprep.subr.bf16.mxu0 0
        %3553 = vmatpush1.bf16.msra.mxu0 0
        %3554 = vmatprep.subr.bf16.mxu0 0
        %3555 = vmatpush1.bf16.msra.mxu0 0
        %3556 = vmatprep.subr.bf16.mxu0 0
        %3557 = vmatpush1.bf16.msra.mxu0 0
        %3558 = vmatprep.subr.bf16.mxu0 0
        %3559 = vmatpush1.bf16.msra.mxu0 0
        %3560 = vmatprep.subr.bf16.mxu0 0
        %3561 = vmatpush1.bf16.msra.mxu0 0
        %3562 = vmatprep.subr.bf16.mxu0 0
        %3563 = vmatpush1.bf16.msra.mxu0 0
        %3564 = vmatprep.subr.bf16.mxu0 0
        %3565 = vmatpush1.bf16.msra.mxu0 0
        %3566 = vmatprep.subr.bf16.mxu0 0
        %3567 = vmatpush1.bf16.msra.mxu0 0
        %3568 = vmatprep.subr.bf16.mxu0 0
        %3569 = vmatpush1.bf16.msra.mxu0 0
        %3570 = vmatprep.subr.bf16.mxu0 0
        %3571 = vmatpush1.bf16.msra.mxu0 0
        %3572 = vmatprep.subr.bf16.mxu0 0
        %3573 = vmatpush1.bf16.msra.mxu0 0
        %3574 = vmatprep.subr.bf16.mxu0 0
        %3575 = vmatpush1.bf16.msra.mxu0 0
        %3576 = vmatprep.subr.bf16.mxu0 0
        %3577 = vmatpush1.bf16.msra.mxu0 0
        %3578 = vmatprep.mubr.bf16.mxu0 0
        %3579 = vmatmul.mubr.bf16.gmra.mrb[0].mxu0 %v3544
        %v3580 = vpop.f32.mrb[0].mxu0
        %v3581 = vadd.f32 %v3529, %v3580
        %v3582 = vpop.f32.mrb[0].mxu0
        %v3583 = vpop.f32.mrb[0].mxu0
        %v3584 = vpop.f32.mrb[0].mxu0
        %3585 = vdwg.mxu0
        %v3586 = vmax.f32 %v3581, 0.0
        %v3587 = vpack.c.bf16 %v3586, %v3586
        %s3588 = scalar_lea.vmem %s12, 64
        %v3589 = vld [vmem:[%s3588] sm:$0xf]
        %v3590 = vld [vmem:[%s3588 + $0x4] sm:$0xf]
        %v3591 = vld [vmem:[%s3588 + $0x8] sm:$0xf]
        %v3592 = vld [vmem:[%s3588 + $0xc] sm:$0xf]
        %v3593 = vld [vmem:[%s3588 + $0x10] sm:$0xf]
        %v3594 = vld [vmem:[%s3588 + $0x14] sm:$0xf]
        %v3595 = vld [vmem:[%s3588 + $0x18] sm:$0xf]
        %v3596 = vld [vmem:[%s3588 + $0x1c] sm:$0xf]
        %v3597 = vld [vmem:[%s3588 + $0x20] sm:$0xf]
        %v3598 = vld [vmem:[%s3588 + $0x24] sm:$0xf]
        %v3599 = vld [vmem:[%s3588 + $0x28] sm:$0xf]
        %v3600 = vld [vmem:[%s3588 + $0x2c] sm:$0xf]
        %v3601 = vld [vmem:[%s3588 + $0x30] sm:$0xf]
        %v3602 = vld [vmem:[%s3588 + $0x34] sm:$0xf]
        %v3603 = vld [vmem:[%s3588 + $0x38] sm:$0xf]
        %v3604 = vld [vmem:[%s3588 + $0x3c] sm:$0xf]
        %s3605 = scalar_lea.vmem %s13, 1
        %v3606 = vld [vmem:[%s3605] sm:$0x1]
        %v3608 = vlaneseq
        %v3609 = vshrl.u32 %v3608, 7
        %v3610 = vsub.s32 0, %v3609
        %v3611 = vrot.slane %v3606, %v3610
        %v3629 = vunpack.c.l.b16 %v3589
        %v3630 = vunpack.c.l.b16 %v3590
        %v3631 = vunpack.c.l.b16 %v3591
        %v3632 = vunpack.c.l.b16 %v3592
        %v3633 = vunpack.c.l.b16 %v3593
        %v3634 = vunpack.c.l.b16 %v3594
        %v3635 = vunpack.c.l.b16 %v3595
        %v3636 = vunpack.c.l.b16 %v3596
        %v3637 = vunpack.c.l.b16 %v3597
        %v3638 = vunpack.c.l.b16 %v3598
        %v3639 = vunpack.c.l.b16 %v3599
        %v3640 = vunpack.c.l.b16 %v3600
        %v3641 = vunpack.c.l.b16 %v3601
        %v3642 = vunpack.c.l.b16 %v3602
        %v3643 = vunpack.c.l.b16 %v3603
        %v3644 = vunpack.c.l.b16 %v3604
        %v3645 = vpack.c.b16 %v3630, %v3629
        %v3646 = vpack.c.b16 %v3632, %v3631
        %v3647 = vpack.c.b16 %v3634, %v3633
        %v3648 = vpack.c.b16 %v3636, %v3635
        %v3649 = vpack.c.b16 %v3638, %v3637
        %v3650 = vpack.c.b16 %v3640, %v3639
        %v3651 = vpack.c.b16 %v3642, %v3641
        %v3652 = vpack.c.b16 %v3644, %v3643
        %3661 = vmatprep.subr.bf16.mxu0 0
        %3662 = vmatpush1.bf16.msra.mxu0 %v3645
        %3663 = vmatprep.subr.bf16.mxu0 0
        %3664 = vmatpush1.bf16.msra.mxu0 %v3646
        %3665 = vmatprep.subr.bf16.mxu0 0
        %3666 = vmatpush1.bf16.msra.mxu0 %v3647
        %3667 = vmatprep.subr.bf16.mxu0 0
        %3668 = vmatpush1.bf16.msra.mxu0 %v3648
        %3669 = vmatprep.subr.bf16.mxu0 0
        %3670 = vmatpush1.bf16.msra.mxu0 %v3649
        %3671 = vmatprep.subr.bf16.mxu0 0
        %3672 = vmatpush1.bf16.msra.mxu0 %v3650
        %3673 = vmatprep.subr.bf16.mxu0 0
        %3674 = vmatpush1.bf16.msra.mxu0 %v3651
        %3675 = vmatprep.subr.bf16.mxu0 0
        %3676 = vmatpush1.bf16.msra.mxu0 %v3652
        %3677 = vmatprep.subr.bf16.mxu0 0
        %3678 = vmatpush1.bf16.msra.mxu0 0
        %3679 = vmatprep.subr.bf16.mxu0 0
        %3680 = vmatpush1.bf16.msra.mxu0 0
        %3681 = vmatprep.subr.bf16.mxu0 0
        %3682 = vmatpush1.bf16.msra.mxu0 0
        %3683 = vmatprep.subr.bf16.mxu0 0
        %3684 = vmatpush1.bf16.msra.mxu0 0
        %3685 = vmatprep.subr.bf16.mxu0 0
        %3686 = vmatpush1.bf16.msra.mxu0 0
        %3687 = vmatprep.subr.bf16.mxu0 0
        %3688 = vmatpush1.bf16.msra.mxu0 0
        %3689 = vmatprep.subr.bf16.mxu0 0
        %3690 = vmatpush1.bf16.msra.mxu0 0
        %3691 = vmatprep.subr.bf16.mxu0 0
        %3692 = vmatpush1.bf16.msra.mxu0 0
        %3693 = vmatprep.mubr.bf16.mxu0 0
        %3694 = vmatmul.mubr.bf16.gmra.mrb[0].mxu0 %v3587
        %v3695 = vpop.f32.mrb[0].mxu0
        %v3696 = vadd.f32 %v3611, %v3695
        %v3697 = vpop.f32.mrb[0].mxu0
        %v3698 = vpop.f32.mrb[0].mxu0
        %v3699 = vpop.f32.mrb[0].mxu0
        %3700 = vdwg.mxu0
        %v3701 = vadd.f32 %v3485, %v3696
        %v3702 = vld [vmem:[%s14] sm:$0x1]
        %v3703 = vld [vmem:[%s15] sm:$0x1]
        %v3704 = vsel %vm587, %v3701, 0.0
        %3705 = vadd.xlane.f32.xlu0 %v3704
        %v3706 = vpop.xlane.xlu0 %3705
        %v3707 = vmul.f32 %v3706, %v591
        %v3708 = vsub.f32 %v3701, %v3707
        %v3709 = vmul.f32 %v3708, %v3708
        %v3710 = vsel %vm587, %v3709, 0.0
        %3711 = vadd.xlane.f32.xlu0 %v3710
        %v3712 = vpop.xlane.xlu0 %3711
        %v3713 = vmul.f32 %v3712, %v591
        %v3714 = vadd.f32 %v3713, 1e-05
        %v3715 = vrsqrt.pop %v3714
        %v3716 = vmul.f32 %v3708, %v3715
        %v3718 = vlaneseq
        %v3719 = vshrl.u32 %v3718, 7
        %v3720 = vsub.s32 0, %v3719
        %v3721 = vrot.slane %v3702, %v3720
        %v3723 = vmul.f32 %v3716, %v3721
        %v3725 = vlaneseq
        %v3726 = vshrl.u32 %v3725, 7
        %v3727 = vsub.s32 0, %v3726
        %v3728 = vrot.slane %v3703, %v3727
        %v3730 = vadd.f32 %v3723, %v3728
        %v3731 = vpack.c.bf16 %v3730, %v3730
        %v3732 = vld [vmem:[%s16] sm:$0xf]
        %v3733 = vld [vmem:[%s16 + $0x4] sm:$0xf]
        %v3734 = vld [vmem:[%s16 + $0x8] sm:$0xf]
        %v3735 = vld [vmem:[%s16 + $0xc] sm:$0xf]
        %v3736 = vld [vmem:[%s17] sm:$0x1]
        %v3738 = vlaneseq
        %v3739 = vshrl.u32 %v3738, 7
        %v3740 = vsub.s32 0, %v3739
        %v3741 = vrot.slane %v3736, %v3740
        %v3747 = vunpack.c.l.b16 %v3732
        %v3748 = vunpack.c.l.b16 %v3733
        %v3749 = vunpack.c.l.b16 %v3734
        %v3750 = vunpack.c.l.b16 %v3735
        %v3751 = vpack.c.b16 %v3748, %v3747
        %v3752 = vpack.c.b16 %v3750, %v3749
        %v3756 = vsel %vm587, %v3731, 0
        %3758 = vmatprep.subr.bf16.mxu0 0
        %3759 = vmatpush1.bf16.msra.mxu0 %v3751
        %3760 = vmatprep.subr.bf16.mxu0 0
        %3761 = vmatpush1.bf16.msra.mxu0 %v3752
        %3762 = vmatprep.subr.bf16.mxu0 0
        %3763 = vmatpush1.bf16.msra.mxu0 0
        %3764 = vmatprep.subr.bf16.mxu0 0
        %3765 = vmatpush1.bf16.msra.mxu0 0
        %3766 = vmatprep.subr.bf16.mxu0 0
        %3767 = vmatpush1.bf16.msra.mxu0 0
        %3768 = vmatprep.subr.bf16.mxu0 0
        %3769 = vmatpush1.bf16.msra.mxu0 0
        %3770 = vmatprep.subr.bf16.mxu0 0
        %3771 = vmatpush1.bf16.msra.mxu0 0
        %3772 = vmatprep.subr.bf16.mxu0 0
        %3773 = vmatpush1.bf16.msra.mxu0 0
        %3774 = vmatprep.subr.bf16.mxu0 0
        %3775 = vmatpush1.bf16.msra.mxu0 0
        %3776 = vmatprep.subr.bf16.mxu0 0
        %3777 = vmatpush1.bf16.msra.mxu0 0
        %3778 = vmatprep.subr.bf16.mxu0 0
        %3779 = vmatpush1.bf16.msra.mxu0 0
        %3780 = vmatprep.subr.bf16.mxu0 0
        %3781 = vmatpush1.bf16.msra.mxu0 0
        %3782 = vmatprep.subr.bf16.mxu0 0
        %3783 = vmatpush1.bf16.msra.mxu0 0
        %3784 = vmatprep.subr.bf16.mxu0 0
        %3785 = vmatpush1.bf16.msra.mxu0 0
        %3786 = vmatprep.subr.bf16.mxu0 0
        %3787 = vmatpush1.bf16.msra.mxu0 0
        %3788 = vmatprep.subr.bf16.mxu0 0
        %3789 = vmatpush1.bf16.msra.mxu0 0
        %3790 = vmatprep.mubr.bf16.mxu0 0
        %3791 = vmatmul.mubr.bf16.gmra.mrb[0].mxu0 %v3756
        %v3792 = vpop.f32.mrb[0].mxu0
        %v3793 = vadd.f32 %v3741, %v3792
        %v3794 = vpop.f32.mrb[0].mxu0
        %v3795 = vpop.f32.mrb[0].mxu0
        %v3796 = vpop.f32.mrb[0].mxu0
        %3797 = vdwg.mxu0
        %3798 = vst [vmem:[%s533] sm:$0xff] %v3793
        %s3799 = sand.u32 %s403, 1
        %s3800 = scalar_lea.sflag [#allocation6], %s3799
        %s3801 = sand.u32 %s403, 1
        %s3802 = smul.addr %s3801, 8
        %s3803 = scalar_lea.vmem [#allocation5], %s3802
        // Predicated region
        $region89: #{gpt_forward.1} parent=87 // pred_check
          %p3804 = pneg %p413
        $region90: #{gpt_forward.1} parent=87 // pred_check_branch
          %3806 = sbr.rel (%p3804) target = $region92
        $region91: #{gpt_forward.1} parent=87 // pred_region
          %s3808 = ssub.s32 128, 128
          %3809 = vsyncadd %s3800, %s3808
          %s3810 = smul.addr %s38, 128
          %s3811 = scalar_lea.hbm %s18, %s3810
          %s3813 = sshll.u32 %s3803, 4
          %s3814 = int_to_ptr.vmem [resolvable:$true] %s3813
          %3816 = dma.vmem_to_hbm [thread:$0]  %s3814, 128, %s3811, %s3800
        $region92: #{gpt_forward.1} parent=87 // pred_fallthru
          _
      $region88: #{gpt_forward.1} parent=5 // pred_fallthru
        _
      %p3817 = scmp.le.s32.totalorder 2, %s33
      // Predicated region
      $region93: #{gpt_forward.1} parent=5 // pred_check
        %p3818 = pneg %p3817
      $region94: #{gpt_forward.1} parent=5 // pred_check_branch
        %3820 = sbr.rel (%p3818) target = $region96
      $region95: #{gpt_forward.1} parent=5 // pred_region
        %s3821 = ssub.s32 %s33, 2
        // Predicated region
        $region97: #{gpt_forward.1} parent=95 // pred_check
          %p3822 = pneg %p419
        $region98: #{gpt_forward.1} parent=95 // pred_check_branch
          %3824 = sbr.rel (%p3822) target = $region100
        $region99: #{gpt_forward.1} parent=95 // pred_region
          %s3825 = sand.u32 %s404, 1
          %s3826 = scalar_lea.sflag [#allocation6], %s3825
          %s3827 = sand.u32 %s404, 1
          %s3828 = smul.addr %s3827, 8
          %s3829 = scalar_lea.vmem [#allocation5], %s3828
          %3830 = dma.done %s3826, 128
        $region100: #{gpt_forward.1} parent=95 // pred_fallthru
          _
      $region96: #{gpt_forward.1} parent=5 // pred_fallthru
        _
    $region6: #{gpt_forward.1} parent=1 // loop_footer
      %s37 = sadd.s32 1, %s33
    $region7: #{gpt_forward.1} parent=1 // loop_footer_branch
      %32 = sbr.rel target = $region3
    $region8: #{gpt_forward.1} parent=1 // loop_exit
      _
    %3831 = vsyncpa [#allocation6], 1
    %s3832 = scalar_lea.sflag [#allocation6], 1
    %3833 = vsyncpa %s3832, 1

</llo_original>
